<compile_context>
chip_gen: v7x
topology: tpu7x:2x2x1
jax: 0.10.0
libtpu: 0.0.40
codegen_flags: <defaults>
</compile_context>

<pallas_src>
import functools
import math

import jax
import jax.numpy as jnp
from jax.experimental import pallas as pl
from jax.experimental.pallas import tpu as pltpu

LN_EPS = 1e-5  # PyTorch nn.LayerNorm default


# ----------------------------- small helpers -----------------------------

def _round_up(v, m):
    return (v + m - 1) // m * m


@functools.lru_cache(maxsize=None)
def _vmem_limit_bytes():
    """Generation-aware scoped-VMEM limit (v5e/v6e: 128 MiB phys; v7x: 64 MiB phys)."""
    cap = 64 << 20
    try:
        cap = int(pltpu.get_tpu_info().vmem_capacity_bytes)
    except Exception:
        pass
    if cap >= (100 << 20):
        return 96 << 20                       # v5e / v6e
    return max(32 << 20, min(cap - (16 << 20), 48 << 20))   # v7x: leave headroom


def _pick_tile(total, cap, align):
    """Largest tile <= cap that is a multiple of `align` and divides `total`
    (falls back to `cap` with a partial edge tile if no decent divisor exists)."""
    if total <= cap:
        return total
    t = (cap // align) * align
    while t >= align:
        if total % t == 0:
            break
        t -= align
    if t < align or t < cap // 4:
        return cap
    return t


def _largest_divisor(total, cap, align):
    t = (min(cap, total) // align) * align
    while t >= align:
        if total % t == 0:
            return t
        t -= align
    return align


def _token_padding_and_tile(n_tokens, cap=512):
    """Pad the token count to a sublane-friendly length and pick the attention q-tile."""
    n_pad = _round_up(n_tokens, 16)
    if n_pad <= cap:
        return n_pad, n_pad
    tq = _largest_divisor(n_pad, cap, 8)
    if tq < 128:                               # ragged length: pad further for clean q tiles
        n_pad = _round_up(n_tokens, 128)
        tq = _largest_divisor(n_pad, cap, 128)
    return n_pad, tq


# ----------------------------- in-kernel math -----------------------------

def _erf_approx(x):
    # Abramowitz & Stegun 7.1.26 rational approximation, |err| < 1.5e-7.
    p = 0.3275911
    a1, a2, a3, a4, a5 = 0.254829592, -0.284496736, 1.421413741, -1.453152027, 1.061405429
    z = jnp.abs(x)
    t = 1.0 / (1.0 + p * z)
    poly = ((((a5 * t + a4) * t + a3) * t + a2) * t + a1) * t
    y = 1.0 - poly * jnp.exp(-z * z)
    return jnp.where(x >= 0, y, -y)


def _gelu_exact(x):
    # nn.GELU() default (erf-based), to ~1e-7 absolute.
    return 0.5 * x * (1.0 + _erf_approx(x * 0.7071067811865476))


def _layernorm_f32(x, g, b):
    mu = jnp.mean(x, axis=-1, keepdims=True)
    var = jnp.mean(jnp.square(x - mu), axis=-1, keepdims=True)
    return (x - mu) * jax.lax.rsqrt(var + LN_EPS) * g + b


# ----------------------------- fused tiled linear -----------------------------

def _fused_linear_kernel(*refs, has_ln_in, cache_ln, has_bias, has_ln_out,
                         has_residual, act):
    refs = list(refs)
    x_ref = refs.pop(0)
    w_ref = refs.pop(0)
    g_in = refs.pop(0) if has_ln_in else None
    b_in = refs.pop(0) if has_ln_in else None
    bias = refs.pop(0) if has_bias else None
    g_out = refs.pop(0) if has_ln_out else None
    b_out = refs.pop(0) if has_ln_out else None
    res = refs.pop(0) if has_residual else None
    o_ref = refs.pop(0)
    xn_scratch = refs.pop(0) if cache_ln else None

    if has_ln_in:
        if cache_ln:
            # Normalize the resident x tile once (j == 0) and reuse it for every N-tile.
            @pl.when(pl.program_id(1) == 0)
            def _():
                xn = _layernorm_f32(x_ref[...].astype(jnp.float32), g_in[...], b_in[...])
                xn_scratch[...] = xn.astype(jnp.bfloat16)
            xin = xn_scratch[...]
        else:
            xin = _layernorm_f32(x_ref[...].astype(jnp.float32), g_in[...], b_in[...]
                                 ).astype(w_ref.dtype)
    else:
        xin = x_ref[...]                       # bf16 straight to the MXU (no f32 round trip)

    acc = jnp.dot(xin, w_ref[...], preferred_element_type=jnp.float32)

    if has_bias:
        acc = acc + bias[...]
    if act == "gelu":
        acc = _gelu_exact(acc)
    if has_ln_out:
        acc = _layernorm_f32(acc, g_out[...], b_out[...])
    if has_residual:
        acc = acc + res[...].astype(jnp.float32)

    o_ref[...] = acc.astype(o_ref.dtype)


def fused_linear(x, w, b=None, *, ln_in=None, ln_out=None, act=None, residual=None,
                 out_dtype=jnp.bfloat16, tm_cap=1024, tn_cap=768):
    """y = [post-LN]([GELU]( [pre-LN](x) @ w + b )) + residual, tiled over (M, N), full K."""
    M, K = x.shape
    Kw, N = w.shape
    assert K == Kw

    tn = N if ln_out is not None else _pick_tile(N, tn_cap, 128)  # post-LN needs the whole row
    tm = _pick_tile(M, tm_cap, 8)
    ni, nj = pl.cdiv(M, tm), pl.cdiv(N, tn)
    cache_ln = (ln_in is not None) and (nj > 1)

    args = [x, w]
    in_specs = [
        pl.BlockSpec((tm, K), lambda i, j: (i, 0)),   # x tile stays resident across j
        pl.BlockSpec((K, tn), lambda i, j: (0, j)),
    ]
    if ln_in is not None:
        g, be = ln_in
        args += [g.reshape(1, K).astype(jnp.float32), be.reshape(1, K).astype(jnp.float32)]
        in_specs += [pl.BlockSpec((1, K), lambda i, j: (0, 0))] * 2
    if b is not None:
        args.append(b.reshape(1, N).astype(jnp.float32))
        in_specs.append(pl.BlockSpec((1, tn), lambda i, j: (0, j)))
    if ln_out is not None:
        g, be = ln_out
        args += [g.reshape(1, N).astype(jnp.float32), be.reshape(1, N).astype(jnp.float32)]
        in_specs += [pl.BlockSpec((1, tn), lambda i, j: (0, j))] * 2

    io_aliases = {}
    if residual is not None:
        res_idx = len(args)
        args.append(residual)
        in_specs.append(pl.BlockSpec((tm, tn), lambda i, j: (i, j)))
        if residual.shape == (M, N) and residual.dtype == jnp.dtype(out_dtype):
            io_aliases = {res_idx: 0}          # reuse residual buffer as the output

    scratch_shapes = [pltpu.VMEM((tm, K), jnp.bfloat16)] if cache_ln else []

    kernel = functools.partial(
        _fused_linear_kernel,
        has_ln_in=ln_in is not None, cache_ln=cache_ln, has_bias=b is not None,
        has_ln_out=ln_out is not None, has_residual=residual is not None, act=act)

    dims = ("parallel", "arbitrary") if cache_ln else ("parallel", "parallel")
    return pl.pallas_call(
        kernel,
        out_shape=jax.ShapeDtypeStruct((M, N), out_dtype),
        grid=(ni, nj),
        in_specs=in_specs,
        out_specs=pl.BlockSpec((tm, tn), lambda i, j: (i, j)),
        scratch_shapes=scratch_shapes,
        input_output_aliases=io_aliases,
        compiler_params=pltpu.CompilerParams(
            dimension_semantics=dims,
            vmem_limit_bytes=_vmem_limit_bytes(),
        ),
    )(*args)


# ----------------------------- attention -----------------------------

def _attention_kernel(q_ref, k_ref, v_ref, o_ref, *, heads, dh, scale, n_real):
    # q_ref: (1, tq, heads*dh) query rows; k_ref / v_ref: (1, N_pad, heads*dh) full keys/values.
    n_pad = k_ref.shape[1]

    key_bias = None
    if n_real < n_pad:  # mask padded keys (static at trace time)
        ids = jax.lax.broadcasted_iota(jnp.int32, (1, n_pad), 1)
        key_bias = jnp.where(ids < n_real, 0.0, -1e30).astype(jnp.float32)

    outs = []
    for h in range(heads):
        sl = slice(h * dh, (h + 1) * dh)
        q = q_ref[0, :, sl] * scale            # fold softmax scale into q (tq*dh muls, not tq*N)
        k = k_ref[0, :, sl]
        v = v_ref[0, :, sl]

        s = jax.lax.dot_general(q, k, (((1,), (1,)), ((), ())),
                                preferred_element_type=jnp.float32)
        if key_bias is not None:
            s = s + key_bias
        s = s - jnp.max(s, axis=-1, keepdims=True)
        p = jnp.exp(s)
        p = p / jnp.sum(p, axis=-1, keepdims=True)
        outs.append(jnp.dot(p.astype(v.dtype), v,
                            preferred_element_type=jnp.float32).astype(o_ref.dtype))

    # Single lane-dense store of all heads (instead of per-head masked partial stores).
    o_ref[0] = jnp.concatenate(outs, axis=-1)


def attention(qkv, *, heads, dh, scale, n_real, tq):
    """qkv: (B, N_pad, 3*heads*dh) -> (B, N_pad, heads*dh); padded keys are masked."""
    B, N_pad, three_inner = qkv.shape
    inner = heads * dh
    assert three_inner == 3 * inner
    assert N_pad % tq == 0
    # TODO(synk): support inner % 128 != 0 via full-width (3*inner) qkv blocks.
    assert inner % 128 == 0, "heads*dim_head must be a multiple of 128 for lane-aligned blocks"

    kernel = functools.partial(_attention_kernel, heads=heads, dh=dh, scale=scale,
                               n_real=n_real)
    return pl.pallas_call(
        kernel,
        out_shape=jax.ShapeDtypeStruct((B, N_pad, inner), qkv.dtype),
        grid=(B, N_pad // tq),
        in_specs=[
            pl.BlockSpec((1, tq, inner), lambda b, qi: (b, qi, 0)),     # q rows (tiled)
            pl.BlockSpec((1, N_pad, inner), lambda b, qi: (b, 0, 1)),   # k (all rows)
            pl.BlockSpec((1, N_pad, inner), lambda b, qi: (b, 0, 2)),   # v (all rows)
        ],
        out_specs=pl.BlockSpec((1, tq, inner), lambda b, qi: (b, qi, 0)),
        compiler_params=pltpu.CompilerParams(
            dimension_semantics=("parallel", "parallel"),
            vmem_limit_bytes=_vmem_limit_bytes(),
        ),
    )(qkv, qkv, qkv)


# ----------------------------- cls + pos-embedding assembly -----------------------------

def _assemble_kernel(xpe_ref, cls_ref, pos_ref, o_ref, *, n):
    # xpe_ref: (1, n, D) patch embeddings; cls_ref: (1, 1, D); pos_ref: (1, n_pos, D) f32.
    n_pad = o_ref.shape[1]
    d = o_ref.shape[2]
    o_ref[0, 0:1, :] = (cls_ref[0].astype(jnp.float32)
                        + pos_ref[0, 0:1, :]).astype(o_ref.dtype)
    o_ref[0, 1:n + 1, :] = (xpe_ref[0].astype(jnp.float32)
                            + pos_ref[0, 1:n + 1, :]).astype(o_ref.dtype)
    if n_pad > n + 1:
        o_ref[0, n + 1:n_pad, :] = jnp.zeros((n_pad - (n + 1), d), o_ref.dtype)


def assemble_tokens(xpe, cls_token, pos_embedding, n_pad):
    """Prepend cls token, add positional embedding, zero-pad tokens -> (B, n_pad, D)."""
    B, n, D = xpe.shape
    n_pos = pos_embedding.shape[1]
    kernel = functools.partial(_assemble_kernel, n=n)
    return pl.pallas_call(
        kernel,
        out_shape=jax.ShapeDtypeStruct((B, n_pad, D), xpe.dtype),
        grid=(B,),
        in_specs=[
            pl.BlockSpec((1, n, D), lambda b: (b, 0, 0)),
            pl.BlockSpec((1, 1, D), lambda b: (0, 0, 0)),
            pl.BlockSpec((1, n_pos, D), lambda b: (0, 0, 0)),
        ],
        out_specs=pl.BlockSpec((1, n_pad, D), lambda b: (b, 0, 0)),
        compiler_params=pltpu.CompilerParams(
            dimension_semantics=("parallel",),
            vmem_limit_bytes=_vmem_limit_bytes(),
        ),
    )(xpe, cls_token.astype(jnp.float32), pos_embedding.astype(jnp.float32))


# ----------------------------- model forward -----------------------------

def vit_custom_forward(img, params, cfg):
    p1, p2 = cfg["patch_size"]
    D = cfg["dim"]
    heads = cfg["heads"]
    dh = cfg["dim_head"]
    inner = heads * dh
    B, C, H, W = img.shape
    h, w = H // p1, W // p2
    n = h * w * C

    # Rearrange 'b c (h p1) (w p2) -> b (h w c) (p1 p2)'  (one-time layout glue in plain JAX).
    x = img.reshape(B, C, h, p1, w, p2)
    x = jnp.transpose(x, (0, 2, 4, 1, 3, 5)).reshape(B * n, p1 * p2)
    x = x.astype(jnp.bfloat16)

    # to_patch_embedding: LayerNorm(p1*p2) -> Linear(p1*p2, D) -> LayerNorm(D), fully fused.
    x = fused_linear(
        x, params["pe_w"], params["pe_b"],
        ln_in=(params["pe_ln1_g"], params["pe_ln1_b"]),
        ln_out=(params["pe_ln2_g"], params["pe_ln2_b"]),
    )

    # cls concat + positional embedding + token padding, fused in one Pallas pass.
    N = n + 1
    N_pad, tq = _token_padding_and_tile(N)
    x = assemble_tokens(x.reshape(B, n, D), params["cls_token"], params["pos_embedding"], N_pad)

    scale = dh ** -0.5
    for layer in params["layers"]:
        xf = x.reshape(B * N_pad, D)

        # ---- Attention block: x = attn(x) + x (pre-norm fused into the qkv projection)
        qkv = fused_linear(xf, layer["w_qkv"],
                           ln_in=(layer["attn_ln_g"], layer["attn_ln_b"]))   # to_qkv has no bias
        o = attention(qkv.reshape(B, N_pad, 3 * inner),
                      heads=heads, dh=dh, scale=scale, n_real=N, tq=tq)
        xf = fused_linear(o.reshape(B * N_pad, inner), layer["w_out"], layer["b_out"],
                          residual=xf)

        # ---- FeedForward block: pre-norm + GELU fused into w1, residual fused into w2
        f = fused_linear(xf, layer["ff_w1"], layer["ff_b1"],
                         ln_in=(layer["ff_ln_g"], layer["ff_ln_b"]), act="gelu")
        xf = fused_linear(f, layer["ff_w2"], layer["ff_b2"], residual=xf)
        x = xf.reshape(B, N_pad, D)

    # CLS pooling first, then fused final LayerNorm + classification head (B rows only).
    cls_tok = x[:, 0]
    logits = fused_linear(cls_tok, params["head_w"], params["head_b"],
                          ln_in=(params["final_ln_g"], params["final_ln_b"]),
                          out_dtype=jnp.float32)
    return logits


# ----------------------------- parameter init -----------------------------

def init_params(key, cfg):
    D = cfg["dim"]
    heads = cfg["heads"]
    dh = cfg["dim_head"]
    inner = heads * dh
    mlp = cfg["mlp_dim"]
    depth = cfg["depth"]
    p1, p2 = cfg["patch_size"]
    pd = p1 * p2
    H, W = cfg["image_size"]
    n_pos = int(math.prod((H, W)) / math.prod((p1, p2)) * 3) + 1

    keys = iter(jax.random.split(key, 8 + 4 * depth))

    def nrm(shape, scl=0.02, dtype=jnp.bfloat16):
        # Matmul weights are stored in bf16 once at init (MXU-native); accumulation is f32.
        return (scl * jax.random.normal(next(keys), shape, dtype=jnp.float32)).astype(dtype)

    ones = lambda s: jnp.ones(s, jnp.float32)
    zeros = lambda s: jnp.zeros(s, jnp.float32)

    params = {
        "pe_ln1_g": ones((pd,)), "pe_ln1_b": zeros((pd,)),
        "pe_w": nrm((pd, D)), "pe_b": zeros((D,)),
        "pe_ln2_g": ones((D,)), "pe_ln2_b": zeros((D,)),
        "cls_token": nrm((1, 1, D), 1.0, jnp.float32),
        "pos_embedding": nrm((1, n_pos, D), 1.0, jnp.float32),
        "final_ln_g": ones((D,)), "final_ln_b": zeros((D,)),
        "head_w": nrm((D, cfg["num_classes"])), "head_b": zeros((cfg["num_classes"],)),
        "layers": [],
    }
    for _ in range(depth):
        params["layers"].append({
            "attn_ln_g": ones((D,)), "attn_ln_b": zeros((D,)),
            "w_qkv": nrm((D, 3 * inner)),                 # to_qkv has no bias
            "w_out": nrm((inner, D)), "b_out": zeros((D,)),
            "ff_ln_g": ones((D,)), "ff_ln_b": zeros((D,)),
            "ff_w1": nrm((D, mlp)), "ff_b1": zeros((mlp,)),
            "ff_w2": nrm((mlp, D)), "ff_b2": zeros((D,)),
        })
    return params


# ----------------------------- demo -----------------------------

if __name__ == "__main__":
    # Small smoke-test config.  The real ViTCustom fixes dim=768, depth=12, heads=12,
    # dim_head=64, mlp_dim=3072 (heads*dim_head = 768, a multiple of 128, as required here);
    # the structure is identical, just scaled down.  C must be 3: the module sizes
    # pos_embedding as prod(image)/prod(patch)*3 + 1.
    cfg = dict(
        image_size=(16, 16),
        patch_size=(8, 8),
        num_classes=10,
        dim=128,
        depth=2,
        heads=4,
        dim_head=32,   # heads*dim_head = 128 (lane-aligned per-head blocks)
        mlp_dim=256,
    )
    key = jax.random.PRNGKey(0)
    pkey, xkey = jax.random.split(key)
    params = init_params(pkey, cfg)
    img = jax.random.normal(xkey, (2, 3, 16, 16), dtype=jnp.float32)  # NCHW

    fwd = jax.jit(functools.partial(vit_custom_forward, cfg=cfg))
    out = fwd(img, params)
    jax.block_until_ready(out)
    assert out.shape == (2, cfg["num_classes"]), out.shape
    print("KERNEL_OK")
</pallas_src>

<mosaic_0001>
module attributes {stable_mosaic.version = 11 : i64} {
  func.func @_assemble_kernel(%arg0: i32, %arg1: memref<1x12x128xbf16, #tpu.memory_space<vmem>>, %arg2: memref<1x1x128xf32, #tpu.memory_space<vmem>>, %arg3: memref<1x13x128xf32, #tpu.memory_space<vmem>>, %arg4: memref<1x16x128xbf16, #tpu.memory_space<vmem>>) attributes {dimension_semantics = [#tpu.dimension_semantics<parallel>], iteration_bounds = array<i64: 2>, scalar_prefetch = 0 : i64, scratch_operands = 0 : i64, tpu.core_type = #tpu.core_type<tc>, window_params = [{transform_indices = @transform_0, window_bounds = array<i64: 1, 12, 128>}, {pipeline_mode = #tpu.pipeline_mode<synchronous>, transform_indices = @transform_1, window_bounds = array<i64: 1, 1, 128>}, {pipeline_mode = #tpu.pipeline_mode<synchronous>, transform_indices = @transform_2, window_bounds = array<i64: 1, 13, 128>}, {transform_indices = @transform_3, window_bounds = array<i64: 1, 16, 128>}]} {
    %c0 = arith.constant 0 : index
    %c0_0 = arith.constant 0 : index
    %c0_1 = arith.constant 0 : index
    %0 = vector.load %arg2[%c0, %c0_0, %c0_1] : memref<1x1x128xf32, #tpu.memory_space<vmem>>, vector<1x1x128xf32>
    %1 = vector.shape_cast %0 : vector<1x1x128xf32> to vector<1x128xf32>
    %c0_2 = arith.constant 0 : index
    %c0_3 = arith.constant 0 : index
    %c0_4 = arith.constant 0 : index
    %2 = vector.load %arg3[%c0_2, %c0_3, %c0_4] : memref<1x13x128xf32, #tpu.memory_space<vmem>>, vector<1x1x128xf32>
    %3 = vector.shape_cast %2 : vector<1x1x128xf32> to vector<1x128xf32>
    %4 = arith.addf %1, %3 : vector<1x128xf32>
    %5 = arith.truncf %4 : vector<1x128xf32> to vector<1x128xbf16>
    %c0_5 = arith.constant 0 : index
    %c0_6 = arith.constant 0 : index
    %c0_7 = arith.constant 0 : index
    %6 = vector.load %arg4[%c0_5, %c0_6, %c0_7] : memref<1x16x128xbf16, #tpu.memory_space<vmem>>, vector<1x1x128xbf16>
    %7 = vector.shape_cast %6 : vector<1x1x128xbf16> to vector<1x128xbf16>
    %8 = vector.shape_cast %5 : vector<1x128xbf16> to vector<1x1x128xbf16>
    tpu.vector_store %arg4[%c0_5, %c0_6, %c0_7], %8 {strides = array<i32>} : memref<1x16x128xbf16, #tpu.memory_space<vmem>>, vector<1x1x128xbf16>,
    %c0_8 = arith.constant 0 : index
    %c0_9 = arith.constant 0 : index
    %c0_10 = arith.constant 0 : index
    %9 = vector.load %arg1[%c0_8, %c0_9, %c0_10] : memref<1x12x128xbf16, #tpu.memory_space<vmem>>, vector<1x12x128xbf16>
    %10 = vector.shape_cast %9 : vector<1x12x128xbf16> to vector<12x128xbf16>
    %11 = arith.extf %10 : vector<12x128xbf16> to vector<12x128xf32>
    %c0_11 = arith.constant 0 : index
    %c1 = arith.constant 1 : index
    %c0_12 = arith.constant 0 : index
    %12 = vector.load %arg3[%c0_11, %c1, %c0_12] : memref<1x13x128xf32, #tpu.memory_space<vmem>>, vector<1x12x128xf32>
    %13 = vector.shape_cast %12 : vector<1x12x128xf32> to vector<12x128xf32>
    %14 = arith.addf %11, %13 : vector<12x128xf32>
    %15 = arith.truncf %14 : vector<12x128xf32> to vector<12x128xbf16>
    %c0_13 = arith.constant 0 : index
    %c1_14 = arith.constant 1 : index
    %c0_15 = arith.constant 0 : index
    %16 = vector.load %arg4[%c0_13, %c1_14, %c0_15] : memref<1x16x128xbf16, #tpu.memory_space<vmem>>, vector<1x12x128xbf16>
    %17 = vector.shape_cast %16 : vector<1x12x128xbf16> to vector<12x128xbf16>
    %18 = vector.shape_cast %15 : vector<12x128xbf16> to vector<1x12x128xbf16>
    tpu.vector_store %arg4[%c0_13, %c1_14, %c0_15], %18 {strides = array<i32>} : memref<1x16x128xbf16, #tpu.memory_space<vmem>>, vector<1x12x128xbf16>,
    %cst = arith.constant 0.000000e+00 : bf16
    %19 = vector.broadcast %cst : bf16 to vector<3x128xbf16>
    %c0_16 = arith.constant 0 : index
    %c13 = arith.constant 13 : index
    %c0_17 = arith.constant 0 : index
    %20 = vector.load %arg4[%c0_16, %c13, %c0_17] : memref<1x16x128xbf16, #tpu.memory_space<vmem>>, vector<1x3x128xbf16>
    %21 = vector.shape_cast %20 : vector<1x3x128xbf16> to vector<3x128xbf16>
    %22 = vector.shape_cast %19 : vector<3x128xbf16> to vector<1x3x128xbf16>
    tpu.vector_store %arg4[%c0_16, %c13, %c0_17], %22 {strides = array<i32>} : memref<1x16x128xbf16, #tpu.memory_space<vmem>>, vector<1x3x128xbf16>,
    return
  }
  func.func @transform_0(%arg0: i32) -> (i32, i32, i32) {
    %c0_i32 = arith.constant 0 : i32
    %c0_i32_0 = arith.constant 0 : i32
    %c0_i32_1 = arith.constant 0 : i32
    return %arg0, %c0_i32, %c0_i32_0 : i32, i32, i32
  }
  func.func @transform_1(%arg0: i32) -> (i32, i32, i32) {
    %c0_i32 = arith.constant 0 : i32
    %c0_i32_0 = arith.constant 0 : i32
    %c0_i32_1 = arith.constant 0 : i32
    %c0_i32_2 = arith.constant 0 : i32
    return %c0_i32, %c0_i32_0, %c0_i32_1 : i32, i32, i32
  }
  func.func @transform_2(%arg0: i32) -> (i32, i32, i32) {
    %c0_i32 = arith.constant 0 : i32
    %c0_i32_0 = arith.constant 0 : i32
    %c0_i32_1 = arith.constant 0 : i32
    %c0_i32_2 = arith.constant 0 : i32
    return %c0_i32, %c0_i32_0, %c0_i32_1 : i32, i32, i32
  }
  func.func @transform_3(%arg0: i32) -> (i32, i32, i32) {
    %c0_i32 = arith.constant 0 : i32
    %c0_i32_0 = arith.constant 0 : i32
    %c0_i32_1 = arith.constant 0 : i32
    return %arg0, %c0_i32, %c0_i32_0 : i32, i32, i32
  }
}

module attributes {stable_mosaic.version = 11 : i64} {
  func.func @_fused_linear_kernel(%arg0: i32, %arg1: i32, %arg2: memref<24x64xbf16, #tpu.memory_space<vmem>>, %arg3: memref<64x128xbf16, #tpu.memory_space<vmem>>, %arg4: memref<1x64xf32, #tpu.memory_space<vmem>>, %arg5: memref<1x64xf32, #tpu.memory_space<vmem>>, %arg6: memref<1x128xf32, #tpu.memory_space<vmem>>, %arg7: memref<1x128xf32, #tpu.memory_space<vmem>>, %arg8: memref<1x128xf32, #tpu.memory_space<vmem>>, %arg9: memref<24x128xbf16, #tpu.memory_space<vmem>>) attributes {dimension_semantics = [#tpu.dimension_semantics<parallel>, #tpu.dimension_semantics<parallel>], iteration_bounds = array<i64: 1, 1>, scalar_prefetch = 0 : i64, scratch_operands = 0 : i64, tpu.core_type = #tpu.core_type<tc>, window_params = [{transform_indices = @transform_0, window_bounds = array<i64: 24, 64>}, {transform_indices = @transform_1, window_bounds = array<i64: 64, 128>}, {pipeline_mode = #tpu.pipeline_mode<synchronous>, transform_indices = @transform_2, window_bounds = array<i64: 1, 64>}, {pipeline_mode = #tpu.pipeline_mode<synchronous>, transform_indices = @transform_3, window_bounds = array<i64: 1, 64>}, {transform_indices = @transform_4, window_bounds = array<i64: 1, 128>}, {transform_indices = @transform_5, window_bounds = array<i64: 1, 128>}, {transform_indices = @transform_6, window_bounds = array<i64: 1, 128>}, {transform_indices = @transform_7, window_bounds = array<i64: 24, 128>}]} {
    %c0 = arith.constant 0 : index
    %c0_0 = arith.constant 0 : index
    %0 = vector.load %arg2[%c0, %c0_0] : memref<24x64xbf16, #tpu.memory_space<vmem>>, vector<24x64xbf16>
    %1 = arith.extf %0 : vector<24x64xbf16> to vector<24x64xf32>
    %c0_1 = arith.constant 0 : index
    %c0_2 = arith.constant 0 : index
    %2 = vector.load %arg4[%c0_1, %c0_2] : memref<1x64xf32, #tpu.memory_space<vmem>>, vector<1x64xf32>
    %c0_3 = arith.constant 0 : index
    %c0_4 = arith.constant 0 : index
    %3 = vector.load %arg5[%c0_3, %c0_4] : memref<1x64xf32, #tpu.memory_space<vmem>>, vector<1x64xf32>
    %cst = arith.constant dense<0.000000e+00> : vector<24xf32>
    %4 = vector.multi_reduction <add>, %1, %cst [1] : vector<24x64xf32> to vector<24xf32>
    %5 = vector.shape_cast %4 : vector<24xf32> to vector<24x1xf32>
    %cst_5 = arith.constant 6.400000e+01 : f32
    %6 = vector.broadcast %cst_5 : f32 to vector<24x1xf32>
    %7 = arith.divf %5, %6 : vector<24x1xf32>
    %8 = vector.broadcast %7 : vector<24x1xf32> to vector<24x64xf32>
    %9 = arith.subf %1, %8 : vector<24x64xf32>
    %10 = arith.mulf %9, %9 : vector<24x64xf32>
    %cst_6 = arith.constant dense<0.000000e+00> : vector<24xf32>
    %11 = vector.multi_reduction <add>, %10, %cst_6 [1] : vector<24x64xf32> to vector<24xf32>
    %12 = vector.shape_cast %11 : vector<24xf32> to vector<24x1xf32>
    %cst_7 = arith.constant 6.400000e+01 : f32
    %13 = vector.broadcast %cst_7 : f32 to vector<24x1xf32>
    %14 = arith.divf %12, %13 : vector<24x1xf32>
    %15 = vector.broadcast %7 : vector<24x1xf32> to vector<24x64xf32>
    %16 = arith.subf %1, %15 : vector<24x64xf32>
    %cst_8 = arith.constant 9.99999974E-6 : f32
    %17 = vector.broadcast %cst_8 : f32 to vector<24x1xf32>
    %18 = arith.addf %14, %17 : vector<24x1xf32>
    %19 = math.rsqrt %18 : vector<24x1xf32>
    %20 = vector.broadcast %19 : vector<24x1xf32> to vector<24x64xf32>
    %21 = arith.mulf %16, %20 : vector<24x64xf32>
    %22 = vector.broadcast %2 : vector<1x64xf32> to vector<24x64xf32>
    %23 = arith.mulf %21, %22 : vector<24x64xf32>
    %24 = vector.broadcast %3 : vector<1x64xf32> to vector<24x64xf32>
    %25 = arith.addf %23, %24 : vector<24x64xf32>
    %26 = arith.truncf %25 : vector<24x64xf32> to vector<24x64xbf16>
    %c0_9 = arith.constant 0 : index
    %c0_10 = arith.constant 0 : index
    %27 = vector.load %arg3[%c0_9, %c0_10] : memref<64x128xbf16, #tpu.memory_space<vmem>>, vector<64x128xbf16>
    %cst_11 = arith.constant dense<0.000000e+00> : vector<24x128xf32>
    %28 = tpu.matmul %26, %27, %cst_11 {dimension_numbers = #tpu.dot_dimension_numbers<[1], [0], [0], [1], [0, 0, 1, 1], [], []>} : vector<24x64xbf16>, vector<64x128xbf16>, vector<24x128xf32> -> vector<24x128xf32>
    %c0_12 = arith.constant 0 : index
    %c0_13 = arith.constant 0 : index
    %29 = vector.load %arg6[%c0_12, %c0_13] : memref<1x128xf32, #tpu.memory_space<vmem>>, vector<1x128xf32>
    %30 = vector.broadcast %29 : vector<1x128xf32> to vector<24x128xf32>
    %31 = arith.addf %28, %30 : vector<24x128xf32>
    %c0_14 = arith.constant 0 : index
    %c0_15 = arith.constant 0 : index
    %32 = vector.load %arg7[%c0_14, %c0_15] : memref<1x128xf32, #tpu.memory_space<vmem>>, vector<1x128xf32>
    %c0_16 = arith.constant 0 : index
    %c0_17 = arith.constant 0 : index
    %33 = vector.load %arg8[%c0_16, %c0_17] : memref<1x128xf32, #tpu.memory_space<vmem>>, vector<1x128xf32>
    %cst_18 = arith.constant dense<0.000000e+00> : vector<24xf32>
    %34 = vector.multi_reduction <add>, %31, %cst_18 [1] : vector<24x128xf32> to vector<24xf32>
    %35 = vector.shape_cast %34 : vector<24xf32> to vector<24x1xf32>
    %cst_19 = arith.constant 1.280000e+02 : f32
    %36 = vector.broadcast %cst_19 : f32 to vector<24x1xf32>
    %37 = arith.divf %35, %36 : vector<24x1xf32>
    %38 = vector.broadcast %37 : vector<24x1xf32> to vector<24x128xf32>
    %39 = arith.subf %31, %38 : vector<24x128xf32>
    %40 = arith.mulf %39, %39 : vector<24x128xf32>
    %cst_20 = arith.constant dense<0.000000e+00> : vector<24xf32>
    %41 = vector.multi_reduction <add>, %40, %cst_20 [1] : vector<24x128xf32> to vector<24xf32>
    %42 = vector.shape_cast %41 : vector<24xf32> to vector<24x1xf32>
    %cst_21 = arith.constant 1.280000e+02 : f32
    %43 = vector.broadcast %cst_21 : f32 to vector<24x1xf32>
    %44 = arith.divf %42, %43 : vector<24x1xf32>
    %45 = vector.broadcast %37 : vector<24x1xf32> to vector<24x128xf32>
    %46 = arith.subf %31, %45 : vector<24x128xf32>
    %cst_22 = arith.constant 9.99999974E-6 : f32
    %47 = vector.broadcast %cst_22 : f32 to vector<24x1xf32>
    %48 = arith.addf %44, %47 : vector<24x1xf32>
    %49 = math.rsqrt %48 : vector<24x1xf32>
    %50 = vector.broadcast %49 : vector<24x1xf32> to vector<24x128xf32>
    %51 = arith.mulf %46, %50 : vector<24x128xf32>
    %52 = vector.broadcast %32 : vector<1x128xf32> to vector<24x128xf32>
    %53 = arith.mulf %51, %52 : vector<24x128xf32>
    %54 = vector.broadcast %33 : vector<1x128xf32> to vector<24x128xf32>
    %55 = arith.addf %53, %54 : vector<24x128xf32>
    %56 = arith.truncf %55 : vector<24x128xf32> to vector<24x128xbf16>
    %c0_23 = arith.constant 0 : index
    %c0_24 = arith.constant 0 : index
    %57 = vector.load %arg9[%c0_23, %c0_24] : memref<24x128xbf16, #tpu.memory_space<vmem>>, vector<24x128xbf16>
    tpu.vector_store %arg9[%c0_23, %c0_24], %56 {strides = array<i32>} : memref<24x128xbf16, #tpu.memory_space<vmem>>, vector<24x128xbf16>,
    return
  }
  func.func @transform_0(%arg0: i32, %arg1: i32) -> (i32, i32) {
    %c0_i32 = arith.constant 0 : i32
    %c0_i32_0 = arith.constant 0 : i32
    return %arg0, %c0_i32 : i32, i32
  }
  func.func @transform_1(%arg0: i32, %arg1: i32) -> (i32, i32) {
    %c0_i32 = arith.constant 0 : i32
    %c0_i32_0 = arith.constant 0 : i32
    return %c0_i32, %arg1 : i32, i32
  }
  func.func @transform_2(%arg0: i32, %arg1: i32) -> (i32, i32) {
    %c0_i32 = arith.constant 0 : i32
    %c0_i32_0 = arith.constant 0 : i32
    %c0_i32_1 = arith.constant 0 : i32
    return %c0_i32, %c0_i32_0 : i32, i32
  }
  func.func @transform_3(%arg0: i32, %arg1: i32) -> (i32, i32) {
    %c0_i32 = arith.constant 0 : i32
    %c0_i32_0 = arith.constant 0 : i32
    %c0_i32_1 = arith.constant 0 : i32
    return %c0_i32, %c0_i32_0 : i32, i32
  }
  func.func @transform_4(%arg0: i32, %arg1: i32) -> (i32, i32) {
    %c0_i32 = arith.constant 0 : i32
    %c0_i32_0 = arith.constant 0 : i32
    return %c0_i32, %arg1 : i32, i32
  }
  func.func @transform_5(%arg0: i32, %arg1: i32) -> (i32, i32) {
    %c0_i32 = arith.constant 0 : i32
    %c0_i32_0 = arith.constant 0 : i32
    return %c0_i32, %arg1 : i32, i32
  }
  func.func @transform_6(%arg0: i32, %arg1: i32) -> (i32, i32) {
    %c0_i32 = arith.constant 0 : i32
    %c0_i32_0 = arith.constant 0 : i32
    return %c0_i32, %arg1 : i32, i32
  }
  func.func @transform_7(%arg0: i32, %arg1: i32) -> (i32, i32) {
    %c0_i32 = arith.constant 0 : i32
    return %arg0, %arg1 : i32, i32
  }
}

module attributes {stable_mosaic.version = 11 : i64} {
  func.func @_fused_linear_kernel(%arg0: i32, %arg1: i32, %arg2: memref<32x128xbf16, #tpu.memory_space<vmem>>, %arg3: memref<128x384xbf16, #tpu.memory_space<vmem>>, %arg4: memref<1x128xf32, #tpu.memory_space<vmem>>, %arg5: memref<1x128xf32, #tpu.memory_space<vmem>>, %arg6: memref<32x384xbf16, #tpu.memory_space<vmem>>) attributes {dimension_semantics = [#tpu.dimension_semantics<parallel>, #tpu.dimension_semantics<parallel>], iteration_bounds = array<i64: 1, 1>, scalar_prefetch = 0 : i64, scratch_operands = 0 : i64, tpu.core_type = #tpu.core_type<tc>, window_params = [{transform_indices = @transform_0, window_bounds = array<i64: 32, 128>}, {transform_indices = @transform_1, window_bounds = array<i64: 128, 384>}, {pipeline_mode = #tpu.pipeline_mode<synchronous>, transform_indices = @transform_2, window_bounds = array<i64: 1, 128>}, {pipeline_mode = #tpu.pipeline_mode<synchronous>, transform_indices = @transform_3, window_bounds = array<i64: 1, 128>}, {transform_indices = @transform_4, window_bounds = array<i64: 32, 384>}]} {
    %c0 = arith.constant 0 : index
    %c0_0 = arith.constant 0 : index
    %0 = vector.load %arg2[%c0, %c0_0] : memref<32x128xbf16, #tpu.memory_space<vmem>>, vector<32x128xbf16>
    %1 = arith.extf %0 : vector<32x128xbf16> to vector<32x128xf32>
    %c0_1 = arith.constant 0 : index
    %c0_2 = arith.constant 0 : index
    %2 = vector.load %arg4[%c0_1, %c0_2] : memref<1x128xf32, #tpu.memory_space<vmem>>, vector<1x128xf32>
    %c0_3 = arith.constant 0 : index
    %c0_4 = arith.constant 0 : index
    %3 = vector.load %arg5[%c0_3, %c0_4] : memref<1x128xf32, #tpu.memory_space<vmem>>, vector<1x128xf32>
    %cst = arith.constant dense<0.000000e+00> : vector<32xf32>
    %4 = vector.multi_reduction <add>, %1, %cst [1] : vector<32x128xf32> to vector<32xf32>
    %5 = vector.shape_cast %4 : vector<32xf32> to vector<32x1xf32>
    %cst_5 = arith.constant 1.280000e+02 : f32
    %6 = vector.broadcast %cst_5 : f32 to vector<32x1xf32>
    %7 = arith.divf %5, %6 : vector<32x1xf32>
    %8 = vector.broadcast %7 : vector<32x1xf32> to vector<32x128xf32>
    %9 = arith.subf %1, %8 : vector<32x128xf32>
    %10 = arith.mulf %9, %9 : vector<32x128xf32>
    %cst_6 = arith.constant dense<0.000000e+00> : vector<32xf32>
    %11 = vector.multi_reduction <add>, %10, %cst_6 [1] : vector<32x128xf32> to vector<32xf32>
    %12 = vector.shape_cast %11 : vector<32xf32> to vector<32x1xf32>
    %cst_7 = arith.constant 1.280000e+02 : f32
    %13 = vector.broadcast %cst_7 : f32 to vector<32x1xf32>
    %14 = arith.divf %12, %13 : vector<32x1xf32>
    %15 = vector.broadcast %7 : vector<32x1xf32> to vector<32x128xf32>
    %16 = arith.subf %1, %15 : vector<32x128xf32>
    %cst_8 = arith.constant 9.99999974E-6 : f32
    %17 = vector.broadcast %cst_8 : f32 to vector<32x1xf32>
    %18 = arith.addf %14, %17 : vector<32x1xf32>
    %19 = math.rsqrt %18 : vector<32x1xf32>
    %20 = vector.broadcast %19 : vector<32x1xf32> to vector<32x128xf32>
    %21 = arith.mulf %16, %20 : vector<32x128xf32>
    %22 = vector.broadcast %2 : vector<1x128xf32> to vector<32x128xf32>
    %23 = arith.mulf %21, %22 : vector<32x128xf32>
    %24 = vector.broadcast %3 : vector<1x128xf32> to vector<32x128xf32>
    %25 = arith.addf %23, %24 : vector<32x128xf32>
    %26 = arith.truncf %25 : vector<32x128xf32> to vector<32x128xbf16>
    %c0_9 = arith.constant 0 : index
    %c0_10 = arith.constant 0 : index
    %27 = vector.load %arg3[%c0_9, %c0_10] : memref<128x384xbf16, #tpu.memory_space<vmem>>, vector<128x384xbf16>
    %cst_11 = arith.constant dense<0.000000e+00> : vector<32x384xf32>
    %28 = tpu.matmul %26, %27, %cst_11 {dimension_numbers = #tpu.dot_dimension_numbers<[1], [0], [0], [1], [0, 0, 1, 1], [], []>} : vector<32x128xbf16>, vector<128x384xbf16>, vector<32x384xf32> -> vector<32x384xf32>
    %29 = arith.truncf %28 : vector<32x384xf32> to vector<32x384xbf16>
    %c0_12 = arith.constant 0 : index
    %c0_13 = arith.constant 0 : index
    %30 = vector.load %arg6[%c0_12, %c0_13] : memref<32x384xbf16, #tpu.memory_space<vmem>>, vector<32x384xbf16>
    tpu.vector_store %arg6[%c0_12, %c0_13], %29 {strides = array<i32>} : memref<32x384xbf16, #tpu.memory_space<vmem>>, vector<32x384xbf16>,
    return
  }
  func.func @transform_0(%arg0: i32, %arg1: i32) -> (i32, i32) {
    %c0_i32 = arith.constant 0 : i32
    %c0_i32_0 = arith.constant 0 : i32
    return %arg0, %c0_i32 : i32, i32
  }
  func.func @transform_1(%arg0: i32, %arg1: i32) -> (i32, i32) {
    %c0_i32 = arith.constant 0 : i32
    %c0_i32_0 = arith.constant 0 : i32
    return %c0_i32, %arg1 : i32, i32
  }
  func.func @transform_2(%arg0: i32, %arg1: i32) -> (i32, i32) {
    %c0_i32 = arith.constant 0 : i32
    %c0_i32_0 = arith.constant 0 : i32
    %c0_i32_1 = arith.constant 0 : i32
    return %c0_i32, %c0_i32_0 : i32, i32
  }
  func.func @transform_3(%arg0: i32, %arg1: i32) -> (i32, i32) {
    %c0_i32 = arith.constant 0 : i32
    %c0_i32_0 = arith.constant 0 : i32
    %c0_i32_1 = arith.constant 0 : i32
    return %c0_i32, %c0_i32_0 : i32, i32
  }
  func.func @transform_4(%arg0: i32, %arg1: i32) -> (i32, i32) {
    %c0_i32 = arith.constant 0 : i32
    return %arg0, %arg1 : i32, i32
  }
}

module attributes {stable_mosaic.version = 11 : i64} {
  func.func @_attention_kernel(%arg0: i32, %arg1: i32, %arg2: memref<1x16x128xbf16, #tpu.memory_space<vmem>>, %arg3: memref<1x16x128xbf16, #tpu.memory_space<vmem>>, %arg4: memref<1x16x128xbf16, #tpu.memory_space<vmem>>, %arg5: memref<1x16x128xbf16, #tpu.memory_space<vmem>>) attributes {dimension_semantics = [#tpu.dimension_semantics<parallel>, #tpu.dimension_semantics<parallel>], iteration_bounds = array<i64: 2, 1>, scalar_prefetch = 0 : i64, scratch_operands = 0 : i64, tpu.core_type = #tpu.core_type<tc>, window_params = [{transform_indices = @transform_0, window_bounds = array<i64: 1, 16, 128>}, {transform_indices = @transform_1, window_bounds = array<i64: 1, 16, 128>}, {transform_indices = @transform_2, window_bounds = array<i64: 1, 16, 128>}, {transform_indices = @transform_3, window_bounds = array<i64: 1, 16, 128>}]} {
    %0 = tpu.iota {dimensions = array<i32: 1>} : vector<1x16xi32>
    %c13_i32 = arith.constant 13 : i32
    %1 = vector.broadcast %c13_i32 : i32 to vector<1x16xi32>
    %2 = arith.cmpi slt, %0, %1 : vector<1x16xi32>
    %cst = arith.constant 0.000000e+00 : f32
    %cst_0 = arith.constant -1.000000e+30 : f32
    %3 = vector.broadcast %cst : f32 to vector<1x16xf32>
    %4 = vector.broadcast %cst_0 : f32 to vector<1x16xf32>
    %5 = arith.select %2, %3, %4 : vector<1x16xi1>, vector<1x16xf32>
    %c0 = arith.constant 0 : index
    %c0_1 = arith.constant 0 : index
    %c0_2 = arith.constant 0 : index
    %6 = vector.load %arg2[%c0, %c0_1, %c0_2] : memref<1x16x128xbf16, #tpu.memory_space<vmem>>, vector<1x16x32xbf16>
    %7 = vector.shape_cast %6 : vector<1x16x32xbf16> to vector<16x32xbf16>
    %cst_3 = arith.constant 1.767580e-01 : bf16
    %8 = vector.broadcast %cst_3 : bf16 to vector<16x32xbf16>
    %9 = arith.mulf %7, %8 : vector<16x32xbf16>
    %c0_4 = arith.constant 0 : index
    %c0_5 = arith.constant 0 : index
    %c0_6 = arith.constant 0 : index
    %10 = vector.load %arg3[%c0_4, %c0_5, %c0_6] : memref<1x16x128xbf16, #tpu.memory_space<vmem>>, vector<1x16x32xbf16>
    %11 = vector.shape_cast %10 : vector<1x16x32xbf16> to vector<16x32xbf16>
    %c0_7 = arith.constant 0 : index
    %c0_8 = arith.constant 0 : index
    %c0_9 = arith.constant 0 : index
    %12 = vector.load %arg4[%c0_7, %c0_8, %c0_9] : memref<1x16x128xbf16, #tpu.memory_space<vmem>>, vector<1x16x32xbf16>
    %13 = vector.shape_cast %12 : vector<1x16x32xbf16> to vector<16x32xbf16>
    %cst_10 = arith.constant dense<0.000000e+00> : vector<16x16xf32>
    %14 = tpu.matmul %9, %11, %cst_10 {dimension_numbers = #tpu.dot_dimension_numbers<[1], [1], [0], [0], [0, 0, 1, 0], [], []>} : vector<16x32xbf16>, vector<16x32xbf16>, vector<16x16xf32> -> vector<16x16xf32>
    %15 = vector.broadcast %5 : vector<1x16xf32> to vector<16x16xf32>
    %16 = arith.addf %14, %15 : vector<16x16xf32>
    %cst_11 = arith.constant dense<0xFF800000> : vector<16xf32>
    %17 = vector.multi_reduction <maximumf>, %16, %cst_11 [1] : vector<16x16xf32> to vector<16xf32>
    %18 = vector.shape_cast %17 : vector<16xf32> to vector<16x1xf32>
    %19 = vector.broadcast %18 : vector<16x1xf32> to vector<16x16xf32>
    %20 = arith.subf %16, %19 : vector<16x16xf32>
    %21 = math.exp %20 : vector<16x16xf32>
    %cst_12 = arith.constant dense<0.000000e+00> : vector<16xf32>
    %22 = vector.multi_reduction <add>, %21, %cst_12 [1] : vector<16x16xf32> to vector<16xf32>
    %23 = vector.shape_cast %22 : vector<16xf32> to vector<16x1xf32>
    %24 = vector.broadcast %23 : vector<16x1xf32> to vector<16x16xf32>
    %25 = arith.divf %21, %24 : vector<16x16xf32>
    %26 = arith.truncf %25 : vector<16x16xf32> to vector<16x16xbf16>
    %cst_13 = arith.constant dense<0.000000e+00> : vector<16x32xf32>
    %27 = tpu.matmul %26, %13, %cst_13 {dimension_numbers = #tpu.dot_dimension_numbers<[1], [0], [0], [1], [0, 0, 1, 1], [], []>} : vector<16x16xbf16>, vector<16x32xbf16>, vector<16x32xf32> -> vector<16x32xf32>
    %28 = arith.truncf %27 : vector<16x32xf32> to vector<16x32xbf16>
    %c0_14 = arith.constant 0 : index
    %c0_15 = arith.constant 0 : index
    %c32 = arith.constant 32 : index
    %29 = vector.load %arg2[%c0_14, %c0_15, %c32] : memref<1x16x128xbf16, #tpu.memory_space<vmem>>, vector<1x16x32xbf16>
    %30 = vector.shape_cast %29 : vector<1x16x32xbf16> to vector<16x32xbf16>
    %cst_16 = arith.constant 1.767580e-01 : bf16
    %31 = vector.broadcast %cst_16 : bf16 to vector<16x32xbf16>
    %32 = arith.mulf %30, %31 : vector<16x32xbf16>
    %c0_17 = arith.constant 0 : index
    %c0_18 = arith.constant 0 : index
    %c32_19 = arith.constant 32 : index
    %33 = vector.load %arg3[%c0_17, %c0_18, %c32_19] : memref<1x16x128xbf16, #tpu.memory_space<vmem>>, vector<1x16x32xbf16>
    %34 = vector.shape_cast %33 : vector<1x16x32xbf16> to vector<16x32xbf16>
    %c0_20 = arith.constant 0 : index
    %c0_21 = arith.constant 0 : index
    %c32_22 = arith.constant 32 : index
    %35 = vector.load %arg4[%c0_20, %c0_21, %c32_22] : memref<1x16x128xbf16, #tpu.memory_space<vmem>>, vector<1x16x32xbf16>
    %36 = vector.shape_cast %35 : vector<1x16x32xbf16> to vector<16x32xbf16>
    %cst_23 = arith.constant dense<0.000000e+00> : vector<16x16xf32>
    %37 = tpu.matmul %32, %34, %cst_23 {dimension_numbers = #tpu.dot_dimension_numbers<[1], [1], [0], [0], [0, 0, 1, 0], [], []>} : vector<16x32xbf16>, vector<16x32xbf16>, vector<16x16xf32> -> vector<16x16xf32>
    %38 = vector.broadcast %5 : vector<1x16xf32> to vector<16x16xf32>
    %39 = arith.addf %37, %38 : vector<16x16xf32>
    %cst_24 = arith.constant dense<0xFF800000> : vector<16xf32>
    %40 = vector.multi_reduction <maximumf>, %39, %cst_24 [1] : vector<16x16xf32> to vector<16xf32>
    %41 = vector.shape_cast %40 : vector<16xf32> to vector<16x1xf32>
    %42 = vector.broadcast %41 : vector<16x1xf32> to vector<16x16xf32>
    %43 = arith.subf %39, %42 : vector<16x16xf32>
    %44 = math.exp %43 : vector<16x16xf32>
    %cst_25 = arith.constant dense<0.000000e+00> : vector<16xf32>
    %45 = vector.multi_reduction <add>, %44, %cst_25 [1] : vector<16x16xf32> to vector<16xf32>
    %46 = vector.shape_cast %45 : vector<16xf32> to vector<16x1xf32>
    %47 = vector.broadcast %46 : vector<16x1xf32> to vector<16x16xf32>
    %48 = arith.divf %44, %47 : vector<16x16xf32>
    %49 = arith.truncf %48 : vector<16x16xf32> to vector<16x16xbf16>
    %cst_26 = arith.constant dense<0.000000e+00> : vector<16x32xf32>
    %50 = tpu.matmul %49, %36, %cst_26 {dimension_numbers = #tpu.dot_dimension_numbers<[1], [0], [0], [1], [0, 0, 1, 1], [], []>} : vector<16x16xbf16>, vector<16x32xbf16>, vector<16x32xf32> -> vector<16x32xf32>
    %51 = arith.truncf %50 : vector<16x32xf32> to vector<16x32xbf16>
    %c0_27 = arith.constant 0 : index
    %c0_28 = arith.constant 0 : index
    %c64 = arith.constant 64 : index
    %52 = vector.load %arg2[%c0_27, %c0_28, %c64] : memref<1x16x128xbf16, #tpu.memory_space<vmem>>, vector<1x16x32xbf16>
    %53 = vector.shape_cast %52 : vector<1x16x32xbf16> to vector<16x32xbf16>
    %cst_29 = arith.constant 1.767580e-01 : bf16
    %54 = vector.broadcast %cst_29 : bf16 to vector<16x32xbf16>
    %55 = arith.mulf %53, %54 : vector<16x32xbf16>
    %c0_30 = arith.constant 0 : index
    %c0_31 = arith.constant 0 : index
    %c64_32 = arith.constant 64 : index
    %56 = vector.load %arg3[%c0_30, %c0_31, %c64_32] : memref<1x16x128xbf16, #tpu.memory_space<vmem>>, vector<1x16x32xbf16>
    %57 = vector.shape_cast %56 : vector<1x16x32xbf16> to vector<16x32xbf16>
    %c0_33 = arith.constant 0 : index
    %c0_34 = arith.constant 0 : index
    %c64_35 = arith.constant 64 : index
    %58 = vector.load %arg4[%c0_33, %c0_34, %c64_35] : memref<1x16x128xbf16, #tpu.memory_space<vmem>>, vector<1x16x32xbf16>
    %59 = vector.shape_cast %58 : vector<1x16x32xbf16> to vector<16x32xbf16>
    %cst_36 = arith.constant dense<0.000000e+00> : vector<16x16xf32>
    %60 = tpu.matmul %55, %57, %cst_36 {dimension_numbers = #tpu.dot_dimension_numbers<[1], [1], [0], [0], [0, 0, 1, 0], [], []>} : vector<16x32xbf16>, vector<16x32xbf16>, vector<16x16xf32> -> vector<16x16xf32>
    %61 = vector.broadcast %5 : vector<1x16xf32> to vector<16x16xf32>
    %62 = arith.addf %60, %61 : vector<16x16xf32>
    %cst_37 = arith.constant dense<0xFF800000> : vector<16xf32>
    %63 = vector.multi_reduction <maximumf>, %62, %cst_37 [1] : vector<16x16xf32> to vector<16xf32>
    %64 = vector.shape_cast %63 : vector<16xf32> to vector<16x1xf32>
    %65 = vector.broadcast %64 : vector<16x1xf32> to vector<16x16xf32>
    %66 = arith.subf %62, %65 : vector<16x16xf32>
    %67 = math.exp %66 : vector<16x16xf32>
    %cst_38 = arith.constant dense<0.000000e+00> : vector<16xf32>
    %68 = vector.multi_reduction <add>, %67, %cst_38 [1] : vector<16x16xf32> to vector<16xf32>
    %69 = vector.shape_cast %68 : vector<16xf32> to vector<16x1xf32>
    %70 = vector.broadcast %69 : vector<16x1xf32> to vector<16x16xf32>
    %71 = arith.divf %67, %70 : vector<16x16xf32>
    %72 = arith.truncf %71 : vector<16x16xf32> to vector<16x16xbf16>
    %cst_39 = arith.constant dense<0.000000e+00> : vector<16x32xf32>
    %73 = tpu.matmul %72, %59, %cst_39 {dimension_numbers = #tpu.dot_dimension_numbers<[1], [0], [0], [1], [0, 0, 1, 1], [], []>} : vector<16x16xbf16>, vector<16x32xbf16>, vector<16x32xf32> -> vector<16x32xf32>
    %74 = arith.truncf %73 : vector<16x32xf32> to vector<16x32xbf16>
    %c0_40 = arith.constant 0 : index
    %c0_41 = arith.constant 0 : index
    %c96 = arith.constant 96 : index
    %75 = vector.load %arg2[%c0_40, %c0_41, %c96] : memref<1x16x128xbf16, #tpu.memory_space<vmem>>, vector<1x16x32xbf16>
    %76 = vector.shape_cast %75 : vector<1x16x32xbf16> to vector<16x32xbf16>
    %cst_42 = arith.constant 1.767580e-01 : bf16
    %77 = vector.broadcast %cst_42 : bf16 to vector<16x32xbf16>
    %78 = arith.mulf %76, %77 : vector<16x32xbf16>
    %c0_43 = arith.constant 0 : index
    %c0_44 = arith.constant 0 : index
    %c96_45 = arith.constant 96 : index
    %79 = vector.load %arg3[%c0_43, %c0_44, %c96_45] : memref<1x16x128xbf16, #tpu.memory_space<vmem>>, vector<1x16x32xbf16>
    %80 = vector.shape_cast %79 : vector<1x16x32xbf16> to vector<16x32xbf16>
    %c0_46 = arith.constant 0 : index
    %c0_47 = arith.constant 0 : index
    %c96_48 = arith.constant 96 : index
    %81 = vector.load %arg4[%c0_46, %c0_47, %c96_48] : memref<1x16x128xbf16, #tpu.memory_space<vmem>>, vector<1x16x32xbf16>
    %82 = vector.shape_cast %81 : vector<1x16x32xbf16> to vector<16x32xbf16>
    %cst_49 = arith.constant dense<0.000000e+00> : vector<16x16xf32>
    %83 = tpu.matmul %78, %80, %cst_49 {dimension_numbers = #tpu.dot_dimension_numbers<[1], [1], [0], [0], [0, 0, 1, 0], [], []>} : vector<16x32xbf16>, vector<16x32xbf16>, vector<16x16xf32> -> vector<16x16xf32>
    %84 = vector.broadcast %5 : vector<1x16xf32> to vector<16x16xf32>
    %85 = arith.addf %83, %84 : vector<16x16xf32>
    %cst_50 = arith.constant dense<0xFF800000> : vector<16xf32>
    %86 = vector.multi_reduction <maximumf>, %85, %cst_50 [1] : vector<16x16xf32> to vector<16xf32>
    %87 = vector.shape_cast %86 : vector<16xf32> to vector<16x1xf32>
    %88 = vector.broadcast %87 : vector<16x1xf32> to vector<16x16xf32>
    %89 = arith.subf %85, %88 : vector<16x16xf32>
    %90 = math.exp %89 : vector<16x16xf32>
    %cst_51 = arith.constant dense<0.000000e+00> : vector<16xf32>
    %91 = vector.multi_reduction <add>, %90, %cst_51 [1] : vector<16x16xf32> to vector<16xf32>
    %92 = vector.shape_cast %91 : vector<16xf32> to vector<16x1xf32>
    %93 = vector.broadcast %92 : vector<16x1xf32> to vector<16x16xf32>
    %94 = arith.divf %90, %93 : vector<16x16xf32>
    %95 = arith.truncf %94 : vector<16x16xf32> to vector<16x16xbf16>
    %cst_52 = arith.constant dense<0.000000e+00> : vector<16x32xf32>
    %96 = tpu.matmul %95, %82, %cst_52 {dimension_numbers = #tpu.dot_dimension_numbers<[1], [0], [0], [1], [0, 0, 1, 1], [], []>} : vector<16x16xbf16>, vector<16x32xbf16>, vector<16x32xf32> -> vector<16x32xf32>
    %97 = arith.truncf %96 : vector<16x32xf32> to vector<16x32xbf16>
    %98 = tpu.concatenate %28, %51, %74, %97 in 1 : vector<16x32xbf16>, vector<16x32xbf16>, vector<16x32xbf16>, vector<16x32xbf16> -> vector<16x128xbf16>
    %c0_53 = arith.constant 0 : index
    %c0_54 = arith.constant 0 : index
    %c0_55 = arith.constant 0 : index
    %99 = vector.load %arg5[%c0_53, %c0_54, %c0_55] : memref<1x16x128xbf16, #tpu.memory_space<vmem>>, vector<1x16x128xbf16>
    %100 = vector.shape_cast %99 : vector<1x16x128xbf16> to vector<16x128xbf16>
    %101 = vector.shape_cast %98 : vector<16x128xbf16> to vector<1x16x128xbf16>
    tpu.vector_store %arg5[%c0_53, %c0_54, %c0_55], %101 {strides = array<i32>} : memref<1x16x128xbf16, #tpu.memory_space<vmem>>, vector<1x16x128xbf16>,
    return
  }
  func.func @transform_0(%arg0: i32, %arg1: i32) -> (i32, i32, i32) {
    %c0_i32 = arith.constant 0 : i32
    %c0_i32_0 = arith.constant 0 : i32
    return %arg0, %arg1, %c0_i32 : i32, i32, i32
  }
  func.func @transform_1(%arg0: i32, %arg1: i32) -> (i32, i32, i32) {
    %c0_i32 = arith.constant 0 : i32
    %c1_i32 = arith.constant 1 : i32
    %c0_i32_0 = arith.constant 0 : i32
    return %arg0, %c0_i32, %c1_i32 : i32, i32, i32
  }
  func.func @transform_2(%arg0: i32, %arg1: i32) -> (i32, i32, i32) {
    %c0_i32 = arith.constant 0 : i32
    %c2_i32 = arith.constant 2 : i32
    %c0_i32_0 = arith.constant 0 : i32
    return %arg0, %c0_i32, %c2_i32 : i32, i32, i32
  }
  func.func @transform_3(%arg0: i32, %arg1: i32) -> (i32, i32, i32) {
    %c0_i32 = arith.constant 0 : i32
    %c0_i32_0 = arith.constant 0 : i32
    return %arg0, %arg1, %c0_i32 : i32, i32, i32
  }
}

module attributes {stable_mosaic.version = 11 : i64} {
  func.func @_fused_linear_kernel(%arg0: i32, %arg1: i32, %arg2: memref<32x128xbf16, #tpu.memory_space<vmem>>, %arg3: memref<128x128xbf16, #tpu.memory_space<vmem>>, %arg4: memref<1x128xf32, #tpu.memory_space<vmem>>, %arg5: memref<32x128xbf16, #tpu.memory_space<vmem>>, %arg6: memref<32x128xbf16, #tpu.memory_space<vmem>>) attributes {dimension_semantics = [#tpu.dimension_semantics<parallel>, #tpu.dimension_semantics<parallel>], iteration_bounds = array<i64: 1, 1>, scalar_prefetch = 0 : i64, scratch_operands = 0 : i64, tpu.core_type = #tpu.core_type<tc>, window_params = [{transform_indices = @transform_0, window_bounds = array<i64: 32, 128>}, {transform_indices = @transform_1, window_bounds = array<i64: 128, 128>}, {transform_indices = @transform_2, window_bounds = array<i64: 1, 128>}, {transform_indices = @transform_3, window_bounds = array<i64: 32, 128>}, {transform_indices = @transform_4, window_bounds = array<i64: 32, 128>}]} {
    %c0 = arith.constant 0 : index
    %c0_0 = arith.constant 0 : index
    %0 = vector.load %arg2[%c0, %c0_0] : memref<32x128xbf16, #tpu.memory_space<vmem>>, vector<32x128xbf16>
    %c0_1 = arith.constant 0 : index
    %c0_2 = arith.constant 0 : index
    %1 = vector.load %arg3[%c0_1, %c0_2] : memref<128x128xbf16, #tpu.memory_space<vmem>>, vector<128x128xbf16>
    %cst = arith.constant dense<0.000000e+00> : vector<32x128xf32>
    %2 = tpu.matmul %0, %1, %cst {dimension_numbers = #tpu.dot_dimension_numbers<[1], [0], [0], [1], [0, 0, 1, 1], [], []>} : vector<32x128xbf16>, vector<128x128xbf16>, vector<32x128xf32> -> vector<32x128xf32>
    %c0_3 = arith.constant 0 : index
    %c0_4 = arith.constant 0 : index
    %3 = vector.load %arg4[%c0_3, %c0_4] : memref<1x128xf32, #tpu.memory_space<vmem>>, vector<1x128xf32>
    %4 = vector.broadcast %3 : vector<1x128xf32> to vector<32x128xf32>
    %5 = arith.addf %2, %4 : vector<32x128xf32>
    %c0_5 = arith.constant 0 : index
    %c0_6 = arith.constant 0 : index
    %6 = vector.load %arg5[%c0_5, %c0_6] : memref<32x128xbf16, #tpu.memory_space<vmem>>, vector<32x128xbf16>
    %7 = arith.extf %6 : vector<32x128xbf16> to vector<32x128xf32>
    %8 = arith.addf %5, %7 : vector<32x128xf32>
    %9 = arith.truncf %8 : vector<32x128xf32> to vector<32x128xbf16>
    %c0_7 = arith.constant 0 : index
    %c0_8 = arith.constant 0 : index
    %10 = vector.load %arg6[%c0_7, %c0_8] : memref<32x128xbf16, #tpu.memory_space<vmem>>, vector<32x128xbf16>
    tpu.vector_store %arg6[%c0_7, %c0_8], %9 {strides = array<i32>} : memref<32x128xbf16, #tpu.memory_space<vmem>>, vector<32x128xbf16>,
    return
  }
  func.func @transform_0(%arg0: i32, %arg1: i32) -> (i32, i32) {
    %c0_i32 = arith.constant 0 : i32
    %c0_i32_0 = arith.constant 0 : i32
    return %arg0, %c0_i32 : i32, i32
  }
  func.func @transform_1(%arg0: i32, %arg1: i32) -> (i32, i32) {
    %c0_i32 = arith.constant 0 : i32
    %c0_i32_0 = arith.constant 0 : i32
    return %c0_i32, %arg1 : i32, i32
  }
  func.func @transform_2(%arg0: i32, %arg1: i32) -> (i32, i32) {
    %c0_i32 = arith.constant 0 : i32
    %c0_i32_0 = arith.constant 0 : i32
    return %c0_i32, %arg1 : i32, i32
  }
  func.func @transform_3(%arg0: i32, %arg1: i32) -> (i32, i32) {
    %c0_i32 = arith.constant 0 : i32
    return %arg0, %arg1 : i32, i32
  }
  func.func @transform_4(%arg0: i32, %arg1: i32) -> (i32, i32) {
    %c0_i32 = arith.constant 0 : i32
    return %arg0, %arg1 : i32, i32
  }
}

module attributes {stable_mosaic.version = 11 : i64} {
  func.func @_fused_linear_kernel(%arg0: i32, %arg1: i32, %arg2: memref<32x256xbf16, #tpu.memory_space<vmem>>, %arg3: memref<256x128xbf16, #tpu.memory_space<vmem>>, %arg4: memref<1x128xf32, #tpu.memory_space<vmem>>, %arg5: memref<32x128xbf16, #tpu.memory_space<vmem>>, %arg6: memref<32x128xbf16, #tpu.memory_space<vmem>>) attributes {dimension_semantics = [#tpu.dimension_semantics<parallel>, #tpu.dimension_semantics<parallel>], iteration_bounds = array<i64: 1, 1>, scalar_prefetch = 0 : i64, scratch_operands = 0 : i64, tpu.core_type = #tpu.core_type<tc>, window_params = [{transform_indices = @transform_0, window_bounds = array<i64: 32, 256>}, {transform_indices = @transform_1, window_bounds = array<i64: 256, 128>}, {transform_indices = @transform_2, window_bounds = array<i64: 1, 128>}, {transform_indices = @transform_3, window_bounds = array<i64: 32, 128>}, {transform_indices = @transform_4, window_bounds = array<i64: 32, 128>}]} {
    %c0 = arith.constant 0 : index
    %c0_0 = arith.constant 0 : index
    %0 = vector.load %arg2[%c0, %c0_0] : memref<32x256xbf16, #tpu.memory_space<vmem>>, vector<32x256xbf16>
    %c0_1 = arith.constant 0 : index
    %c0_2 = arith.constant 0 : index
    %1 = vector.load %arg3[%c0_1, %c0_2] : memref<256x128xbf16, #tpu.memory_space<vmem>>, vector<256x128xbf16>
    %cst = arith.constant dense<0.000000e+00> : vector<32x128xf32>
    %2 = tpu.matmul %0, %1, %cst {dimension_numbers = #tpu.dot_dimension_numbers<[1], [0], [0], [1], [0, 0, 1, 1], [], []>} : vector<32x256xbf16>, vector<256x128xbf16>, vector<32x128xf32> -> vector<32x128xf32>
    %c0_3 = arith.constant 0 : index
    %c0_4 = arith.constant 0 : index
    %3 = vector.load %arg4[%c0_3, %c0_4] : memref<1x128xf32, #tpu.memory_space<vmem>>, vector<1x128xf32>
    %4 = vector.broadcast %3 : vector<1x128xf32> to vector<32x128xf32>
    %5 = arith.addf %2, %4 : vector<32x128xf32>
    %c0_5 = arith.constant 0 : index
    %c0_6 = arith.constant 0 : index
    %6 = vector.load %arg5[%c0_5, %c0_6] : memref<32x128xbf16, #tpu.memory_space<vmem>>, vector<32x128xbf16>
    %7 = arith.extf %6 : vector<32x128xbf16> to vector<32x128xf32>
    %8 = arith.addf %5, %7 : vector<32x128xf32>
    %9 = arith.truncf %8 : vector<32x128xf32> to vector<32x128xbf16>
    %c0_7 = arith.constant 0 : index
    %c0_8 = arith.constant 0 : index
    %10 = vector.load %arg6[%c0_7, %c0_8] : memref<32x128xbf16, #tpu.memory_space<vmem>>, vector<32x128xbf16>
    tpu.vector_store %arg6[%c0_7, %c0_8], %9 {strides = array<i32>} : memref<32x128xbf16, #tpu.memory_space<vmem>>, vector<32x128xbf16>,
    return
  }
  func.func @transform_0(%arg0: i32, %arg1: i32) -> (i32, i32) {
    %c0_i32 = arith.constant 0 : i32
    %c0_i32_0 = arith.constant 0 : i32
    return %arg0, %c0_i32 : i32, i32
  }
  func.func @transform_1(%arg0: i32, %arg1: i32) -> (i32, i32) {
    %c0_i32 = arith.constant 0 : i32
    %c0_i32_0 = arith.constant 0 : i32
    return %c0_i32, %arg1 : i32, i32
  }
  func.func @transform_2(%arg0: i32, %arg1: i32) -> (i32, i32) {
    %c0_i32 = arith.constant 0 : i32
    %c0_i32_0 = arith.constant 0 : i32
    return %c0_i32, %arg1 : i32, i32
  }
  func.func @transform_3(%arg0: i32, %arg1: i32) -> (i32, i32) {
    %c0_i32 = arith.constant 0 : i32
    return %arg0, %arg1 : i32, i32
  }
  func.func @transform_4(%arg0: i32, %arg1: i32) -> (i32, i32) {
    %c0_i32 = arith.constant 0 : i32
    return %arg0, %arg1 : i32, i32
  }
}

module attributes {stable_mosaic.version = 11 : i64} {
  func.func @_fused_linear_kernel(%arg0: i32, %arg1: i32, %arg2: memref<32x128xbf16, #tpu.memory_space<vmem>>, %arg3: memref<128x256xbf16, #tpu.memory_space<vmem>>, %arg4: memref<1x128xf32, #tpu.memory_space<vmem>>, %arg5: memref<1x128xf32, #tpu.memory_space<vmem>>, %arg6: memref<1x256xf32, #tpu.memory_space<vmem>>, %arg7: memref<32x256xbf16, #tpu.memory_space<vmem>>) attributes {dimension_semantics = [#tpu.dimension_semantics<parallel>, #tpu.dimension_semantics<parallel>], iteration_bounds = array<i64: 1, 1>, scalar_prefetch = 0 : i64, scratch_operands = 0 : i64, tpu.core_type = #tpu.core_type<tc>, window_params = [{transform_indices = @transform_0, window_bounds = array<i64: 32, 128>}, {transform_indices = @transform_1, window_bounds = array<i64: 128, 256>}, {pipeline_mode = #tpu.pipeline_mode<synchronous>, transform_indices = @transform_2, window_bounds = array<i64: 1, 128>}, {pipeline_mode = #tpu.pipeline_mode<synchronous>, transform_indices = @transform_3, window_bounds = array<i64: 1, 128>}, {transform_indices = @transform_4, window_bounds = array<i64: 1, 256>}, {transform_indices = @transform_5, window_bounds = array<i64: 32, 256>}]} {
    %c0 = arith.constant 0 : index
    %c0_0 = arith.constant 0 : index
    %0 = vector.load %arg2[%c0, %c0_0] : memref<32x128xbf16, #tpu.memory_space<vmem>>, vector<32x128xbf16>
    %1 = arith.extf %0 : vector<32x128xbf16> to vector<32x128xf32>
    %c0_1 = arith.constant 0 : index
    %c0_2 = arith.constant 0 : index
    %2 = vector.load %arg4[%c0_1, %c0_2] : memref<1x128xf32, #tpu.memory_space<vmem>>, vector<1x128xf32>
    %c0_3 = arith.constant 0 : index
    %c0_4 = arith.constant 0 : index
    %3 = vector.load %arg5[%c0_3, %c0_4] : memref<1x128xf32, #tpu.memory_space<vmem>>, vector<1x128xf32>
    %cst = arith.constant dense<0.000000e+00> : vector<32xf32>
    %4 = vector.multi_reduction <add>, %1, %cst [1] : vector<32x128xf32> to vector<32xf32>
    %5 = vector.shape_cast %4 : vector<32xf32> to vector<32x1xf32>
    %cst_5 = arith.constant 1.280000e+02 : f32
    %6 = vector.broadcast %cst_5 : f32 to vector<32x1xf32>
    %7 = arith.divf %5, %6 : vector<32x1xf32>
    %8 = vector.broadcast %7 : vector<32x1xf32> to vector<32x128xf32>
    %9 = arith.subf %1, %8 : vector<32x128xf32>
    %10 = arith.mulf %9, %9 : vector<32x128xf32>
    %cst_6 = arith.constant dense<0.000000e+00> : vector<32xf32>
    %11 = vector.multi_reduction <add>, %10, %cst_6 [1] : vector<32x128xf32> to vector<32xf32>
    %12 = vector.shape_cast %11 : vector<32xf32> to vector<32x1xf32>
    %cst_7 = arith.constant 1.280000e+02 : f32
    %13 = vector.broadcast %cst_7 : f32 to vector<32x1xf32>
    %14 = arith.divf %12, %13 : vector<32x1xf32>
    %15 = vector.broadcast %7 : vector<32x1xf32> to vector<32x128xf32>
    %16 = arith.subf %1, %15 : vector<32x128xf32>
    %cst_8 = arith.constant 9.99999974E-6 : f32
    %17 = vector.broadcast %cst_8 : f32 to vector<32x1xf32>
    %18 = arith.addf %14, %17 : vector<32x1xf32>
    %19 = math.rsqrt %18 : vector<32x1xf32>
    %20 = vector.broadcast %19 : vector<32x1xf32> to vector<32x128xf32>
    %21 = arith.mulf %16, %20 : vector<32x128xf32>
    %22 = vector.broadcast %2 : vector<1x128xf32> to vector<32x128xf32>
    %23 = arith.mulf %21, %22 : vector<32x128xf32>
    %24 = vector.broadcast %3 : vector<1x128xf32> to vector<32x128xf32>
    %25 = arith.addf %23, %24 : vector<32x128xf32>
    %26 = arith.truncf %25 : vector<32x128xf32> to vector<32x128xbf16>
    %c0_9 = arith.constant 0 : index
    %c0_10 = arith.constant 0 : index
    %27 = vector.load %arg3[%c0_9, %c0_10] : memref<128x256xbf16, #tpu.memory_space<vmem>>, vector<128x256xbf16>
    %cst_11 = arith.constant dense<0.000000e+00> : vector<32x256xf32>
    %28 = tpu.matmul %26, %27, %cst_11 {dimension_numbers = #tpu.dot_dimension_numbers<[1], [0], [0], [1], [0, 0, 1, 1], [], []>} : vector<32x128xbf16>, vector<128x256xbf16>, vector<32x256xf32> -> vector<32x256xf32>
    %c0_12 = arith.constant 0 : index
    %c0_13 = arith.constant 0 : index
    %29 = vector.load %arg6[%c0_12, %c0_13] : memref<1x256xf32, #tpu.memory_space<vmem>>, vector<1x256xf32>
    %30 = vector.broadcast %29 : vector<1x256xf32> to vector<32x256xf32>
    %31 = arith.addf %28, %30 : vector<32x256xf32>
    %cst_14 = arith.constant 5.000000e-01 : f32
    %32 = vector.broadcast %cst_14 : f32 to vector<32x256xf32>
    %33 = arith.mulf %32, %31 : vector<32x256xf32>
    %cst_15 = arith.constant 0.707106769 : f32
    %34 = vector.broadcast %cst_15 : f32 to vector<32x256xf32>
    %35 = arith.mulf %31, %34 : vector<32x256xf32>
    %36 = math.absf %35 : vector<32x256xf32>
    %cst_16 = arith.constant 0.327591091 : f32
    %37 = vector.broadcast %cst_16 : f32 to vector<32x256xf32>
    %38 = arith.mulf %37, %36 : vector<32x256xf32>
    %cst_17 = arith.constant 1.000000e+00 : f32
    %39 = vector.broadcast %cst_17 : f32 to vector<32x256xf32>
    %40 = arith.addf %39, %38 : vector<32x256xf32>
    %cst_18 = arith.constant 1.000000e+00 : f32
    %41 = vector.broadcast %cst_18 : f32 to vector<32x256xf32>
    %42 = arith.divf %41, %40 : vector<32x256xf32>
    %cst_19 = arith.constant 1.06140542 : f32
    %43 = vector.broadcast %cst_19 : f32 to vector<32x256xf32>
    %44 = arith.mulf %43, %42 : vector<32x256xf32>
    %cst_20 = arith.constant -1.45315206 : f32
    %45 = vector.broadcast %cst_20 : f32 to vector<32x256xf32>
    %46 = arith.addf %44, %45 : vector<32x256xf32>
    %47 = arith.mulf %46, %42 : vector<32x256xf32>
    %cst_21 = arith.constant 1.42141378 : f32
    %48 = vector.broadcast %cst_21 : f32 to vector<32x256xf32>
    %49 = arith.addf %47, %48 : vector<32x256xf32>
    %50 = arith.mulf %49, %42 : vector<32x256xf32>
    %cst_22 = arith.constant -0.284496725 : f32
    %51 = vector.broadcast %cst_22 : f32 to vector<32x256xf32>
    %52 = arith.addf %50, %51 : vector<32x256xf32>
    %53 = arith.mulf %52, %42 : vector<32x256xf32>
    %cst_23 = arith.constant 0.254829586 : f32
    %54 = vector.broadcast %cst_23 : f32 to vector<32x256xf32>
    %55 = arith.addf %53, %54 : vector<32x256xf32>
    %56 = arith.mulf %55, %42 : vector<32x256xf32>
    %cst_24 = arith.constant 0.000000e+00 : f32
    %57 = vector.broadcast %cst_24 : f32 to vector<32x256xf32>
    %58 = arith.subf %57, %36 : vector<32x256xf32>
    %59 = arith.mulf %58, %36 : vector<32x256xf32>
    %60 = math.exp %59 : vector<32x256xf32>
    %61 = arith.mulf %56, %60 : vector<32x256xf32>
    %cst_25 = arith.constant 1.000000e+00 : f32
    %62 = vector.broadcast %cst_25 : f32 to vector<32x256xf32>
    %63 = arith.subf %62, %61 : vector<32x256xf32>
    %cst_26 = arith.constant 0.000000e+00 : f32
    %64 = vector.broadcast %cst_26 : f32 to vector<32x256xf32>
    %65 = arith.cmpf oge, %35, %64 : vector<32x256xf32>
    %cst_27 = arith.constant 0.000000e+00 : f32
    %66 = vector.broadcast %cst_27 : f32 to vector<32x256xf32>
    %67 = arith.subf %66, %63 : vector<32x256xf32>
    %68 = arith.select %65, %63, %67 : vector<32x256xi1>, vector<32x256xf32>
    %cst_28 = arith.constant 1.000000e+00 : f32
    %69 = vector.broadcast %cst_28 : f32 to vector<32x256xf32>
    %70 = arith.addf %69, %68 : vector<32x256xf32>
    %71 = arith.mulf %33, %70 : vector<32x256xf32>
    %72 = arith.truncf %71 : vector<32x256xf32> to vector<32x256xbf16>
    %c0_29 = arith.constant 0 : index
    %c0_30 = arith.constant 0 : index
    %73 = vector.load %arg7[%c0_29, %c0_30] : memref<32x256xbf16, #tpu.memory_space<vmem>>, vector<32x256xbf16>
    tpu.vector_store %arg7[%c0_29, %c0_30], %72 {strides = array<i32>} : memref<32x256xbf16, #tpu.memory_space<vmem>>, vector<32x256xbf16>,
    return
  }
  func.func @transform_0(%arg0: i32, %arg1: i32) -> (i32, i32) {
    %c0_i32 = arith.constant 0 : i32
    %c0_i32_0 = arith.constant 0 : i32
    return %arg0, %c0_i32 : i32, i32
  }
  func.func @transform_1(%arg0: i32, %arg1: i32) -> (i32, i32) {
    %c0_i32 = arith.constant 0 : i32
    %c0_i32_0 = arith.constant 0 : i32
    return %c0_i32, %arg1 : i32, i32
  }
  func.func @transform_2(%arg0: i32, %arg1: i32) -> (i32, i32) {
    %c0_i32 = arith.constant 0 : i32
    %c0_i32_0 = arith.constant 0 : i32
    %c0_i32_1 = arith.constant 0 : i32
    return %c0_i32, %c0_i32_0 : i32, i32
  }
  func.func @transform_3(%arg0: i32, %arg1: i32) -> (i32, i32) {
    %c0_i32 = arith.constant 0 : i32
    %c0_i32_0 = arith.constant 0 : i32
    %c0_i32_1 = arith.constant 0 : i32
    return %c0_i32, %c0_i32_0 : i32, i32
  }
  func.func @transform_4(%arg0: i32, %arg1: i32) -> (i32, i32) {
    %c0_i32 = arith.constant 0 : i32
    %c0_i32_0 = arith.constant 0 : i32
    return %c0_i32, %arg1 : i32, i32
  }
  func.func @transform_5(%arg0: i32, %arg1: i32) -> (i32, i32) {
    %c0_i32 = arith.constant 0 : i32
    return %arg0, %arg1 : i32, i32
  }
}

module attributes {stable_mosaic.version = 11 : i64} {
  func.func @_fused_linear_kernel(%arg0: i32, %arg1: i32, %arg2: memref<2x128xbf16, #tpu.memory_space<vmem>>, %arg3: memref<128x10xbf16, #tpu.memory_space<vmem>>, %arg4: memref<1x128xf32, #tpu.memory_space<vmem>>, %arg5: memref<1x128xf32, #tpu.memory_space<vmem>>, %arg6: memref<1x10xf32, #tpu.memory_space<vmem>>, %arg7: memref<2x10xf32, #tpu.memory_space<vmem>>) attributes {dimension_semantics = [#tpu.dimension_semantics<parallel>, #tpu.dimension_semantics<parallel>], iteration_bounds = array<i64: 1, 1>, scalar_prefetch = 0 : i64, scratch_operands = 0 : i64, tpu.core_type = #tpu.core_type<tc>, window_params = [{transform_indices = @transform_0, window_bounds = array<i64: 2, 128>}, {transform_indices = @transform_1, window_bounds = array<i64: 128, 10>}, {pipeline_mode = #tpu.pipeline_mode<synchronous>, transform_indices = @transform_2, window_bounds = array<i64: 1, 128>}, {pipeline_mode = #tpu.pipeline_mode<synchronous>, transform_indices = @transform_3, window_bounds = array<i64: 1, 128>}, {transform_indices = @transform_4, window_bounds = array<i64: 1, 10>}, {transform_indices = @transform_5, window_bounds = array<i64: 2, 10>}]} {
    %c0 = arith.constant 0 : index
    %c0_0 = arith.constant 0 : index
    %0 = vector.load %arg2[%c0, %c0_0] : memref<2x128xbf16, #tpu.memory_space<vmem>>, vector<2x128xbf16>
    %1 = arith.extf %0 : vector<2x128xbf16> to vector<2x128xf32>
    %c0_1 = arith.constant 0 : index
    %c0_2 = arith.constant 0 : index
    %2 = vector.load %arg4[%c0_1, %c0_2] : memref<1x128xf32, #tpu.memory_space<vmem>>, vector<1x128xf32>
    %c0_3 = arith.constant 0 : index
    %c0_4 = arith.constant 0 : index
    %3 = vector.load %arg5[%c0_3, %c0_4] : memref<1x128xf32, #tpu.memory_space<vmem>>, vector<1x128xf32>
    %cst = arith.constant dense<0.000000e+00> : vector<2xf32>
    %4 = vector.multi_reduction <add>, %1, %cst [1] : vector<2x128xf32> to vector<2xf32>
    %5 = vector.shape_cast %4 : vector<2xf32> to vector<2x1xf32>
    %cst_5 = arith.constant 1.280000e+02 : f32
    %6 = vector.broadcast %cst_5 : f32 to vector<2x1xf32>
    %7 = arith.divf %5, %6 : vector<2x1xf32>
    %8 = vector.broadcast %7 : vector<2x1xf32> to vector<2x128xf32>
    %9 = arith.subf %1, %8 : vector<2x128xf32>
    %10 = arith.mulf %9, %9 : vector<2x128xf32>
    %cst_6 = arith.constant dense<0.000000e+00> : vector<2xf32>
    %11 = vector.multi_reduction <add>, %10, %cst_6 [1] : vector<2x128xf32> to vector<2xf32>
    %12 = vector.shape_cast %11 : vector<2xf32> to vector<2x1xf32>
    %cst_7 = arith.constant 1.280000e+02 : f32
    %13 = vector.broadcast %cst_7 : f32 to vector<2x1xf32>
    %14 = arith.divf %12, %13 : vector<2x1xf32>
    %15 = vector.broadcast %7 : vector<2x1xf32> to vector<2x128xf32>
    %16 = arith.subf %1, %15 : vector<2x128xf32>
    %cst_8 = arith.constant 9.99999974E-6 : f32
    %17 = vector.broadcast %cst_8 : f32 to vector<2x1xf32>
    %18 = arith.addf %14, %17 : vector<2x1xf32>
    %19 = math.rsqrt %18 : vector<2x1xf32>
    %20 = vector.broadcast %19 : vector<2x1xf32> to vector<2x128xf32>
    %21 = arith.mulf %16, %20 : vector<2x128xf32>
    %22 = vector.broadcast %2 : vector<1x128xf32> to vector<2x128xf32>
    %23 = arith.mulf %21, %22 : vector<2x128xf32>
    %24 = vector.broadcast %3 : vector<1x128xf32> to vector<2x128xf32>
    %25 = arith.addf %23, %24 : vector<2x128xf32>
    %26 = arith.truncf %25 : vector<2x128xf32> to vector<2x128xbf16>
    %c0_9 = arith.constant 0 : index
    %c0_10 = arith.constant 0 : index
    %27 = vector.load %arg3[%c0_9, %c0_10] : memref<128x10xbf16, #tpu.memory_space<vmem>>, vector<128x10xbf16>
    %cst_11 = arith.constant dense<0.000000e+00> : vector<2x10xf32>
    %28 = tpu.matmul %26, %27, %cst_11 {dimension_numbers = #tpu.dot_dimension_numbers<[1], [0], [0], [1], [0, 0, 1, 1], [], []>} : vector<2x128xbf16>, vector<128x10xbf16>, vector<2x10xf32> -> vector<2x10xf32>
    %c0_12 = arith.constant 0 : index
    %c0_13 = arith.constant 0 : index
    %29 = vector.load %arg6[%c0_12, %c0_13] : memref<1x10xf32, #tpu.memory_space<vmem>>, vector<1x10xf32>
    %30 = vector.broadcast %29 : vector<1x10xf32> to vector<2x10xf32>
    %31 = arith.addf %28, %30 : vector<2x10xf32>
    %c0_14 = arith.constant 0 : index
    %c0_15 = arith.constant 0 : index
    %32 = vector.load %arg7[%c0_14, %c0_15] : memref<2x10xf32, #tpu.memory_space<vmem>>, vector<2x10xf32>
    tpu.vector_store %arg7[%c0_14, %c0_15], %31 {strides = array<i32>} : memref<2x10xf32, #tpu.memory_space<vmem>>, vector<2x10xf32>,
    return
  }
  func.func @transform_0(%arg0: i32, %arg1: i32) -> (i32, i32) {
    %c0_i32 = arith.constant 0 : i32
    %c0_i32_0 = arith.constant 0 : i32
    return %arg0, %c0_i32 : i32, i32
  }
  func.func @transform_1(%arg0: i32, %arg1: i32) -> (i32, i32) {
    %c0_i32 = arith.constant 0 : i32
    %c0_i32_0 = arith.constant 0 : i32
    return %c0_i32, %arg1 : i32, i32
  }
  func.func @transform_2(%arg0: i32, %arg1: i32) -> (i32, i32) {
    %c0_i32 = arith.constant 0 : i32
    %c0_i32_0 = arith.constant 0 : i32
    %c0_i32_1 = arith.constant 0 : i32
    return %c0_i32, %c0_i32_0 : i32, i32
  }
  func.func @transform_3(%arg0: i32, %arg1: i32) -> (i32, i32) {
    %c0_i32 = arith.constant 0 : i32
    %c0_i32_0 = arith.constant 0 : i32
    %c0_i32_1 = arith.constant 0 : i32
    return %c0_i32, %c0_i32_0 : i32, i32
  }
  func.func @transform_4(%arg0: i32, %arg1: i32) -> (i32, i32) {
    %c0_i32 = arith.constant 0 : i32
    %c0_i32_0 = arith.constant 0 : i32
    return %c0_i32, %arg1 : i32, i32
  }
  func.func @transform_5(%arg0: i32, %arg1: i32) -> (i32, i32) {
    %c0_i32 = arith.constant 0 : i32
    return %arg0, %arg1 : i32, i32
  }
}

</mosaic_0001>

<llo_original>
// kernel: vit_custom_forward.14
$region0: #{vit_custom_forward.14}
  #allocation0 [shape = 'u32[]', space=smem, size = 0x4, offset = 0x4, fixed_abs, tag = 'smem constant byte address 0x4 - core index']
  #allocation1 [shape = 'u32[144,128]{1,0:T(1,128)}', space=vmem, size = 0x12000, scoped, tag = 'internal scratch']
  %s0 = inlined_call_operand.vmem [shape: bf16[2,12,128], index: 0, kind: input, shape index: {}]
  %s1 = inlined_call_operand.vmem [shape: f32[1,1,128], index: 1, kind: input, shape index: {}]
  %s2 = inlined_call_operand.vmem [shape: f32[1,13,128], index: 2, kind: input, shape index: {}]
  %s3 = inlined_call_operand.vmem [shape: bf16[2,16,128], index: 3, kind: output, shape index: {}]
  %s4 = sld [smem:[#allocation0]]
  $region45: #{vit_custom_forward.14} parent=0
    _
  %s6 = ssub.s32 1, %s4
  %s7 = scalar_select 0, %s6, %s4
  loop: start=0, step=1, limit=4
  $region2: #{vit_custom_forward.14} parent=0 // loop_pre_header
    _
  $region3: #{vit_custom_forward.14} parent=0 // loop_header
    %s9 = sphi 0, %s13
    %p10 = scmp.ge.s32.totalorder %s9, 4
    %s19 = sphi 0, %s21
    %s22 = sphi 0, %s19
    %s23 = sphi 0, %s22
    %s39 = sphi 0, %s23
    %s43 = sphi 0, %s43
    %s45 = sphi 0, %s43
    %s46 = sphi 0, %s45
    %s60 = sphi 0, %s46
    %s64 = sphi 0, %s64
    %s66 = sphi 0, %s64
    %s67 = sphi 0, %s66
    %s81 = sphi 0, %s67
    %s87 = sphi 0, %s89
    %s90 = sphi 0, %s87
    %s91 = sphi 0, %s90
    %s107 = sphi 0, %s91
  $region4: #{vit_custom_forward.14} parent=0 // loop_header_branch
    %12 = sbr.rel (%p10) target = $region8
  $region5: #{vit_custom_forward.14} parent=0 // loop_body
    %s14 = ssub.s32 %s9, 1
    %s15 = ssub.s32 %s9, 2
    %s16 = sadd.s32 %s9, 1
    %s17 = ssub.s32 %s9, %s16
    %p18 = scmp.eq.s32.totalorder %s17, 0
    %s20 = sadd.s32 %s19, 1
    %s21 = scalar_select %p18, %s19, %s20
    %p24 = pneg %p18
    %p25 = scmp.eq.s32.totalorder %s9, 1
    %p26 = por %p24, %p25
    %p27 = scmp.ne.s32.totalorder %s19, %s22
    %p28 = scmp.eq.s32.totalorder %s9, 0
    %p29 = por %p27, %p28
    %p30 = scmp.ne.s32.totalorder %s19, %s22
    %p31 = scmp.eq.s32.totalorder %s14, 1
    %p32 = por %p30, %p31
    %p33 = scmp.ne.s32.totalorder %s22, %s23
    %p34 = scmp.eq.s32.totalorder %s14, 0
    %p35 = por %p33, %p34
    %p36 = scmp.ne.s32.totalorder %s22, %s23
    %p37 = scmp.eq.s32.totalorder %s15, 1
    %p38 = por %p36, %p37
    %p40 = scmp.ne.s32.totalorder %s23, %s39
    %p41 = scmp.eq.s32.totalorder %s15, 0
    %p42 = por %p40, %p41
    %s44 = sadd.s32 %s43, 1
    %p47 = scmp.eq.s32.totalorder %s9, 1
    %p48 = scmp.ne.s32.totalorder %s43, %s45
    %p49 = scmp.eq.s32.totalorder %s9, 0
    %p50 = por %p48, %p49
    %p51 = scmp.ne.s32.totalorder %s43, %s45
    %p52 = scmp.eq.s32.totalorder %s14, 1
    %p53 = por %p51, %p52
    %p54 = scmp.ne.s32.totalorder %s45, %s46
    %p55 = scmp.eq.s32.totalorder %s14, 0
    %p56 = por %p54, %p55
    %p57 = scmp.ne.s32.totalorder %s45, %s46
    %p58 = scmp.eq.s32.totalorder %s15, 1
    %p59 = por %p57, %p58
    %p61 = scmp.ne.s32.totalorder %s46, %s60
    %p62 = scmp.eq.s32.totalorder %s15, 0
    %p63 = por %p61, %p62
    %s65 = sadd.s32 %s64, 1
    %p68 = scmp.eq.s32.totalorder %s9, 1
    %p69 = scmp.ne.s32.totalorder %s64, %s66
    %p70 = scmp.eq.s32.totalorder %s9, 0
    %p71 = por %p69, %p70
    %p72 = scmp.ne.s32.totalorder %s64, %s66
    %p73 = scmp.eq.s32.totalorder %s14, 1
    %p74 = por %p72, %p73
    %p75 = scmp.ne.s32.totalorder %s66, %s67
    %p76 = scmp.eq.s32.totalorder %s14, 0
    %p77 = por %p75, %p76
    %p78 = scmp.ne.s32.totalorder %s66, %s67
    %p79 = scmp.eq.s32.totalorder %s15, 1
    %p80 = por %p78, %p79
    %p82 = scmp.ne.s32.totalorder %s67, %s81
    %p83 = scmp.eq.s32.totalorder %s15, 0
    %p84 = por %p82, %p83
    %s85 = ssub.s32 %s9, %s16
    %p86 = scmp.eq.s32.totalorder %s85, 0
    %s88 = sadd.s32 %s87, 1
    %s89 = scalar_select %p86, %s87, %s88
    %p92 = pneg %p86
    %p93 = scmp.eq.s32.totalorder %s9, 1
    %p94 = por %p92, %p93
    %p95 = scmp.ne.s32.totalorder %s87, %s90
    %p96 = scmp.eq.s32.totalorder %s9, 0
    %p97 = por %p95, %p96
    %p98 = scmp.ne.s32.totalorder %s87, %s90
    %p99 = scmp.eq.s32.totalorder %s14, 1
    %p100 = por %p98, %p99
    %p101 = scmp.ne.s32.totalorder %s90, %s91
    %p102 = scmp.eq.s32.totalorder %s14, 0
    %p103 = por %p101, %p102
    %p104 = scmp.ne.s32.totalorder %s90, %s91
    %p105 = scmp.eq.s32.totalorder %s15, 1
    %p106 = por %p104, %p105
    %p108 = scmp.ne.s32.totalorder %s91, %s107
    %p109 = scmp.eq.s32.totalorder %s15, 0
    %p110 = por %p108, %p109
    %p111 = scmp.le.s32.totalorder 1, %s9
    %p112 = scmp.lt.s32.totalorder %s9, 3
    %p113 = pnand %p111, %p112
    %p114 = pneg %p113
    // Predicated region
    $region9: #{vit_custom_forward.14} parent=5 // pred_check
      _
    $region10: #{vit_custom_forward.14} parent=5 // pred_check_branch
      %116 = sbr.rel (%p113) target = $region12
    $region11: #{vit_custom_forward.14} parent=5 // pred_region
      %s117 = ssub.s32 %s9, 1
      // Predicated region
      $region13: #{vit_custom_forward.14} parent=11 // pred_check
        %p118 = pneg %p56
      $region14: #{vit_custom_forward.14} parent=11 // pred_check_branch
        %120 = sbr.rel (%p118) target = $region16
      $region15: #{vit_custom_forward.14} parent=11 // pred_region
        _
      $region16: #{vit_custom_forward.14} parent=11 // pred_fallthru
        _
      // Predicated region
      $region17: #{vit_custom_forward.14} parent=11 // pred_check
        %p121 = pneg %p77
      $region18: #{vit_custom_forward.14} parent=11 // pred_check_branch
        %123 = sbr.rel (%p121) target = $region20
      $region19: #{vit_custom_forward.14} parent=11 // pred_region
        _
      $region20: #{vit_custom_forward.14} parent=11 // pred_fallthru
        _
    $region12: #{vit_custom_forward.14} parent=5 // pred_fallthru
      _
    %p124 = scmp.lt.s32.totalorder %s9, 2
    // Predicated region
    $region21: #{vit_custom_forward.14} parent=5 // pred_check
      %p125 = pneg %p124
    $region22: #{vit_custom_forward.14} parent=5 // pred_check_branch
      %127 = sbr.rel (%p125) target = $region24
    $region23: #{vit_custom_forward.14} parent=5 // pred_region
      // Predicated region
      $region25: #{vit_custom_forward.14} parent=23 // pred_check
        %p128 = pneg %p29
      $region26: #{vit_custom_forward.14} parent=23 // pred_check_branch
        %130 = sbr.rel (%p128) target = $region28
      $region27: #{vit_custom_forward.14} parent=23 // pred_region
        %p131 = scmp.lt.s32.totalorder %s9, 1
        %s132 = scalar_select %p131, %s9, 1
        %s133 = smul.addr %s132, 2
        %s134 = smul.addr %s133, 4
        %s135 = scalar_lea.vmem %s0, %s134
      $region28: #{vit_custom_forward.14} parent=23 // pred_fallthru
        _
    $region24: #{vit_custom_forward.14} parent=5 // pred_fallthru
      _
    %p136 = scmp.le.s32.totalorder 1, %s9
    %p137 = scmp.lt.s32.totalorder %s9, 3
    %p138 = pnand %p136, %p137
    %p139 = pneg %p138
    // Predicated region
    $region29: #{vit_custom_forward.14} parent=5 // pred_check
      _
    $region30: #{vit_custom_forward.14} parent=5 // pred_check_branch
      %141 = sbr.rel (%p138) target = $region32
    $region31: #{vit_custom_forward.14} parent=5 // pred_region
      %s142 = ssub.s32 %s9, 1
      %p143 = scmp.lt.s32.totalorder %s14, 1
      %s144 = scalar_select %p143, %s14, 1
      %s145 = smul.addr %s144, 2
      %s146 = smul.addr %s145, 4
      %s147 = scalar_lea.vmem %s0, %s146
      %p148 = pneg %p35
      %p149 = pneg %p32
      %p150 = pneg %p56
      %p151 = pneg %p53
      %p152 = pneg %p77
      %p153 = pneg %p74
      %p154 = pneg %p103
      %p155 = pneg %p100
      %p156 = scmp.lt.s32.totalorder %s14, 1
      %s157 = scalar_select %p156, %s14, 1
      %s158 = smul.addr %s157, 2
      %s159 = smul.addr %s158, 4
      %s160 = scalar_lea.vmem %s3, %s159
      %p161 = scmp.lt.s32.totalorder %s14, 1
      %s162 = scalar_select %p161, %s14, 1
      %s163 = smul.addr %s162, 2
      %s164 = smul.addr %s163, 4
      %s165 = scalar_lea.vmem %s0, %s164
      %p166 = scmp.lt.s32.totalorder %s14, 1
      %s167 = scalar_select %p166, %s14, 1
      %s168 = smul.addr %s167, 2
      %s169 = smul.addr %s168, 4
      %s170 = scalar_lea.vmem %s3, %s169
      %v172 = vld [vmem:[%s1] sm:$0x1]
      %v173 = vld [vmem:[%s2] sm:$0x1]
      %v174 = vadd.f32 %v172, %v173
      %v175 = vpack.c.bf16 %v174, %v174
      %vm176 = vcmask 1040384
      %vm177 = vsmask.f32 256
      %vm178 = vmand %vm176, %vm177
      %v179 = vld [vmem:[%s170] sm:$0x1]
      %v180 = vsel %vm178, %v175, %v179
      %181 = vst [vmem:[%s170] sm:$0x1] %v180
      %v182 = vld [vmem:[%s165] sm:$0xf]
      %v183 = vld [vmem:[%s165 + $0x4] sm:$0x3]
      %v184 = vunpack.c.l.bf16 %v182
      %v185 = vunpack.c.l.bf16 %v183
      %v186 = vld [vmem:[%s2 + $0x1] sm:$0xff]
      %v187 = vld [vmem:[%s2 + $0x9] sm:$0xf]
      %v188 = vadd.f32 %v184, %v186
      %v189 = vadd.f32 %v185, %v187
      %v190 = vpack.c.bf16 %v189, %v188
      %v192 = vunpack.c.l.b16 %v190
      %v193 = vunpack.c.h.b16 %v190
      %v194 = vpack.c.b16 %v192, %v192
      %v195 = vpack.c.b16 %v193, %v193
      %vm196 = vsmask.f32 4368
      %vm197 = vmor %vm177, %vm196
      %v199 = vshrl.u32 %v194, 16
      %v201 = vrot.slane %v199, 7
      %v202 = vshll.u32 %v194, 16
      %v204 = vor.u32 %v201, %v202
      %v205 = vrot.slane %v201, 4
      %v207 = vshrl.u32 %v195, 16
      %v209 = vrot.slane %v207, 7
      %v210 = vshll.u32 %v195, 16
      %v212 = vor.u32 %v209, %v210
      %v213 = vsel %vm197, %v205, %v212
      %vm216 = vcmask 1043456
      %vm217 = vsmask.f32 7938
      %vm218 = vmand %vm216, %vm217
      %v219 = vld [vmem:[%s170] sm:$0xf]
      %v220 = vsel %vm218, %v204, %v219
      %221 = vst [vmem:[%s170] sm:$0xf] %v220
      %vm222 = vcmask 1042432
      %vm223 = vsmask.f32 2304
      %vm224 = vmand %vm222, %vm223
      %v225 = vld [vmem:[%s170 + $0x4] sm:$0x7]
      %v226 = vsel %vm224, %v213, %v225
      %227 = vst [vmem:[%s170 + $0x4] sm:$0x7] %v226
      %vm228 = vcmask 1043458
      %vm229 = vsmask.f32 7946
      %vm230 = vmand %vm228, %vm229
      %v231 = vld [vmem:[%s170 + $0x4] sm:$0xc]
      %v232 = vsel %vm230, 0, %v231
      %233 = vst [vmem:[%s170 + $0x4] sm:$0xc] %v232
      %p234 = scmp.lt.s32.totalorder %s14, 1
      %s235 = scalar_select %p234, %s14, 1
      %s236 = smul.addr %s235, 2
      %s237 = smul.addr %s236, 4
      %s238 = scalar_lea.vmem %s3, %s237
      // Predicated region
      $region33: #{vit_custom_forward.14} parent=31 // pred_check
        %p239 = pneg %p100
      $region34: #{vit_custom_forward.14} parent=31 // pred_check_branch
        %241 = sbr.rel (%p239) target = $region36
      $region35: #{vit_custom_forward.14} parent=31 // pred_region
        _
      $region36: #{vit_custom_forward.14} parent=31 // pred_fallthru
        _
    $region32: #{vit_custom_forward.14} parent=5 // pred_fallthru
      _
    %p242 = scmp.le.s32.totalorder 2, %s9
    // Predicated region
    $region37: #{vit_custom_forward.14} parent=5 // pred_check
      %p243 = pneg %p242
    $region38: #{vit_custom_forward.14} parent=5 // pred_check_branch
      %245 = sbr.rel (%p243) target = $region40
    $region39: #{vit_custom_forward.14} parent=5 // pred_region
      %s246 = ssub.s32 %s9, 2
      // Predicated region
      $region41: #{vit_custom_forward.14} parent=39 // pred_check
        %p247 = pneg %p106
      $region42: #{vit_custom_forward.14} parent=39 // pred_check_branch
        %249 = sbr.rel (%p247) target = $region44
      $region43: #{vit_custom_forward.14} parent=39 // pred_region
        %p250 = scmp.lt.s32.totalorder %s15, 1
        %s251 = scalar_select %p250, %s15, 1
        %s252 = smul.addr %s251, 2
        %s253 = smul.addr %s252, 4
        %s254 = scalar_lea.vmem %s3, %s253
      $region44: #{vit_custom_forward.14} parent=39 // pred_fallthru
        _
    $region40: #{vit_custom_forward.14} parent=5 // pred_fallthru
      _
  $region6: #{vit_custom_forward.14} parent=0 // loop_footer
    %s13 = sadd.s32 1, %s9
  $region7: #{vit_custom_forward.14} parent=0 // loop_footer_branch
    %8 = sbr.rel target = $region3
  $region8: #{vit_custom_forward.14} parent=0 // loop_exit
    _

// kernel: vit_custom_forward.13
$region0: #{vit_custom_forward.13}
  #allocation0 [shape = 'u32[]', space=smem, size = 0x4, offset = 0x4, fixed_abs, tag = 'smem constant byte address 0x4 - core index']
  #allocation1 [shape = 'u32[144,128]{1,0:T(1,128)}', space=vmem, size = 0x12000, scoped, tag = 'internal scratch']
  %s0 = inlined_call_operand.vmem [shape: bf16[24,64], index: 0, kind: input, shape index: {}]
  %s1 = inlined_call_operand.vmem [shape: bf16[64,128], index: 1, kind: input, shape index: {}]
  %s2 = inlined_call_operand.vmem [shape: f32[1,64], index: 2, kind: input, shape index: {}]
  %s3 = inlined_call_operand.vmem [shape: f32[1,64], index: 3, kind: input, shape index: {}]
  %s4 = inlined_call_operand.vmem [shape: f32[1,128], index: 4, kind: input, shape index: {}]
  %s5 = inlined_call_operand.vmem [shape: f32[1,128], index: 5, kind: input, shape index: {}]
  %s6 = inlined_call_operand.vmem [shape: f32[1,128], index: 6, kind: input, shape index: {}]
  %s7 = inlined_call_operand.vmem [shape: bf16[24,128], index: 7, kind: output, shape index: {}]
  %s8 = sld [smem:[#allocation0]]
  $region38: #{vit_custom_forward.13} parent=0
    _
  %s10 = ssub.s32 1, %s8
  %s11 = scalar_select 0, %s10, %s8
  // Predicated region
  $region2: #{vit_custom_forward.13} parent=0 // pred_check
    _
  $region3: #{vit_custom_forward.13} parent=0 // pred_check_branch
    %13 = sbr.rel (0) target = $region5
  $region4: #{vit_custom_forward.13} parent=0 // pred_region
    _
  $region5: #{vit_custom_forward.13} parent=0 // pred_fallthru
    _
  // Predicated region
  $region6: #{vit_custom_forward.13} parent=0 // pred_check
    _
  $region7: #{vit_custom_forward.13} parent=0 // pred_check_branch
    %15 = sbr.rel (0) target = $region9
  $region8: #{vit_custom_forward.13} parent=0 // pred_region
    _
  $region9: #{vit_custom_forward.13} parent=0 // pred_fallthru
    _
  // Predicated region
  $region10: #{vit_custom_forward.13} parent=0 // pred_check
    _
  $region11: #{vit_custom_forward.13} parent=0 // pred_check_branch
    %17 = sbr.rel (0) target = $region13
  $region12: #{vit_custom_forward.13} parent=0 // pred_region
    _
  $region13: #{vit_custom_forward.13} parent=0 // pred_fallthru
    _
  // Predicated region
  $region14: #{vit_custom_forward.13} parent=0 // pred_check
    _
  $region15: #{vit_custom_forward.13} parent=0 // pred_check_branch
    %19 = sbr.rel (0) target = $region17
  $region16: #{vit_custom_forward.13} parent=0 // pred_region
    _
  $region17: #{vit_custom_forward.13} parent=0 // pred_fallthru
    _
  // Predicated region
  $region18: #{vit_custom_forward.13} parent=0 // pred_check
    _
  $region19: #{vit_custom_forward.13} parent=0 // pred_check_branch
    %21 = sbr.rel (0) target = $region21
  $region20: #{vit_custom_forward.13} parent=0 // pred_region
    _
  $region21: #{vit_custom_forward.13} parent=0 // pred_fallthru
    _
  // Predicated region
  $region22: #{vit_custom_forward.13} parent=0 // pred_check
    _
  $region23: #{vit_custom_forward.13} parent=0 // pred_check_branch
    %23 = sbr.rel (0) target = $region25
  $region24: #{vit_custom_forward.13} parent=0 // pred_region
    _
  $region25: #{vit_custom_forward.13} parent=0 // pred_fallthru
    _
  // Predicated region
  $region26: #{vit_custom_forward.13} parent=0 // pred_check
    _
  $region27: #{vit_custom_forward.13} parent=0 // pred_check_branch
    %25 = sbr.rel (0) target = $region29
  $region28: #{vit_custom_forward.13} parent=0 // pred_region
    _
  $region29: #{vit_custom_forward.13} parent=0 // pred_fallthru
    _
  %v27 = vld [vmem:[%s0] sm:$0xf]
  %v28 = vld [vmem:[%s0 + $0x4] sm:$0xf]
  %v29 = vld [vmem:[%s0 + $0x8] sm:$0xf]
  %v30 = vunpack.c.l.bf16 %v27
  %v31 = vunpack.c.l.bf16 %v28
  %v32 = vunpack.c.l.bf16 %v29
  %v33 = vld [vmem:[%s2] sm:$0x1]
  %v34 = vld [vmem:[%s3] sm:$0x1]
  %vm35 = vcmask 523264
  %v36 = vsel %vm35, %v30, 0.0
  %37 = vadd.xlane.f32.xlu0 %v36
  %v38 = vpop.xlane.xlu0 %37
  %v39 = vsel %vm35, %v31, 0.0
  %40 = vadd.xlane.f32.xlu0 %v39
  %v41 = vpop.xlane.xlu0 %40
  %v42 = vsel %vm35, %v32, 0.0
  %43 = vadd.xlane.f32.xlu0 %v42
  %v44 = vpop.xlane.xlu0 %43
  %v45 = vrcp.pop 64.0
  %v46 = vmul.f32 %v38, %v45
  %v47 = vmul.f32 %v41, %v45
  %v48 = vmul.f32 %v44, %v45
  %v49 = vsub.f32 %v30, %v46
  %v50 = vsub.f32 %v31, %v47
  %v51 = vsub.f32 %v32, %v48
  %v52 = vmul.f32 %v49, %v49
  %v53 = vmul.f32 %v50, %v50
  %v54 = vmul.f32 %v51, %v51
  %v55 = vsel %vm35, %v52, 0.0
  %56 = vadd.xlane.f32.xlu0 %v55
  %v57 = vpop.xlane.xlu0 %56
  %v58 = vsel %vm35, %v53, 0.0
  %59 = vadd.xlane.f32.xlu0 %v58
  %v60 = vpop.xlane.xlu0 %59
  %v61 = vsel %vm35, %v54, 0.0
  %62 = vadd.xlane.f32.xlu0 %v61
  %v63 = vpop.xlane.xlu0 %62
  %v64 = vmul.f32 %v57, %v45
  %v65 = vmul.f32 %v60, %v45
  %v66 = vmul.f32 %v63, %v45
  %v67 = vadd.f32 %v64, 1e-05
  %v68 = vadd.f32 %v65, 1e-05
  %v69 = vadd.f32 %v66, 1e-05
  %v70 = vrsqrt.pop %v67
  %v71 = vrsqrt.pop %v68
  %v72 = vrsqrt.pop %v69
  %v73 = vmul.f32 %v49, %v70
  %v74 = vmul.f32 %v50, %v71
  %v75 = vmul.f32 %v51, %v72
  %v77 = vlaneseq
  %v78 = vshrl.u32 %v77, 7
  %v79 = vsub.s32 0, %v78
  %v80 = vrot.slane %v33, %v79
  %v82 = vmul.f32 %v73, %v80
  %v83 = vmul.f32 %v74, %v80
  %v84 = vmul.f32 %v75, %v80
  %v86 = vlaneseq
  %v87 = vshrl.u32 %v86, 7
  %v88 = vsub.s32 0, %v87
  %v89 = vrot.slane %v34, %v88
  %v91 = vadd.f32 %v82, %v89
  %v92 = vadd.f32 %v83, %v89
  %v93 = vadd.f32 %v84, %v89
  %v94 = vpack.c.bf16 %v92, %v91
  %v95 = vpack.c.bf16 %v93, %v93
  %v96 = vld [vmem:[%s1] sm:$0xf]
  %v97 = vld [vmem:[%s1 + $0x4] sm:$0xf]
  %v98 = vld [vmem:[%s1 + $0x8] sm:$0xf]
  %v99 = vld [vmem:[%s1 + $0xc] sm:$0xf]
  %v100 = vld [vmem:[%s1 + $0x10] sm:$0xf]
  %v101 = vld [vmem:[%s1 + $0x14] sm:$0xf]
  %v102 = vld [vmem:[%s1 + $0x18] sm:$0xf]
  %v103 = vld [vmem:[%s1 + $0x1c] sm:$0xf]
  %v104 = vld [vmem:[%s4] sm:$0x1]
  %v106 = vlaneseq
  %v107 = vshrl.u32 %v106, 7
  %v108 = vsub.s32 0, %v107
  %v109 = vrot.slane %v104, %v108
  %v119 = vunpack.c.l.b16 %v96
  %v120 = vunpack.c.l.b16 %v97
  %v121 = vunpack.c.l.b16 %v98
  %v122 = vunpack.c.l.b16 %v99
  %v123 = vunpack.c.l.b16 %v100
  %v124 = vunpack.c.l.b16 %v101
  %v125 = vunpack.c.l.b16 %v102
  %v126 = vunpack.c.l.b16 %v103
  %v127 = vpack.c.b16 %v120, %v119
  %v128 = vpack.c.b16 %v122, %v121
  %v129 = vpack.c.b16 %v124, %v123
  %v130 = vpack.c.b16 %v126, %v125
  %v136 = vsel %vm35, %v94, 0
  %v139 = vsel %vm35, %v95, 0
  %141 = vmatprep.subr.bf16.mxu0 0
  %142 = vmatpush1.bf16.msra.mxu0 %v127
  %143 = vmatprep.subr.bf16.mxu0 0
  %144 = vmatpush1.bf16.msra.mxu0 %v128
  %145 = vmatprep.subr.bf16.mxu0 0
  %146 = vmatpush1.bf16.msra.mxu0 %v129
  %147 = vmatprep.subr.bf16.mxu0 0
  %148 = vmatpush1.bf16.msra.mxu0 %v130
  %149 = vmatprep.subr.bf16.mxu0 0
  %150 = vmatpush1.bf16.msra.mxu0 0
  %151 = vmatprep.subr.bf16.mxu0 0
  %152 = vmatpush1.bf16.msra.mxu0 0
  %153 = vmatprep.subr.bf16.mxu0 0
  %154 = vmatpush1.bf16.msra.mxu0 0
  %155 = vmatprep.subr.bf16.mxu0 0
  %156 = vmatpush1.bf16.msra.mxu0 0
  %157 = vmatprep.subr.bf16.mxu0 0
  %158 = vmatpush1.bf16.msra.mxu0 0
  %159 = vmatprep.subr.bf16.mxu0 0
  %160 = vmatpush1.bf16.msra.mxu0 0
  %161 = vmatprep.subr.bf16.mxu0 0
  %162 = vmatpush1.bf16.msra.mxu0 0
  %163 = vmatprep.subr.bf16.mxu0 0
  %164 = vmatpush1.bf16.msra.mxu0 0
  %165 = vmatprep.subr.bf16.mxu0 0
  %166 = vmatpush1.bf16.msra.mxu0 0
  %167 = vmatprep.subr.bf16.mxu0 0
  %168 = vmatpush1.bf16.msra.mxu0 0
  %169 = vmatprep.subr.bf16.mxu0 0
  %170 = vmatpush1.bf16.msra.mxu0 0
  %171 = vmatprep.subr.bf16.mxu0 0
  %172 = vmatpush1.bf16.msra.mxu0 0
  %173 = vmatprep.mubr.bf16.mxu0 0
  %174 = vmatmul.mubr.bf16.gmra.mrb[0].mxu0 %v136
  %v175 = vpop.f32.mrb[0].mxu0
  %v176 = vadd.f32 %v109, %v175
  %v177 = vpop.f32.mrb[0].mxu0
  %v178 = vpop.f32.mrb[0].mxu0
  %v179 = vadd.f32 %v109, %v178
  %v180 = vpop.f32.mrb[0].mxu0
  %181 = vmatprep.mubr.bf16.mxu0 0
  %182 = vmatmul.mubr.bf16.gmra.mrb[0].mxu0 %v139
  %v183 = vpop.f32.mrb[0].mxu0
  %v184 = vadd.f32 %v109, %v183
  %v185 = vpop.f32.mrb[0].mxu0
  %v186 = vpop.f32.mrb[0].mxu0
  %v187 = vpop.f32.mrb[0].mxu0
  %188 = vdwg.mxu0
  %v189 = vld [vmem:[%s5] sm:$0x1]
  %v190 = vld [vmem:[%s6] sm:$0x1]
  %191 = vadd.xlane.f32.xlu0 %v176
  %v192 = vpop.xlane.xlu0 %191
  %193 = vadd.xlane.f32.xlu0 %v179
  %v194 = vpop.xlane.xlu0 %193
  %195 = vadd.xlane.f32.xlu0 %v184
  %v196 = vpop.xlane.xlu0 %195
  %v197 = vrcp.pop 128.0
  %v198 = vmul.f32 %v192, %v197
  %v199 = vmul.f32 %v194, %v197
  %v200 = vmul.f32 %v196, %v197
  %v201 = vsub.f32 %v176, %v198
  %v202 = vsub.f32 %v179, %v199
  %v203 = vsub.f32 %v184, %v200
  %v204 = vmul.f32 %v201, %v201
  %v205 = vmul.f32 %v202, %v202
  %v206 = vmul.f32 %v203, %v203
  %207 = vadd.xlane.f32.xlu0 %v204
  %v208 = vpop.xlane.xlu0 %207
  %209 = vadd.xlane.f32.xlu0 %v205
  %v210 = vpop.xlane.xlu0 %209
  %211 = vadd.xlane.f32.xlu0 %v206
  %v212 = vpop.xlane.xlu0 %211
  %v213 = vmul.f32 %v208, %v197
  %v214 = vmul.f32 %v210, %v197
  %v215 = vmul.f32 %v212, %v197
  %v216 = vadd.f32 %v213, 1e-05
  %v217 = vadd.f32 %v214, 1e-05
  %v218 = vadd.f32 %v215, 1e-05
  %v219 = vrsqrt.pop %v216
  %v220 = vrsqrt.pop %v217
  %v221 = vrsqrt.pop %v218
  %v222 = vmul.f32 %v201, %v219
  %v223 = vmul.f32 %v202, %v220
  %v224 = vmul.f32 %v203, %v221
  %v226 = vlaneseq
  %v227 = vshrl.u32 %v226, 7
  %v228 = vsub.s32 0, %v227
  %v229 = vrot.slane %v189, %v228
  %v231 = vmul.f32 %v222, %v229
  %v232 = vmul.f32 %v223, %v229
  %v233 = vmul.f32 %v224, %v229
  %v235 = vlaneseq
  %v236 = vshrl.u32 %v235, 7
  %v237 = vsub.s32 0, %v236
  %v238 = vrot.slane %v190, %v237
  %v240 = vadd.f32 %v231, %v238
  %v241 = vadd.f32 %v232, %v238
  %v242 = vadd.f32 %v233, %v238
  %v243 = vpack.c.bf16 %v241, %v240
  %v244 = vpack.c.bf16 %v242, %v242
  %v247 = vunpack.c.l.b16 %v243
  %v248 = vunpack.c.h.b16 %v243
  %v249 = vunpack.c.l.b16 %v244
  %v250 = vpack.c.b16 %v247, %v247
  %v251 = vpack.c.b16 %v248, %v248
  %v252 = vpack.c.b16 %v249, %v249
  %256 = vst [vmem:[%s7] sm:$0xf] %v250
  %257 = vst [vmem:[%s7 + $0x4] sm:$0xf] %v251
  %258 = vst [vmem:[%s7 + $0x8] sm:$0xf] %v252
  // Predicated region
  $region30: #{vit_custom_forward.13} parent=0 // pred_check
    _
  $region31: #{vit_custom_forward.13} parent=0 // pred_check_branch
    %260 = sbr.rel (0) target = $region33
  $region32: #{vit_custom_forward.13} parent=0 // pred_region
    _
  $region33: #{vit_custom_forward.13} parent=0 // pred_fallthru
    _
  // Predicated region
  $region34: #{vit_custom_forward.13} parent=0 // pred_check
    _
  $region35: #{vit_custom_forward.13} parent=0 // pred_check_branch
    %262 = sbr.rel (0) target = $region37
  $region36: #{vit_custom_forward.13} parent=0 // pred_region
    _
  $region37: #{vit_custom_forward.13} parent=0 // pred_fallthru
    _

// kernel: vit_custom_forward.15
$region0: #{vit_custom_forward.15}
  #allocation0 [shape = 'u32[]', space=smem, size = 0x4, offset = 0x4, fixed_abs, tag = 'smem constant byte address 0x4 - core index']
  #allocation1 [shape = 'u32[144,128]{1,0:T(1,128)}', space=vmem, size = 0x12000, scoped, tag = 'internal scratch']
  %s0 = inlined_call_operand.vmem [shape: bf16[32,128], index: 0, kind: input, shape index: {}]
  %s1 = inlined_call_operand.vmem [shape: bf16[128,384], index: 1, kind: input, shape index: {}]
  %s2 = inlined_call_operand.vmem [shape: f32[1,128], index: 2, kind: input, shape index: {}]
  %s3 = inlined_call_operand.vmem [shape: f32[1,128], index: 3, kind: input, shape index: {}]
  %s4 = inlined_call_operand.vmem [shape: bf16[32,384], index: 4, kind: output, shape index: {}]
  %s5 = sld [smem:[#allocation0]]
  $region26: #{vit_custom_forward.15} parent=0
    _
  %s7 = ssub.s32 1, %s5
  %s8 = scalar_select 0, %s7, %s5
  // Predicated region
  $region2: #{vit_custom_forward.15} parent=0 // pred_check
    _
  $region3: #{vit_custom_forward.15} parent=0 // pred_check_branch
    %10 = sbr.rel (0) target = $region5
  $region4: #{vit_custom_forward.15} parent=0 // pred_region
    _
  $region5: #{vit_custom_forward.15} parent=0 // pred_fallthru
    _
  // Predicated region
  $region6: #{vit_custom_forward.15} parent=0 // pred_check
    _
  $region7: #{vit_custom_forward.15} parent=0 // pred_check_branch
    %12 = sbr.rel (0) target = $region9
  $region8: #{vit_custom_forward.15} parent=0 // pred_region
    _
  $region9: #{vit_custom_forward.15} parent=0 // pred_fallthru
    _
  // Predicated region
  $region10: #{vit_custom_forward.15} parent=0 // pred_check
    _
  $region11: #{vit_custom_forward.15} parent=0 // pred_check_branch
    %14 = sbr.rel (0) target = $region13
  $region12: #{vit_custom_forward.15} parent=0 // pred_region
    _
  $region13: #{vit_custom_forward.15} parent=0 // pred_fallthru
    _
  // Predicated region
  $region14: #{vit_custom_forward.15} parent=0 // pred_check
    _
  $region15: #{vit_custom_forward.15} parent=0 // pred_check_branch
    %16 = sbr.rel (0) target = $region17
  $region16: #{vit_custom_forward.15} parent=0 // pred_region
    _
  $region17: #{vit_custom_forward.15} parent=0 // pred_fallthru
    _
  %v18 = vld [vmem:[%s0] sm:$0xf]
  %v19 = vld [vmem:[%s0 + $0x4] sm:$0xf]
  %v20 = vld [vmem:[%s0 + $0x8] sm:$0xf]
  %v21 = vld [vmem:[%s0 + $0xc] sm:$0xf]
  %v22 = vunpack.c.l.bf16 %v18
  %v23 = vunpack.c.l.bf16 %v19
  %v24 = vunpack.c.l.bf16 %v20
  %v25 = vunpack.c.l.bf16 %v21
  %v26 = vld [vmem:[%s2] sm:$0x1]
  %v27 = vld [vmem:[%s3] sm:$0x1]
  %28 = vadd.xlane.f32.xlu0 %v22
  %v29 = vpop.xlane.xlu0 %28
  %30 = vadd.xlane.f32.xlu0 %v23
  %v31 = vpop.xlane.xlu0 %30
  %32 = vadd.xlane.f32.xlu0 %v24
  %v33 = vpop.xlane.xlu0 %32
  %34 = vadd.xlane.f32.xlu0 %v25
  %v35 = vpop.xlane.xlu0 %34
  %v36 = vrcp.pop 128.0
  %v37 = vmul.f32 %v29, %v36
  %v38 = vmul.f32 %v31, %v36
  %v39 = vmul.f32 %v33, %v36
  %v40 = vmul.f32 %v35, %v36
  %v41 = vsub.f32 %v22, %v37
  %v42 = vsub.f32 %v23, %v38
  %v43 = vsub.f32 %v24, %v39
  %v44 = vsub.f32 %v25, %v40
  %v45 = vmul.f32 %v41, %v41
  %v46 = vmul.f32 %v42, %v42
  %v47 = vmul.f32 %v43, %v43
  %v48 = vmul.f32 %v44, %v44
  %49 = vadd.xlane.f32.xlu0 %v45
  %v50 = vpop.xlane.xlu0 %49
  %51 = vadd.xlane.f32.xlu0 %v46
  %v52 = vpop.xlane.xlu0 %51
  %53 = vadd.xlane.f32.xlu0 %v47
  %v54 = vpop.xlane.xlu0 %53
  %55 = vadd.xlane.f32.xlu0 %v48
  %v56 = vpop.xlane.xlu0 %55
  %v57 = vmul.f32 %v50, %v36
  %v58 = vmul.f32 %v52, %v36
  %v59 = vmul.f32 %v54, %v36
  %v60 = vmul.f32 %v56, %v36
  %v61 = vadd.f32 %v57, 1e-05
  %v62 = vadd.f32 %v58, 1e-05
  %v63 = vadd.f32 %v59, 1e-05
  %v64 = vadd.f32 %v60, 1e-05
  %v65 = vrsqrt.pop %v61
  %v66 = vrsqrt.pop %v62
  %v67 = vrsqrt.pop %v63
  %v68 = vrsqrt.pop %v64
  %v69 = vmul.f32 %v41, %v65
  %v70 = vmul.f32 %v42, %v66
  %v71 = vmul.f32 %v43, %v67
  %v72 = vmul.f32 %v44, %v68
  %v74 = vlaneseq
  %v75 = vshrl.u32 %v74, 7
  %v76 = vsub.s32 0, %v75
  %v77 = vrot.slane %v26, %v76
  %v79 = vmul.f32 %v69, %v77
  %v80 = vmul.f32 %v70, %v77
  %v81 = vmul.f32 %v71, %v77
  %v82 = vmul.f32 %v72, %v77
  %v84 = vlaneseq
  %v85 = vshrl.u32 %v84, 7
  %v86 = vsub.s32 0, %v85
  %v87 = vrot.slane %v27, %v86
  %v89 = vadd.f32 %v79, %v87
  %v90 = vadd.f32 %v80, %v87
  %v91 = vadd.f32 %v81, %v87
  %v92 = vadd.f32 %v82, %v87
  %v93 = vpack.c.bf16 %v90, %v89
  %v94 = vpack.c.bf16 %v92, %v91
  %v95 = vld [vmem:[%s1] sm:$0xff]
  %v96 = vld [vmem:[%s1 + $0x8] sm:$0xf]
  %v97 = vld [vmem:[%s1 + $0xc] sm:$0xff]
  %v98 = vld [vmem:[%s1 + $0x14] sm:$0xf]
  %v99 = vld [vmem:[%s1 + $0x18] sm:$0xff]
  %v100 = vld [vmem:[%s1 + $0x20] sm:$0xf]
  %v101 = vld [vmem:[%s1 + $0x24] sm:$0xff]
  %v102 = vld [vmem:[%s1 + $0x2c] sm:$0xf]
  %v103 = vld [vmem:[%s1 + $0x30] sm:$0xff]
  %v104 = vld [vmem:[%s1 + $0x38] sm:$0xf]
  %v105 = vld [vmem:[%s1 + $0x3c] sm:$0xff]
  %v106 = vld [vmem:[%s1 + $0x44] sm:$0xf]
  %v107 = vld [vmem:[%s1 + $0x48] sm:$0xff]
  %v108 = vld [vmem:[%s1 + $0x50] sm:$0xf]
  %v109 = vld [vmem:[%s1 + $0x54] sm:$0xff]
  %v110 = vld [vmem:[%s1 + $0x5c] sm:$0xf]
  %v111 = vld [vmem:[%s1 + $0x60] sm:$0xff]
  %v112 = vld [vmem:[%s1 + $0x68] sm:$0xf]
  %v113 = vld [vmem:[%s1 + $0x6c] sm:$0xff]
  %v114 = vld [vmem:[%s1 + $0x74] sm:$0xf]
  %v115 = vld [vmem:[%s1 + $0x78] sm:$0xff]
  %v116 = vld [vmem:[%s1 + $0x80] sm:$0xf]
  %v117 = vld [vmem:[%s1 + $0x84] sm:$0xff]
  %v118 = vld [vmem:[%s1 + $0x8c] sm:$0xf]
  %v119 = vld [vmem:[%s1 + $0x90] sm:$0xff]
  %v120 = vld [vmem:[%s1 + $0x98] sm:$0xf]
  %v121 = vld [vmem:[%s1 + $0x9c] sm:$0xff]
  %v122 = vld [vmem:[%s1 + $0xa4] sm:$0xf]
  %v123 = vld [vmem:[%s1 + $0xa8] sm:$0xff]
  %v124 = vld [vmem:[%s1 + $0xb0] sm:$0xf]
  %v125 = vld [vmem:[%s1 + $0xb4] sm:$0xff]
  %v126 = vld [vmem:[%s1 + $0xbc] sm:$0xf]
  %v159 = vunpack.c.l.b16 %v95
  %v160 = vunpack.c.h.b16 %v95
  %v161 = vunpack.c.l.b16 %v96
  %v162 = vunpack.c.l.b16 %v97
  %v163 = vunpack.c.h.b16 %v97
  %v164 = vunpack.c.l.b16 %v98
  %v165 = vunpack.c.l.b16 %v99
  %v166 = vunpack.c.h.b16 %v99
  %v167 = vunpack.c.l.b16 %v100
  %v168 = vunpack.c.l.b16 %v101
  %v169 = vunpack.c.h.b16 %v101
  %v170 = vunpack.c.l.b16 %v102
  %v171 = vunpack.c.l.b16 %v103
  %v172 = vunpack.c.h.b16 %v103
  %v173 = vunpack.c.l.b16 %v104
  %v174 = vunpack.c.l.b16 %v105
  %v175 = vunpack.c.h.b16 %v105
  %v176 = vunpack.c.l.b16 %v106
  %v177 = vunpack.c.l.b16 %v107
  %v178 = vunpack.c.h.b16 %v107
  %v179 = vunpack.c.l.b16 %v108
  %v180 = vunpack.c.l.b16 %v109
  %v181 = vunpack.c.h.b16 %v109
  %v182 = vunpack.c.l.b16 %v110
  %v183 = vunpack.c.l.b16 %v111
  %v184 = vunpack.c.h.b16 %v111
  %v185 = vunpack.c.l.b16 %v112
  %v186 = vunpack.c.l.b16 %v113
  %v187 = vunpack.c.h.b16 %v113
  %v188 = vunpack.c.l.b16 %v114
  %v189 = vunpack.c.l.b16 %v115
  %v190 = vunpack.c.h.b16 %v115
  %v191 = vunpack.c.l.b16 %v116
  %v192 = vunpack.c.l.b16 %v117
  %v193 = vunpack.c.h.b16 %v117
  %v194 = vunpack.c.l.b16 %v118
  %v195 = vunpack.c.l.b16 %v119
  %v196 = vunpack.c.h.b16 %v119
  %v197 = vunpack.c.l.b16 %v120
  %v198 = vunpack.c.l.b16 %v121
  %v199 = vunpack.c.h.b16 %v121
  %v200 = vunpack.c.l.b16 %v122
  %v201 = vunpack.c.l.b16 %v123
  %v202 = vunpack.c.h.b16 %v123
  %v203 = vunpack.c.l.b16 %v124
  %v204 = vunpack.c.l.b16 %v125
  %v205 = vunpack.c.h.b16 %v125
  %v206 = vunpack.c.l.b16 %v126
  %v207 = vpack.c.b16 %v162, %v159
  %v208 = vpack.c.b16 %v163, %v160
  %v209 = vpack.c.b16 %v164, %v161
  %v210 = vpack.c.b16 %v168, %v165
  %v211 = vpack.c.b16 %v169, %v166
  %v212 = vpack.c.b16 %v170, %v167
  %v213 = vpack.c.b16 %v174, %v171
  %v214 = vpack.c.b16 %v175, %v172
  %v215 = vpack.c.b16 %v176, %v173
  %v216 = vpack.c.b16 %v180, %v177
  %v217 = vpack.c.b16 %v181, %v178
  %v218 = vpack.c.b16 %v182, %v179
  %v219 = vpack.c.b16 %v186, %v183
  %v220 = vpack.c.b16 %v187, %v184
  %v221 = vpack.c.b16 %v188, %v185
  %v222 = vpack.c.b16 %v192, %v189
  %v223 = vpack.c.b16 %v193, %v190
  %v224 = vpack.c.b16 %v194, %v191
  %v225 = vpack.c.b16 %v198, %v195
  %v226 = vpack.c.b16 %v199, %v196
  %v227 = vpack.c.b16 %v200, %v197
  %v228 = vpack.c.b16 %v204, %v201
  %v229 = vpack.c.b16 %v205, %v202
  %v230 = vpack.c.b16 %v206, %v203
  %255 = vmatprep.subr.bf16.mxu0 %v208
  %256 = vmatpush1.bf16.msra.mxu0 %v207
  %257 = vmatprep.subr.bf16.mxu0 %v211
  %258 = vmatpush1.bf16.msra.mxu0 %v210
  %259 = vmatprep.subr.bf16.mxu0 %v214
  %260 = vmatpush1.bf16.msra.mxu0 %v213
  %261 = vmatprep.subr.bf16.mxu0 %v217
  %262 = vmatpush1.bf16.msra.mxu0 %v216
  %263 = vmatprep.subr.bf16.mxu0 %v220
  %264 = vmatpush1.bf16.msra.mxu0 %v219
  %265 = vmatprep.subr.bf16.mxu0 %v223
  %266 = vmatpush1.bf16.msra.mxu0 %v222
  %267 = vmatprep.subr.bf16.mxu0 %v226
  %268 = vmatpush1.bf16.msra.mxu0 %v225
  %269 = vmatprep.subr.bf16.mxu0 %v229
  %270 = vmatpush1.bf16.msra.mxu0 %v228
  %271 = vmatprep.subr.bf16.mxu0 0
  %272 = vmatpush1.bf16.msra.mxu0 0
  %273 = vmatprep.subr.bf16.mxu0 0
  %274 = vmatpush1.bf16.msra.mxu0 0
  %275 = vmatprep.subr.bf16.mxu0 0
  %276 = vmatpush1.bf16.msra.mxu0 0
  %277 = vmatprep.subr.bf16.mxu0 0
  %278 = vmatpush1.bf16.msra.mxu0 0
  %279 = vmatprep.subr.bf16.mxu0 0
  %280 = vmatpush1.bf16.msra.mxu0 0
  %281 = vmatprep.subr.bf16.mxu0 0
  %282 = vmatpush1.bf16.msra.mxu0 0
  %283 = vmatprep.subr.bf16.mxu0 0
  %284 = vmatpush1.bf16.msra.mxu0 0
  %285 = vmatprep.subr.bf16.mxu0 0
  %286 = vmatpush1.bf16.msra.mxu0 0
  %287 = vmatprep.mubr.bf16.mxu0 0
  %288 = vmatmul.mubr.bf16.gmra.mrb[0].mxu0 %v93
  %v289 = vpop.f32.mrb[0].mxu0
  %v290 = vadd.f32 0.0, %v289
  %v291 = vpop.f32.mrb[0].mxu0
  %v292 = vadd.f32 0.0, %v291
  %v293 = vpop.f32.mrb[0].mxu0
  %v294 = vadd.f32 0.0, %v293
  %v295 = vpop.f32.mrb[0].mxu0
  %v296 = vadd.f32 0.0, %v295
  %297 = vmatprep.mubr.bf16.mxu0 0
  %298 = vmatmul.mubr.bf16.gmra.mrb[0].mxu0 %v94
  %v299 = vpop.f32.mrb[0].mxu0
  %v300 = vadd.f32 0.0, %v299
  %v301 = vpop.f32.mrb[0].mxu0
  %v302 = vadd.f32 0.0, %v301
  %v303 = vpop.f32.mrb[0].mxu0
  %v304 = vadd.f32 0.0, %v303
  %v305 = vpop.f32.mrb[0].mxu0
  %v306 = vadd.f32 0.0, %v305
  %307 = vdwg.mxu0
  %308 = vmatprep.subr.bf16.mxu0 0
  %309 = vmatpush1.bf16.msra.mxu0 %v209
  %310 = vmatprep.subr.bf16.mxu0 0
  %311 = vmatpush1.bf16.msra.mxu0 %v212
  %312 = vmatprep.subr.bf16.mxu0 0
  %313 = vmatpush1.bf16.msra.mxu0 %v215
  %314 = vmatprep.subr.bf16.mxu0 0
  %315 = vmatpush1.bf16.msra.mxu0 %v218
  %316 = vmatprep.subr.bf16.mxu0 0
  %317 = vmatpush1.bf16.msra.mxu0 %v221
  %318 = vmatprep.subr.bf16.mxu0 0
  %319 = vmatpush1.bf16.msra.mxu0 %v224
  %320 = vmatprep.subr.bf16.mxu0 0
  %321 = vmatpush1.bf16.msra.mxu0 %v227
  %322 = vmatprep.subr.bf16.mxu0 0
  %323 = vmatpush1.bf16.msra.mxu0 %v230
  %324 = vmatprep.subr.bf16.mxu0 0
  %325 = vmatpush1.bf16.msra.mxu0 0
  %326 = vmatprep.subr.bf16.mxu0 0
  %327 = vmatpush1.bf16.msra.mxu0 0
  %328 = vmatprep.subr.bf16.mxu0 0
  %329 = vmatpush1.bf16.msra.mxu0 0
  %330 = vmatprep.subr.bf16.mxu0 0
  %331 = vmatpush1.bf16.msra.mxu0 0
  %332 = vmatprep.subr.bf16.mxu0 0
  %333 = vmatpush1.bf16.msra.mxu0 0
  %334 = vmatprep.subr.bf16.mxu0 0
  %335 = vmatpush1.bf16.msra.mxu0 0
  %336 = vmatprep.subr.bf16.mxu0 0
  %337 = vmatpush1.bf16.msra.mxu0 0
  %338 = vmatprep.subr.bf16.mxu0 0
  %339 = vmatpush1.bf16.msra.mxu0 0
  %340 = vmatprep.mubr.bf16.mxu0 0
  %341 = vmatmul.mubr.bf16.gmra.mrb[0].mxu0 %v93
  %v342 = vpop.f32.mrb[0].mxu0
  %v343 = vadd.f32 0.0, %v342
  %v344 = vpop.f32.mrb[0].mxu0
  %v345 = vpop.f32.mrb[0].mxu0
  %v346 = vadd.f32 0.0, %v345
  %v347 = vpop.f32.mrb[0].mxu0
  %348 = vmatprep.mubr.bf16.mxu0 0
  %349 = vmatmul.mubr.bf16.gmra.mrb[0].mxu0 %v94
  %v350 = vpop.f32.mrb[0].mxu0
  %v351 = vadd.f32 0.0, %v350
  %v352 = vpop.f32.mrb[0].mxu0
  %v353 = vpop.f32.mrb[0].mxu0
  %v354 = vadd.f32 0.0, %v353
  %v355 = vpop.f32.mrb[0].mxu0
  %356 = vdwg.mxu0
  %v357 = vpack.c.bf16 %v294, %v290
  %v358 = vpack.c.bf16 %v296, %v292
  %v359 = vpack.c.bf16 %v346, %v343
  %v360 = vpack.c.bf16 %v304, %v300
  %v361 = vpack.c.bf16 %v306, %v302
  %v362 = vpack.c.bf16 %v354, %v351
  %v369 = vunpack.c.l.b16 %v357
  %v370 = vunpack.c.l.b16 %v358
  %v371 = vunpack.c.l.b16 %v359
  %v372 = vunpack.c.h.b16 %v357
  %v373 = vunpack.c.h.b16 %v358
  %v374 = vunpack.c.h.b16 %v359
  %v375 = vunpack.c.l.b16 %v360
  %v376 = vunpack.c.l.b16 %v361
  %v377 = vunpack.c.l.b16 %v362
  %v378 = vunpack.c.h.b16 %v360
  %v379 = vunpack.c.h.b16 %v361
  %v380 = vunpack.c.h.b16 %v362
  %v381 = vpack.c.b16 %v370, %v369
  %v382 = vpack.c.b16 %v371, %v371
  %v383 = vpack.c.b16 %v373, %v372
  %v384 = vpack.c.b16 %v374, %v374
  %v385 = vpack.c.b16 %v376, %v375
  %v386 = vpack.c.b16 %v377, %v377
  %v387 = vpack.c.b16 %v379, %v378
  %v388 = vpack.c.b16 %v380, %v380
  %397 = vst [vmem:[%s4] sm:$0xff] %v381
  %398 = vst [vmem:[%s4 + $0x8] sm:$0xf] %v382
  %399 = vst [vmem:[%s4 + $0xc] sm:$0xff] %v383
  %400 = vst [vmem:[%s4 + $0x14] sm:$0xf] %v384
  %401 = vst [vmem:[%s4 + $0x18] sm:$0xff] %v385
  %402 = vst [vmem:[%s4 + $0x20] sm:$0xf] %v386
  %403 = vst [vmem:[%s4 + $0x24] sm:$0xff] %v387
  %404 = vst [vmem:[%s4 + $0x2c] sm:$0xf] %v388
  // Predicated region
  $region18: #{vit_custom_forward.15} parent=0 // pred_check
    _
  $region19: #{vit_custom_forward.15} parent=0 // pred_check_branch
    %406 = sbr.rel (0) target = $region21
  $region20: #{vit_custom_forward.15} parent=0 // pred_region
    _
  $region21: #{vit_custom_forward.15} parent=0 // pred_fallthru
    _
  // Predicated region
  $region22: #{vit_custom_forward.15} parent=0 // pred_check
    _
  $region23: #{vit_custom_forward.15} parent=0 // pred_check_branch
    %408 = sbr.rel (0) target = $region25
  $region24: #{vit_custom_forward.15} parent=0 // pred_region
    _
  $region25: #{vit_custom_forward.15} parent=0 // pred_fallthru
    _

// kernel: vit_custom_forward.16
$region0: #{vit_custom_forward.16}
  #allocation0 [shape = 'u32[]', space=smem, size = 0x4, offset = 0x4, fixed_abs, tag = 'smem constant byte address 0x4 - core index']
  #allocation1 [shape = 'u32[144,128]{1,0:T(1,128)}', space=vmem, size = 0x12000, scoped, tag = 'internal scratch']
  %s0 = inlined_call_operand.vmem [shape: bf16[2,16,384], index: 0, kind: input, shape index: {}, may-alias: {0,1,2}]
  %s1 = inlined_call_operand.vmem [shape: bf16[2,16,384], index: 1, kind: input, shape index: {}, may-alias: {0,1,2}]
  %s2 = inlined_call_operand.vmem [shape: bf16[2,16,384], index: 2, kind: input, shape index: {}, may-alias: {0,1,2}]
  %s3 = inlined_call_operand.vmem [shape: bf16[2,16,128], index: 3, kind: output, shape index: {}]
  %s4 = sld [smem:[#allocation0]]
  $region168: #{vit_custom_forward.16} parent=0
    _
  %s6 = ssub.s32 1, %s4
  %s7 = scalar_select 0, %s6, %s4
  $region1: #{vit_custom_forward.16} parent=0
    #allocation2 [shape = 'u8[8192]{0}', space=vmem, size = 0x2000, scoped, tag = 'input window, operand 0']
    #allocation3 [shape = 'u8[8192]{0}', space=vmem, size = 0x2000, scoped, tag = 'input window, operand 1']
    #allocation4 [shape = 'u8[8192]{0}', space=vmem, size = 0x2000, scoped, tag = 'input window, operand 2']
    loop: start=0, step=1, limit=4
    $region2: #{vit_custom_forward.16} parent=1 // loop_pre_header
      _
    $region3: #{vit_custom_forward.16} parent=1 // loop_header
      %s9 = sphi 0, %s13
      %p10 = scmp.ge.s32.totalorder %s9, 4
      %s16 = sphi 0, %s28
      %s17 = sphi 0, %s24
      %s18 = sphi 0, %s16
      %s19 = sphi 0, %s17
      %s20 = sphi 0, %s18
      %s21 = sphi 0, %s19
      %s33 = sphi 0, %s35
      %s36 = sphi 0, %s33
      %s37 = sphi 0, %s36
      %s53 = sphi 0, %s37
      %s59 = sphi 0, %s61
      %s62 = sphi 0, %s59
      %s63 = sphi 0, %s62
      %s79 = sphi 0, %s63
      %s85 = sphi 0, %s87
      %s88 = sphi 0, %s85
      %s89 = sphi 0, %s88
      %s105 = sphi 0, %s89
      %s113 = sphi 0, %s115
      %s116 = sphi 0, %s113
      %s117 = sphi 0, %s116
      %s133 = sphi 0, %s117
    $region4: #{vit_custom_forward.16} parent=1 // loop_header_branch
      %12 = sbr.rel (%p10) target = $region8
    $region5: #{vit_custom_forward.16} parent=1 // loop_body
      %s14 = ssub.s32 %s9, 1
      %s15 = ssub.s32 %s9, 2
      %s22 = sadd.s32 1, %s17
      %p23 = scmp.ge.s32.totalorder %s22, 1
      %s24 = scalar_select %p23, 0, %s22
      %s25 = sadd.s32 1, %s16
      %s26 = scalar_select %p23, %s25, %s16
      %p27 = scmp.ge.s32.totalorder %s26, 2
      %s28 = scalar_select %p27, 0, %s26
      %s29 = ssub.s32 %s16, %s28
      %s30 = ssub.s32 %s17, %s24
      %s31 = sor.u32 %s29, %s30
      %p32 = scmp.eq.s32.totalorder %s31, 0
      %s34 = sadd.s32 %s33, 1
      %s35 = scalar_select %p32, %s33, %s34
      %p38 = pneg %p32
      %p39 = scmp.eq.s32.totalorder %s9, 1
      %p40 = por %p38, %p39
      %p41 = scmp.ne.s32.totalorder %s33, %s36
      %p42 = scmp.eq.s32.totalorder %s9, 0
      %p43 = por %p41, %p42
      %p44 = scmp.ne.s32.totalorder %s33, %s36
      %p45 = scmp.eq.s32.totalorder %s14, 1
      %p46 = por %p44, %p45
      %p47 = scmp.ne.s32.totalorder %s36, %s37
      %p48 = scmp.eq.s32.totalorder %s14, 0
      %p49 = por %p47, %p48
      %p50 = scmp.ne.s32.totalorder %s36, %s37
      %p51 = scmp.eq.s32.totalorder %s15, 1
      %p52 = por %p50, %p51
      %p54 = scmp.ne.s32.totalorder %s37, %s53
      %p55 = scmp.eq.s32.totalorder %s15, 0
      %p56 = por %p54, %p55
      %s57 = ssub.s32 %s16, %s28
      %p58 = scmp.eq.s32.totalorder %s57, 0
      %s60 = sadd.s32 %s59, 1
      %s61 = scalar_select %p58, %s59, %s60
      %p64 = pneg %p58
      %p65 = scmp.eq.s32.totalorder %s9, 1
      %p66 = por %p64, %p65
      %p67 = scmp.ne.s32.totalorder %s59, %s62
      %p68 = scmp.eq.s32.totalorder %s9, 0
      %p69 = por %p67, %p68
      %p70 = scmp.ne.s32.totalorder %s59, %s62
      %p71 = scmp.eq.s32.totalorder %s14, 1
      %p72 = por %p70, %p71
      %p73 = scmp.ne.s32.totalorder %s62, %s63
      %p74 = scmp.eq.s32.totalorder %s14, 0
      %p75 = por %p73, %p74
      %p76 = scmp.ne.s32.totalorder %s62, %s63
      %p77 = scmp.eq.s32.totalorder %s15, 1
      %p78 = por %p76, %p77
      %p80 = scmp.ne.s32.totalorder %s63, %s79
      %p81 = scmp.eq.s32.totalorder %s15, 0
      %p82 = por %p80, %p81
      %s83 = ssub.s32 %s16, %s28
      %p84 = scmp.eq.s32.totalorder %s83, 0
      %s86 = sadd.s32 %s85, 1
      %s87 = scalar_select %p84, %s85, %s86
      %p90 = pneg %p84
      %p91 = scmp.eq.s32.totalorder %s9, 1
      %p92 = por %p90, %p91
      %p93 = scmp.ne.s32.totalorder %s85, %s88
      %p94 = scmp.eq.s32.totalorder %s9, 0
      %p95 = por %p93, %p94
      %p96 = scmp.ne.s32.totalorder %s85, %s88
      %p97 = scmp.eq.s32.totalorder %s14, 1
      %p98 = por %p96, %p97
      %p99 = scmp.ne.s32.totalorder %s88, %s89
      %p100 = scmp.eq.s32.totalorder %s14, 0
      %p101 = por %p99, %p100
      %p102 = scmp.ne.s32.totalorder %s88, %s89
      %p103 = scmp.eq.s32.totalorder %s15, 1
      %p104 = por %p102, %p103
      %p106 = scmp.ne.s32.totalorder %s89, %s105
      %p107 = scmp.eq.s32.totalorder %s15, 0
      %p108 = por %p106, %p107
      %s109 = ssub.s32 %s16, %s28
      %s110 = ssub.s32 %s17, %s24
      %s111 = sor.u32 %s109, %s110
      %p112 = scmp.eq.s32.totalorder %s111, 0
      %s114 = sadd.s32 %s113, 1
      %s115 = scalar_select %p112, %s113, %s114
      %p118 = pneg %p112
      %p119 = scmp.eq.s32.totalorder %s9, 1
      %p120 = por %p118, %p119
      %p121 = scmp.ne.s32.totalorder %s113, %s116
      %p122 = scmp.eq.s32.totalorder %s9, 0
      %p123 = por %p121, %p122
      %p124 = scmp.ne.s32.totalorder %s113, %s116
      %p125 = scmp.eq.s32.totalorder %s14, 1
      %p126 = por %p124, %p125
      %p127 = scmp.ne.s32.totalorder %s116, %s117
      %p128 = scmp.eq.s32.totalorder %s14, 0
      %p129 = por %p127, %p128
      %p130 = scmp.ne.s32.totalorder %s116, %s117
      %p131 = scmp.eq.s32.totalorder %s15, 1
      %p132 = por %p130, %p131
      %p134 = scmp.ne.s32.totalorder %s117, %s133
      %p135 = scmp.eq.s32.totalorder %s15, 0
      %p136 = por %p134, %p135
      %p137 = scmp.le.s32.totalorder 1, %s9
      %p138 = scmp.lt.s32.totalorder %s9, 3
      %p139 = pnand %p137, %p138
      %p140 = pneg %p139
      // Predicated region
      $region9: #{vit_custom_forward.16} parent=5 // pred_check
        _
      $region10: #{vit_custom_forward.16} parent=5 // pred_check_branch
        %142 = sbr.rel (%p139) target = $region12
      $region11: #{vit_custom_forward.16} parent=5 // pred_region
        %s143 = ssub.s32 %s9, 1
      $region12: #{vit_custom_forward.16} parent=5 // pred_fallthru
        _
      %p144 = scmp.lt.s32.totalorder %s9, 2
      // Predicated region
      $region13: #{vit_custom_forward.16} parent=5 // pred_check
        %p145 = pneg %p144
      $region14: #{vit_custom_forward.16} parent=5 // pred_check_branch
        %147 = sbr.rel (%p145) target = $region16
      $region15: #{vit_custom_forward.16} parent=5 // pred_region
        // Predicated region
        $region17: #{vit_custom_forward.16} parent=15 // pred_check
          %p148 = pneg %p43
        $region18: #{vit_custom_forward.16} parent=15 // pred_check_branch
          %150 = sbr.rel (%p148) target = $region20
        $region19: #{vit_custom_forward.16} parent=15 // pred_region
          %s151 = sand.u32 %s33, 1
          %s152 = sand.u32 %s33, 1
          %s153 = smul.addr %s152, 8
          %s154 = scalar_lea.vmem [#allocation2], %s153
          %s155 = smul.u32 2, %s17
          %s156 = smul.addr %s155, 3
          %s157 = smul.addr %s16, 6
          %s158 = sadd.s32 %s156, %s157
          %s159 = smul.addr %s158, 4
          %s160 = scalar_lea.vmem %s0, %s159
          // Predicated region
          $region21: #{vit_custom_forward.16} parent=19 // pred_check
            _
          $region22: #{vit_custom_forward.16} parent=19 // pred_check_branch
            %162 = sbr.rel (0) target = $region24
          $region23: #{vit_custom_forward.16} parent=19 // pred_region
            // Predicated region
            $region25: #{vit_custom_forward.16} parent=23 // pred_check
              _
            $region26: #{vit_custom_forward.16} parent=23 // pred_check_branch
              %164 = sbr.rel target = $region28
            $region27: #{vit_custom_forward.16} parent=23 // pred_region
              // Predicated region
              $region40: #{vit_custom_forward.16} parent=27 // pred_check
                _
              $region41: #{vit_custom_forward.16} parent=27 // pred_check_branch
                %181 = sbr.rel (0) target = $region43
              $region42: #{vit_custom_forward.16} parent=27 // pred_region
                loop: start=0, step=1, limit=1
                $region44: #{vit_custom_forward.16} parent=42 // loop_pre_header
                  _
                $region45: #{vit_custom_forward.16} parent=42 // loop_header
                  %s183 = sphi 0, %s187
                  %p184 = scmp.ge.s32.totalorder %s183, 1
                  %s188 = sphi %s160, %s160
                  %s189 = sphi %s154, %s154
                $region46: #{vit_custom_forward.16} parent=42 // loop_header_branch
                  %186 = sbr.rel (%p184) target = $region50
                $region47: #{vit_custom_forward.16} parent=42 // loop_body
                  _
                $region48: #{vit_custom_forward.16} parent=42 // loop_footer
                  %s187 = sadd.s32 1, %s183
                $region49: #{vit_custom_forward.16} parent=42 // loop_footer_branch
                  %182 = sbr.rel target = $region45
                $region50: #{vit_custom_forward.16} parent=42 // loop_exit
                  _
                loop: start=0, step=1, limit=1
                $region51: #{vit_custom_forward.16} parent=42 // loop_pre_header
                  _
                $region52: #{vit_custom_forward.16} parent=42 // loop_header
                  %s192 = sphi 0, %s196
                  %p193 = scmp.ge.s32.totalorder %s192, 1
                  %s197 = sphi %s160, %s160
                  %s198 = sphi %s154, %s154
                $region53: #{vit_custom_forward.16} parent=42 // loop_header_branch
                  %195 = sbr.rel (%p193) target = $region57
                $region54: #{vit_custom_forward.16} parent=42 // loop_body
                  %v199 = vld [vmem:[%s197] sm:$0xf]
                  %200 = vst [vmem:[%s198] sm:$0xf] %v199
                  %v201 = vld [vmem:[%s197 + $0xc] sm:$0xf]
                  %202 = vst [vmem:[%s198 + $0x4] sm:$0xf] %v201
                $region55: #{vit_custom_forward.16} parent=42 // loop_footer
                  %s196 = sadd.s32 1, %s192
                $region56: #{vit_custom_forward.16} parent=42 // loop_footer_branch
                  %191 = sbr.rel target = $region52
                $region57: #{vit_custom_forward.16} parent=42 // loop_exit
                  _
              $region43: #{vit_custom_forward.16} parent=27 // pred_fallthru
                _
            $region28: #{vit_custom_forward.16} parent=23 // pred_fallthru
              _
            // Predicated region
            $region29: #{vit_custom_forward.16} parent=23 // pred_check
              _
            $region30: #{vit_custom_forward.16} parent=23 // pred_check_branch
              %166 = sbr.rel (0) target = $region32
            $region31: #{vit_custom_forward.16} parent=23 // pred_region
              loop: start=0, step=1, limit=1
              $region33: #{vit_custom_forward.16} parent=31 // loop_pre_header
                _
              $region34: #{vit_custom_forward.16} parent=31 // loop_header
                %s169 = sphi 0, %s173
                %p170 = scmp.ge.s32.totalorder %s169, 1
                %s174 = sphi %s160, %s160
                %s175 = sphi %s154, %s154
              $region35: #{vit_custom_forward.16} parent=31 // loop_header_branch
                %172 = sbr.rel (%p170) target = $region39
              $region36: #{vit_custom_forward.16} parent=31 // loop_body
                %v176 = vld [vmem:[%s174] sm:$0xf]
                %177 = vst [vmem:[%s175] sm:$0xf] %v176
                %v178 = vld [vmem:[%s174 + $0xc] sm:$0xf]
                %179 = vst [vmem:[%s175 + $0x4] sm:$0xf] %v178
              $region37: #{vit_custom_forward.16} parent=31 // loop_footer
                %s173 = sadd.s32 1, %s169
              $region38: #{vit_custom_forward.16} parent=31 // loop_footer_branch
                %168 = sbr.rel target = $region34
              $region39: #{vit_custom_forward.16} parent=31 // loop_exit
                _
            $region32: #{vit_custom_forward.16} parent=23 // pred_fallthru
              _
          $region24: #{vit_custom_forward.16} parent=19 // pred_fallthru
            _
          %203 = vnop
        $region20: #{vit_custom_forward.16} parent=15 // pred_fallthru
          _
        // Predicated region
        $region58: #{vit_custom_forward.16} parent=15 // pred_check
          %p204 = pneg %p69
        $region59: #{vit_custom_forward.16} parent=15 // pred_check_branch
          %206 = sbr.rel (%p204) target = $region61
        $region60: #{vit_custom_forward.16} parent=15 // pred_region
          %s207 = sand.u32 %s59, 1
          %s208 = sand.u32 %s59, 1
          %s209 = smul.addr %s208, 8
          %s210 = scalar_lea.vmem [#allocation3], %s209
          %s211 = smul.addr %s16, 6
          %s212 = sadd.s32 1, %s211
          %s213 = smul.addr %s212, 4
          %s214 = scalar_lea.vmem %s1, %s213
          // Predicated region
          $region62: #{vit_custom_forward.16} parent=60 // pred_check
            _
          $region63: #{vit_custom_forward.16} parent=60 // pred_check_branch
            %216 = sbr.rel (0) target = $region65
          $region64: #{vit_custom_forward.16} parent=60 // pred_region
            // Predicated region
            $region66: #{vit_custom_forward.16} parent=64 // pred_check
              _
            $region67: #{vit_custom_forward.16} parent=64 // pred_check_branch
              %218 = sbr.rel target = $region69
            $region68: #{vit_custom_forward.16} parent=64 // pred_region
              // Predicated region
              $region81: #{vit_custom_forward.16} parent=68 // pred_check
                _
              $region82: #{vit_custom_forward.16} parent=68 // pred_check_branch
                %235 = sbr.rel (0) target = $region84
              $region83: #{vit_custom_forward.16} parent=68 // pred_region
                loop: start=0, step=1, limit=1
                $region85: #{vit_custom_forward.16} parent=83 // loop_pre_header
                  _
                $region86: #{vit_custom_forward.16} parent=83 // loop_header
                  %s237 = sphi 0, %s241
                  %p238 = scmp.ge.s32.totalorder %s237, 1
                  %s242 = sphi %s214, %s214
                  %s243 = sphi %s210, %s210
                $region87: #{vit_custom_forward.16} parent=83 // loop_header_branch
                  %240 = sbr.rel (%p238) target = $region91
                $region88: #{vit_custom_forward.16} parent=83 // loop_body
                  _
                $region89: #{vit_custom_forward.16} parent=83 // loop_footer
                  %s241 = sadd.s32 1, %s237
                $region90: #{vit_custom_forward.16} parent=83 // loop_footer_branch
                  %236 = sbr.rel target = $region86
                $region91: #{vit_custom_forward.16} parent=83 // loop_exit
                  _
                loop: start=0, step=1, limit=1
                $region92: #{vit_custom_forward.16} parent=83 // loop_pre_header
                  _
                $region93: #{vit_custom_forward.16} parent=83 // loop_header
                  %s246 = sphi 0, %s250
                  %p247 = scmp.ge.s32.totalorder %s246, 1
                  %s251 = sphi %s214, %s214
                  %s252 = sphi %s210, %s210
                $region94: #{vit_custom_forward.16} parent=83 // loop_header_branch
                  %249 = sbr.rel (%p247) target = $region98
                $region95: #{vit_custom_forward.16} parent=83 // loop_body
                  %v253 = vld [vmem:[%s251] sm:$0xf]
                  %254 = vst [vmem:[%s252] sm:$0xf] %v253
                  %v255 = vld [vmem:[%s251 + $0xc] sm:$0xf]
                  %256 = vst [vmem:[%s252 + $0x4] sm:$0xf] %v255
                $region96: #{vit_custom_forward.16} parent=83 // loop_footer
                  %s250 = sadd.s32 1, %s246
                $region97: #{vit_custom_forward.16} parent=83 // loop_footer_branch
                  %245 = sbr.rel target = $region93
                $region98: #{vit_custom_forward.16} parent=83 // loop_exit
                  _
              $region84: #{vit_custom_forward.16} parent=68 // pred_fallthru
                _
            $region69: #{vit_custom_forward.16} parent=64 // pred_fallthru
              _
            // Predicated region
            $region70: #{vit_custom_forward.16} parent=64 // pred_check
              _
            $region71: #{vit_custom_forward.16} parent=64 // pred_check_branch
              %220 = sbr.rel (0) target = $region73
            $region72: #{vit_custom_forward.16} parent=64 // pred_region
              loop: start=0, step=1, limit=1
              $region74: #{vit_custom_forward.16} parent=72 // loop_pre_header
                _
              $region75: #{vit_custom_forward.16} parent=72 // loop_header
                %s223 = sphi 0, %s227
                %p224 = scmp.ge.s32.totalorder %s223, 1
                %s228 = sphi %s214, %s214
                %s229 = sphi %s210, %s210
              $region76: #{vit_custom_forward.16} parent=72 // loop_header_branch
                %226 = sbr.rel (%p224) target = $region80
              $region77: #{vit_custom_forward.16} parent=72 // loop_body
                %v230 = vld [vmem:[%s228] sm:$0xf]
                %231 = vst [vmem:[%s229] sm:$0xf] %v230
                %v232 = vld [vmem:[%s228 + $0xc] sm:$0xf]
                %233 = vst [vmem:[%s229 + $0x4] sm:$0xf] %v232
              $region78: #{vit_custom_forward.16} parent=72 // loop_footer
                %s227 = sadd.s32 1, %s223
              $region79: #{vit_custom_forward.16} parent=72 // loop_footer_branch
                %222 = sbr.rel target = $region75
              $region80: #{vit_custom_forward.16} parent=72 // loop_exit
                _
            $region73: #{vit_custom_forward.16} parent=64 // pred_fallthru
              _
          $region65: #{vit_custom_forward.16} parent=60 // pred_fallthru
            _
          %257 = vnop
        $region61: #{vit_custom_forward.16} parent=15 // pred_fallthru
          _
        // Predicated region
        $region99: #{vit_custom_forward.16} parent=15 // pred_check
          %p258 = pneg %p95
        $region100: #{vit_custom_forward.16} parent=15 // pred_check_branch
          %260 = sbr.rel (%p258) target = $region102
        $region101: #{vit_custom_forward.16} parent=15 // pred_region
          %s261 = sand.u32 %s85, 1
          %s262 = sand.u32 %s85, 1
          %s263 = smul.addr %s262, 8
          %s264 = scalar_lea.vmem [#allocation4], %s263
          %s265 = smul.addr %s16, 6
          %s266 = sadd.s32 2, %s265
          %s267 = smul.addr %s266, 4
          %s268 = scalar_lea.vmem %s2, %s267
          // Predicated region
          $region103: #{vit_custom_forward.16} parent=101 // pred_check
            _
          $region104: #{vit_custom_forward.16} parent=101 // pred_check_branch
            %270 = sbr.rel (0) target = $region106
          $region105: #{vit_custom_forward.16} parent=101 // pred_region
            // Predicated region
            $region107: #{vit_custom_forward.16} parent=105 // pred_check
              _
            $region108: #{vit_custom_forward.16} parent=105 // pred_check_branch
              %272 = sbr.rel target = $region110
            $region109: #{vit_custom_forward.16} parent=105 // pred_region
              // Predicated region
              $region122: #{vit_custom_forward.16} parent=109 // pred_check
                _
              $region123: #{vit_custom_forward.16} parent=109 // pred_check_branch
                %289 = sbr.rel (0) target = $region125
              $region124: #{vit_custom_forward.16} parent=109 // pred_region
                loop: start=0, step=1, limit=1
                $region126: #{vit_custom_forward.16} parent=124 // loop_pre_header
                  _
                $region127: #{vit_custom_forward.16} parent=124 // loop_header
                  %s291 = sphi 0, %s295
                  %p292 = scmp.ge.s32.totalorder %s291, 1
                  %s296 = sphi %s268, %s268
                  %s297 = sphi %s264, %s264
                $region128: #{vit_custom_forward.16} parent=124 // loop_header_branch
                  %294 = sbr.rel (%p292) target = $region132
                $region129: #{vit_custom_forward.16} parent=124 // loop_body
                  _
                $region130: #{vit_custom_forward.16} parent=124 // loop_footer
                  %s295 = sadd.s32 1, %s291
                $region131: #{vit_custom_forward.16} parent=124 // loop_footer_branch
                  %290 = sbr.rel target = $region127
                $region132: #{vit_custom_forward.16} parent=124 // loop_exit
                  _
                loop: start=0, step=1, limit=1
                $region133: #{vit_custom_forward.16} parent=124 // loop_pre_header
                  _
                $region134: #{vit_custom_forward.16} parent=124 // loop_header
                  %s300 = sphi 0, %s304
                  %p301 = scmp.ge.s32.totalorder %s300, 1
                  %s305 = sphi %s268, %s268
                  %s306 = sphi %s264, %s264
                $region135: #{vit_custom_forward.16} parent=124 // loop_header_branch
                  %303 = sbr.rel (%p301) target = $region139
                $region136: #{vit_custom_forward.16} parent=124 // loop_body
                  %v307 = vld [vmem:[%s305] sm:$0xf]
                  %308 = vst [vmem:[%s306] sm:$0xf] %v307
                  %v309 = vld [vmem:[%s305 + $0xc] sm:$0xf]
                  %310 = vst [vmem:[%s306 + $0x4] sm:$0xf] %v309
                $region137: #{vit_custom_forward.16} parent=124 // loop_footer
                  %s304 = sadd.s32 1, %s300
                $region138: #{vit_custom_forward.16} parent=124 // loop_footer_branch
                  %299 = sbr.rel target = $region134
                $region139: #{vit_custom_forward.16} parent=124 // loop_exit
                  _
              $region125: #{vit_custom_forward.16} parent=109 // pred_fallthru
                _
            $region110: #{vit_custom_forward.16} parent=105 // pred_fallthru
              _
            // Predicated region
            $region111: #{vit_custom_forward.16} parent=105 // pred_check
              _
            $region112: #{vit_custom_forward.16} parent=105 // pred_check_branch
              %274 = sbr.rel (0) target = $region114
            $region113: #{vit_custom_forward.16} parent=105 // pred_region
              loop: start=0, step=1, limit=1
              $region115: #{vit_custom_forward.16} parent=113 // loop_pre_header
                _
              $region116: #{vit_custom_forward.16} parent=113 // loop_header
                %s277 = sphi 0, %s281
                %p278 = scmp.ge.s32.totalorder %s277, 1
                %s282 = sphi %s268, %s268
                %s283 = sphi %s264, %s264
              $region117: #{vit_custom_forward.16} parent=113 // loop_header_branch
                %280 = sbr.rel (%p278) target = $region121
              $region118: #{vit_custom_forward.16} parent=113 // loop_body
                %v284 = vld [vmem:[%s282] sm:$0xf]
                %285 = vst [vmem:[%s283] sm:$0xf] %v284
                %v286 = vld [vmem:[%s282 + $0xc] sm:$0xf]
                %287 = vst [vmem:[%s283 + $0x4] sm:$0xf] %v286
              $region119: #{vit_custom_forward.16} parent=113 // loop_footer
                %s281 = sadd.s32 1, %s277
              $region120: #{vit_custom_forward.16} parent=113 // loop_footer_branch
                %276 = sbr.rel target = $region116
              $region121: #{vit_custom_forward.16} parent=113 // loop_exit
                _
            $region114: #{vit_custom_forward.16} parent=105 // pred_fallthru
              _
          $region106: #{vit_custom_forward.16} parent=101 // pred_fallthru
            _
          %311 = vnop
        $region102: #{vit_custom_forward.16} parent=15 // pred_fallthru
          _
      $region16: #{vit_custom_forward.16} parent=5 // pred_fallthru
        _
      %p312 = scmp.le.s32.totalorder 1, %s9
      %p313 = scmp.lt.s32.totalorder %s9, 3
      %p314 = pnand %p312, %p313
      %p315 = pneg %p314
      // Predicated region
      $region140: #{vit_custom_forward.16} parent=5 // pred_check
        _
      $region141: #{vit_custom_forward.16} parent=5 // pred_check_branch
        %317 = sbr.rel (%p314) target = $region143
      $region142: #{vit_custom_forward.16} parent=5 // pred_region
        %s318 = ssub.s32 %s9, 1
        %s319 = sand.u32 %s36, 1
        %s320 = sand.u32 %s36, 1
        %s321 = smul.addr %s320, 8
        %s322 = scalar_lea.vmem [#allocation2], %s321
        // Predicated region
        $region144: #{vit_custom_forward.16} parent=142 // pred_check
          %p323 = pneg %p49
        $region145: #{vit_custom_forward.16} parent=142 // pred_check_branch
          %325 = sbr.rel (%p323) target = $region147
        $region146: #{vit_custom_forward.16} parent=142 // pred_region
          _
        $region147: #{vit_custom_forward.16} parent=142 // pred_fallthru
          _
        %s326 = sand.u32 %s62, 1
        %s327 = sand.u32 %s62, 1
        %s328 = smul.addr %s327, 8
        %s329 = scalar_lea.vmem [#allocation3], %s328
        // Predicated region
        $region148: #{vit_custom_forward.16} parent=142 // pred_check
          %p330 = pneg %p75
        $region149: #{vit_custom_forward.16} parent=142 // pred_check_branch
          %332 = sbr.rel (%p330) target = $region151
        $region150: #{vit_custom_forward.16} parent=142 // pred_region
          _
        $region151: #{vit_custom_forward.16} parent=142 // pred_fallthru
          _
        %s333 = sand.u32 %s88, 1
        %s334 = sand.u32 %s88, 1
        %s335 = smul.addr %s334, 8
        %s336 = scalar_lea.vmem [#allocation4], %s335
        // Predicated region
        $region152: #{vit_custom_forward.16} parent=142 // pred_check
          %p337 = pneg %p101
        $region153: #{vit_custom_forward.16} parent=142 // pred_check_branch
          %339 = sbr.rel (%p337) target = $region155
        $region154: #{vit_custom_forward.16} parent=142 // pred_region
          _
        $region155: #{vit_custom_forward.16} parent=142 // pred_fallthru
          _
        %s340 = sand.u32 %s36, 1
        %s341 = sand.u32 %s36, 1
        %s342 = smul.addr %s341, 8
        %s343 = scalar_lea.vmem [#allocation2], %s342
        %p344 = pneg %p49
        %p345 = pneg %p46
        %s346 = sand.u32 %s62, 1
        %s347 = sand.u32 %s62, 1
        %s348 = smul.addr %s347, 8
        %s349 = scalar_lea.vmem [#allocation3], %s348
        %p350 = pneg %p75
        %p351 = pneg %p72
        %s352 = sand.u32 %s88, 1
        %s353 = sand.u32 %s88, 1
        %s354 = smul.addr %s353, 8
        %s355 = scalar_lea.vmem [#allocation4], %s354
        %p356 = pneg %p101
        %p357 = pneg %p98
        %p358 = pneg %p129
        %p359 = pneg %p126
        %s360 = smul.u32 2, %s19
        %p361 = scmp.lt.s32.totalorder %s18, 1
        %s362 = scalar_select %p361, %s18, 1
        %p363 = scmp.lt.s32.totalorder %s360, 1
        %s364 = scalar_select %p363, %s360, 1
        %s365 = smul.addr %s362, 2
        %s366 = sadd.s32 %s364, %s365
        %s367 = smul.addr %s366, 4
        %s368 = scalar_lea.vmem %s3, %s367
        %s369 = smul.u32 2, %s19
        %s370 = smul.u32 2, %s19
        %p371 = scmp.lt.s32.totalorder %s18, 1
        %s372 = scalar_select %p371, %s18, 1
        %p373 = scmp.lt.s32.totalorder %s370, 1
        %s374 = scalar_select %p373, %s370, 1
        %s375 = smul.addr %s372, 2
        %s376 = sadd.s32 %s374, %s375
        %s377 = smul.addr %s376, 4
        %s378 = scalar_lea.vmem %s3, %s377
        %s379 = smul.u32 2, %s19
        %v382 = vlaneseq
        %v383 = vand.u32 %v382, 127
        %vm384 = vcmp.lt.s32.totalorder %v383, 13
        %v385 = vsel %vm384, 0.0, -1e+30
        %v386 = vld [vmem:[%s322] sm:$0xf]
        %v387 = vld [vmem:[%s322 + $0x4] sm:$0xf]
        %v388 = vmul.bf16 %v386, 1043676725
        %v389 = vmul.bf16 %v387, 1043676725
        %v390 = vld [vmem:[%s329] sm:$0xf]
        %v391 = vld [vmem:[%s329 + $0x4] sm:$0xf]
        %v392 = vld [vmem:[%s336] sm:$0xf]
        %v393 = vld [vmem:[%s336 + $0x4] sm:$0xf]
        %v396 = vunpack.c.l.b16 %v388
        %v397 = vunpack.c.l.b16 %v389
        %v398 = vpack.c.b16 %v397, %v396
        %v401 = vunpack.c.l.b16 %v390
        %v402 = vunpack.c.l.b16 %v391
        %v403 = vpack.c.b16 %v402, %v401
        %vm404 = vcmask 261120
        %v406 = vsel %vm404, %v398, 0
        %v409 = vsel %vm404, %v403, 0
        %411 = vmatprep.subr.bf16.mxu0 0
        %412 = vmatpush1.bf16.xpose.msra.mxu0 %v409
        %413 = vmatprep.subr.bf16.mxu0 0
        %414 = vmatpush1.bf16.xpose.msra.mxu0 0
        %415 = vmatprep.subr.bf16.mxu0 0
        %416 = vmatpush1.bf16.xpose.msra.mxu0 0
        %417 = vmatprep.subr.bf16.mxu0 0
        %418 = vmatpush1.bf16.xpose.msra.mxu0 0
        %419 = vmatprep.subr.bf16.mxu0 0
        %420 = vmatpush1.bf16.xpose.msra.mxu0 0
        %421 = vmatprep.subr.bf16.mxu0 0
        %422 = vmatpush1.bf16.xpose.msra.mxu0 0
        %423 = vmatprep.subr.bf16.mxu0 0
        %424 = vmatpush1.bf16.xpose.msra.mxu0 0
        %425 = vmatprep.subr.bf16.mxu0 0
        %426 = vmatpush1.bf16.xpose.msra.mxu0 0
        %427 = vmatprep.subr.bf16.mxu0 0
        %428 = vmatpush1.bf16.xpose.msra.mxu0 0
        %429 = vmatprep.subr.bf16.mxu0 0
        %430 = vmatpush1.bf16.xpose.msra.mxu0 0
        %431 = vmatprep.subr.bf16.mxu0 0
        %432 = vmatpush1.bf16.xpose.msra.mxu0 0
        %433 = vmatprep.subr.bf16.mxu0 0
        %434 = vmatpush1.bf16.xpose.msra.mxu0 0
        %435 = vmatprep.subr.bf16.mxu0 0
        %436 = vmatpush1.bf16.xpose.msra.mxu0 0
        %437 = vmatprep.subr.bf16.mxu0 0
        %438 = vmatpush1.bf16.xpose.msra.mxu0 0
        %439 = vmatprep.subr.bf16.mxu0 0
        %440 = vmatpush1.bf16.xpose.msra.mxu0 0
        %441 = vmatprep.subr.bf16.mxu0 0
        %442 = vmatpush1.bf16.xpose.msra.mxu0 0
        %443 = vmatprep.mubr.bf16.mxu0 0
        %444 = vmatmul.mubr.bf16.gmra.mrb[0].mxu0 %v406
        %v445 = vpop.f32.mrb[0].mxu0
        %v446 = vadd.f32 %v385, %v445
        %v447 = vpop.f32.mrb[0].mxu0
        %v448 = vpop.f32.mrb[0].mxu0
        %v449 = vadd.f32 %v385, %v448
        %v450 = vpop.f32.mrb[0].mxu0
        %451 = vdwg.mxu0
        %vm452 = vcmask 130048
        %v453 = vsel %vm452, %v446, -inf
        %454 = vmax.xlane.f32.xlu0 %v453
        %v455 = vpop.xlane.xlu0 %454
        %v456 = vsel %vm452, %v449, -inf
        %457 = vmax.xlane.f32.xlu0 %v456
        %v458 = vpop.xlane.xlu0 %457
        %v459 = vsub.f32 %v446, %v455
        %v460 = vsub.f32 %v449, %v458
        %v461 = vmul.f32 %v459, 1.442695
        %v462 = vpow.pop %v461
        %v463 = vmul.f32 %v460, 1.442695
        %v464 = vpow.pop %v463
        %v465 = vsel %vm452, %v462, 0.0
        %466 = vadd.xlane.f32.xlu0 %v465
        %v467 = vpop.xlane.xlu0 %466
        %v468 = vsel %vm452, %v464, 0.0
        %469 = vadd.xlane.f32.xlu0 %v468
        %v470 = vpop.xlane.xlu0 %469
        %v471 = vrcp.pop %v467
        %v472 = vmul.f32 %v462, %v471
        %v473 = vrcp.pop %v470
        %v474 = vmul.f32 %v464, %v473
        %v475 = vpack.c.bf16 %v474, %v472
        %v478 = vunpack.c.l.b16 %v392
        %v479 = vunpack.c.l.b16 %v393
        %v480 = vpack.c.b16 %v479, %v478
        %v483 = vsel %vm452, %v475, 0
        %485 = vmatprep.subr.bf16.mxu0 0
        %486 = vmatpush1.bf16.msra.mxu0 %v480
        %487 = vmatprep.subr.bf16.mxu0 0
        %488 = vmatpush1.bf16.msra.mxu0 0
        %489 = vmatprep.subr.bf16.mxu0 0
        %490 = vmatpush1.bf16.msra.mxu0 0
        %491 = vmatprep.subr.bf16.mxu0 0
        %492 = vmatpush1.bf16.msra.mxu0 0
        %493 = vmatprep.subr.bf16.mxu0 0
        %494 = vmatpush1.bf16.msra.mxu0 0
        %495 = vmatprep.subr.bf16.mxu0 0
        %496 = vmatpush1.bf16.msra.mxu0 0
        %497 = vmatprep.subr.bf16.mxu0 0
        %498 = vmatpush1.bf16.msra.mxu0 0
        %499 = vmatprep.subr.bf16.mxu0 0
        %500 = vmatpush1.bf16.msra.mxu0 0
        %501 = vmatprep.subr.bf16.mxu0 0
        %502 = vmatpush1.bf16.msra.mxu0 0
        %503 = vmatprep.subr.bf16.mxu0 0
        %504 = vmatpush1.bf16.msra.mxu0 0
        %505 = vmatprep.subr.bf16.mxu0 0
        %506 = vmatpush1.bf16.msra.mxu0 0
        %507 = vmatprep.subr.bf16.mxu0 0
        %508 = vmatpush1.bf16.msra.mxu0 0
        %509 = vmatprep.subr.bf16.mxu0 0
        %510 = vmatpush1.bf16.msra.mxu0 0
        %511 = vmatprep.subr.bf16.mxu0 0
        %512 = vmatpush1.bf16.msra.mxu0 0
        %513 = vmatprep.subr.bf16.mxu0 0
        %514 = vmatpush1.bf16.msra.mxu0 0
        %515 = vmatprep.subr.bf16.mxu0 0
        %516 = vmatpush1.bf16.msra.mxu0 0
        %517 = vmatprep.mubr.bf16.mxu0 0
        %518 = vmatmul.mubr.bf16.gmra.mrb[0].mxu0 %v483
        %v519 = vpop.f32.mrb[0].mxu0
        %v520 = vadd.f32 0.0, %v519
        %v521 = vpop.f32.mrb[0].mxu0
        %v522 = vpop.f32.mrb[0].mxu0
        %v523 = vadd.f32 0.0, %v522
        %v524 = vpop.f32.mrb[0].mxu0
        %525 = vdwg.mxu0
        %v526 = vpack.c.bf16 %v523, %v520
        %527 = vrot.lane.b32.xlu0 %v398, 96
        %v528 = vpop.permute.xlu0 %527
        %529 = vrot.lane.b32.xlu0 %v403, 96
        %v530 = vpop.permute.xlu0 %529
        %v532 = vsel %vm404, %v528, 0
        %v535 = vsel %vm404, %v530, 0
        %537 = vmatprep.subr.bf16.mxu0 0
        %538 = vmatpush1.bf16.xpose.msra.mxu0 %v535
        %539 = vmatprep.subr.bf16.mxu0 0
        %540 = vmatpush1.bf16.xpose.msra.mxu0 0
        %541 = vmatprep.subr.bf16.mxu0 0
        %542 = vmatpush1.bf16.xpose.msra.mxu0 0
        %543 = vmatprep.subr.bf16.mxu0 0
        %544 = vmatpush1.bf16.xpose.msra.mxu0 0
        %545 = vmatprep.subr.bf16.mxu0 0
        %546 = vmatpush1.bf16.xpose.msra.mxu0 0
        %547 = vmatprep.subr.bf16.mxu0 0
        %548 = vmatpush1.bf16.xpose.msra.mxu0 0
        %549 = vmatprep.subr.bf16.mxu0 0
        %550 = vmatpush1.bf16.xpose.msra.mxu0 0
        %551 = vmatprep.subr.bf16.mxu0 0
        %552 = vmatpush1.bf16.xpose.msra.mxu0 0
        %553 = vmatprep.subr.bf16.mxu0 0
        %554 = vmatpush1.bf16.xpose.msra.mxu0 0
        %555 = vmatprep.subr.bf16.mxu0 0
        %556 = vmatpush1.bf16.xpose.msra.mxu0 0
        %557 = vmatprep.subr.bf16.mxu0 0
        %558 = vmatpush1.bf16.xpose.msra.mxu0 0
        %559 = vmatprep.subr.bf16.mxu0 0
        %560 = vmatpush1.bf16.xpose.msra.mxu0 0
        %561 = vmatprep.subr.bf16.mxu0 0
        %562 = vmatpush1.bf16.xpose.msra.mxu0 0
        %563 = vmatprep.subr.bf16.mxu0 0
        %564 = vmatpush1.bf16.xpose.msra.mxu0 0
        %565 = vmatprep.subr.bf16.mxu0 0
        %566 = vmatpush1.bf16.xpose.msra.mxu0 0
        %567 = vmatprep.subr.bf16.mxu0 0
        %568 = vmatpush1.bf16.xpose.msra.mxu0 0
        %569 = vmatprep.mubr.bf16.mxu0 0
        %570 = vmatmul.mubr.bf16.gmra.mrb[0].mxu0 %v532
        %v571 = vpop.f32.mrb[0].mxu0
        %v572 = vadd.f32 %v385, %v571
        %v573 = vpop.f32.mrb[0].mxu0
        %v574 = vpop.f32.mrb[0].mxu0
        %v575 = vadd.f32 %v385, %v574
        %v576 = vpop.f32.mrb[0].mxu0
        %577 = vdwg.mxu0
        %v578 = vsel %vm452, %v572, -inf
        %579 = vmax.xlane.f32.xlu0 %v578
        %v580 = vpop.xlane.xlu0 %579
        %v581 = vsel %vm452, %v575, -inf
        %582 = vmax.xlane.f32.xlu0 %v581
        %v583 = vpop.xlane.xlu0 %582
        %v584 = vsub.f32 %v572, %v580
        %v585 = vsub.f32 %v575, %v583
        %v586 = vmul.f32 %v584, 1.442695
        %v587 = vpow.pop %v586
        %v588 = vmul.f32 %v585, 1.442695
        %v589 = vpow.pop %v588
        %v590 = vsel %vm452, %v587, 0.0
        %591 = vadd.xlane.f32.xlu0 %v590
        %v592 = vpop.xlane.xlu0 %591
        %v593 = vsel %vm452, %v589, 0.0
        %594 = vadd.xlane.f32.xlu0 %v593
        %v595 = vpop.xlane.xlu0 %594
        %v596 = vrcp.pop %v592
        %v597 = vmul.f32 %v587, %v596
        %v598 = vrcp.pop %v595
        %v599 = vmul.f32 %v589, %v598
        %v600 = vpack.c.bf16 %v599, %v597
        %601 = vrot.lane.b32.xlu0 %v480, 96
        %v602 = vpop.permute.xlu0 %601
        %v605 = vsel %vm452, %v600, 0
        %607 = vmatprep.subr.bf16.mxu0 0
        %608 = vmatpush1.bf16.msra.mxu0 %v602
        %609 = vmatprep.subr.bf16.mxu0 0
        %610 = vmatpush1.bf16.msra.mxu0 0
        %611 = vmatprep.subr.bf16.mxu0 0
        %612 = vmatpush1.bf16.msra.mxu0 0
        %613 = vmatprep.subr.bf16.mxu0 0
        %614 = vmatpush1.bf16.msra.mxu0 0
        %615 = vmatprep.subr.bf16.mxu0 0
        %616 = vmatpush1.bf16.msra.mxu0 0
        %617 = vmatprep.subr.bf16.mxu0 0
        %618 = vmatpush1.bf16.msra.mxu0 0
        %619 = vmatprep.subr.bf16.mxu0 0
        %620 = vmatpush1.bf16.msra.mxu0 0
        %621 = vmatprep.subr.bf16.mxu0 0
        %622 = vmatpush1.bf16.msra.mxu0 0
        %623 = vmatprep.subr.bf16.mxu0 0
        %624 = vmatpush1.bf16.msra.mxu0 0
        %625 = vmatprep.subr.bf16.mxu0 0
        %626 = vmatpush1.bf16.msra.mxu0 0
        %627 = vmatprep.subr.bf16.mxu0 0
        %628 = vmatpush1.bf16.msra.mxu0 0
        %629 = vmatprep.subr.bf16.mxu0 0
        %630 = vmatpush1.bf16.msra.mxu0 0
        %631 = vmatprep.subr.bf16.mxu0 0
        %632 = vmatpush1.bf16.msra.mxu0 0
        %633 = vmatprep.subr.bf16.mxu0 0
        %634 = vmatpush1.bf16.msra.mxu0 0
        %635 = vmatprep.subr.bf16.mxu0 0
        %636 = vmatpush1.bf16.msra.mxu0 0
        %637 = vmatprep.subr.bf16.mxu0 0
        %638 = vmatpush1.bf16.msra.mxu0 0
        %639 = vmatprep.mubr.bf16.mxu0 0
        %640 = vmatmul.mubr.bf16.gmra.mrb[0].mxu0 %v605
        %v641 = vpop.f32.mrb[0].mxu0
        %v642 = vadd.f32 0.0, %v641
        %v643 = vpop.f32.mrb[0].mxu0
        %v644 = vpop.f32.mrb[0].mxu0
        %v645 = vadd.f32 0.0, %v644
        %v646 = vpop.f32.mrb[0].mxu0
        %647 = vdwg.mxu0
        %v648 = vpack.c.bf16 %v645, %v642
        %649 = vrot.lane.b32.xlu0 %v398, 64
        %v650 = vpop.permute.xlu0 %649
        %651 = vrot.lane.b32.xlu0 %v403, 64
        %v652 = vpop.permute.xlu0 %651
        %v654 = vsel %vm404, %v650, 0
        %v657 = vsel %vm404, %v652, 0
        %659 = vmatprep.subr.bf16.mxu0 0
        %660 = vmatpush1.bf16.xpose.msra.mxu0 %v657
        %661 = vmatprep.subr.bf16.mxu0 0
        %662 = vmatpush1.bf16.xpose.msra.mxu0 0
        %663 = vmatprep.subr.bf16.mxu0 0
        %664 = vmatpush1.bf16.xpose.msra.mxu0 0
        %665 = vmatprep.subr.bf16.mxu0 0
        %666 = vmatpush1.bf16.xpose.msra.mxu0 0
        %667 = vmatprep.subr.bf16.mxu0 0
        %668 = vmatpush1.bf16.xpose.msra.mxu0 0
        %669 = vmatprep.subr.bf16.mxu0 0
        %670 = vmatpush1.bf16.xpose.msra.mxu0 0
        %671 = vmatprep.subr.bf16.mxu0 0
        %672 = vmatpush1.bf16.xpose.msra.mxu0 0
        %673 = vmatprep.subr.bf16.mxu0 0
        %674 = vmatpush1.bf16.xpose.msra.mxu0 0
        %675 = vmatprep.subr.bf16.mxu0 0
        %676 = vmatpush1.bf16.xpose.msra.mxu0 0
        %677 = vmatprep.subr.bf16.mxu0 0
        %678 = vmatpush1.bf16.xpose.msra.mxu0 0
        %679 = vmatprep.subr.bf16.mxu0 0
        %680 = vmatpush1.bf16.xpose.msra.mxu0 0
        %681 = vmatprep.subr.bf16.mxu0 0
        %682 = vmatpush1.bf16.xpose.msra.mxu0 0
        %683 = vmatprep.subr.bf16.mxu0 0
        %684 = vmatpush1.bf16.xpose.msra.mxu0 0
        %685 = vmatprep.subr.bf16.mxu0 0
        %686 = vmatpush1.bf16.xpose.msra.mxu0 0
        %687 = vmatprep.subr.bf16.mxu0 0
        %688 = vmatpush1.bf16.xpose.msra.mxu0 0
        %689 = vmatprep.subr.bf16.mxu0 0
        %690 = vmatpush1.bf16.xpose.msra.mxu0 0
        %691 = vmatprep.mubr.bf16.mxu0 0
        %692 = vmatmul.mubr.bf16.gmra.mrb[0].mxu0 %v654
        %v693 = vpop.f32.mrb[0].mxu0
        %v694 = vadd.f32 %v385, %v693
        %v695 = vpop.f32.mrb[0].mxu0
        %v696 = vpop.f32.mrb[0].mxu0
        %v697 = vadd.f32 %v385, %v696
        %v698 = vpop.f32.mrb[0].mxu0
        %699 = vdwg.mxu0
        %v700 = vsel %vm452, %v694, -inf
        %701 = vmax.xlane.f32.xlu0 %v700
        %v702 = vpop.xlane.xlu0 %701
        %v703 = vsel %vm452, %v697, -inf
        %704 = vmax.xlane.f32.xlu0 %v703
        %v705 = vpop.xlane.xlu0 %704
        %v706 = vsub.f32 %v694, %v702
        %v707 = vsub.f32 %v697, %v705
        %v708 = vmul.f32 %v706, 1.442695
        %v709 = vpow.pop %v708
        %v710 = vmul.f32 %v707, 1.442695
        %v711 = vpow.pop %v710
        %v712 = vsel %vm452, %v709, 0.0
        %713 = vadd.xlane.f32.xlu0 %v712
        %v714 = vpop.xlane.xlu0 %713
        %v715 = vsel %vm452, %v711, 0.0
        %716 = vadd.xlane.f32.xlu0 %v715
        %v717 = vpop.xlane.xlu0 %716
        %v718 = vrcp.pop %v714
        %v719 = vmul.f32 %v709, %v718
        %v720 = vrcp.pop %v717
        %v721 = vmul.f32 %v711, %v720
        %v722 = vpack.c.bf16 %v721, %v719
        %723 = vrot.lane.b32.xlu0 %v480, 64
        %v724 = vpop.permute.xlu0 %723
        %v727 = vsel %vm452, %v722, 0
        %729 = vmatprep.subr.bf16.mxu0 0
        %730 = vmatpush1.bf16.msra.mxu0 %v724
        %731 = vmatprep.subr.bf16.mxu0 0
        %732 = vmatpush1.bf16.msra.mxu0 0
        %733 = vmatprep.subr.bf16.mxu0 0
        %734 = vmatpush1.bf16.msra.mxu0 0
        %735 = vmatprep.subr.bf16.mxu0 0
        %736 = vmatpush1.bf16.msra.mxu0 0
        %737 = vmatprep.subr.bf16.mxu0 0
        %738 = vmatpush1.bf16.msra.mxu0 0
        %739 = vmatprep.subr.bf16.mxu0 0
        %740 = vmatpush1.bf16.msra.mxu0 0
        %741 = vmatprep.subr.bf16.mxu0 0
        %742 = vmatpush1.bf16.msra.mxu0 0
        %743 = vmatprep.subr.bf16.mxu0 0
        %744 = vmatpush1.bf16.msra.mxu0 0
        %745 = vmatprep.subr.bf16.mxu0 0
        %746 = vmatpush1.bf16.msra.mxu0 0
        %747 = vmatprep.subr.bf16.mxu0 0
        %748 = vmatpush1.bf16.msra.mxu0 0
        %749 = vmatprep.subr.bf16.mxu0 0
        %750 = vmatpush1.bf16.msra.mxu0 0
        %751 = vmatprep.subr.bf16.mxu0 0
        %752 = vmatpush1.bf16.msra.mxu0 0
        %753 = vmatprep.subr.bf16.mxu0 0
        %754 = vmatpush1.bf16.msra.mxu0 0
        %755 = vmatprep.subr.bf16.mxu0 0
        %756 = vmatpush1.bf16.msra.mxu0 0
        %757 = vmatprep.subr.bf16.mxu0 0
        %758 = vmatpush1.bf16.msra.mxu0 0
        %759 = vmatprep.subr.bf16.mxu0 0
        %760 = vmatpush1.bf16.msra.mxu0 0
        %761 = vmatprep.mubr.bf16.mxu0 0
        %762 = vmatmul.mubr.bf16.gmra.mrb[0].mxu0 %v727
        %v763 = vpop.f32.mrb[0].mxu0
        %v764 = vadd.f32 0.0, %v763
        %v765 = vpop.f32.mrb[0].mxu0
        %v766 = vpop.f32.mrb[0].mxu0
        %v767 = vadd.f32 0.0, %v766
        %v768 = vpop.f32.mrb[0].mxu0
        %769 = vdwg.mxu0
        %v770 = vpack.c.bf16 %v767, %v764
        %771 = vrot.lane.b32.xlu0 %v398, 32
        %v772 = vpop.permute.xlu0 %771
        %773 = vrot.lane.b32.xlu0 %v403, 32
        %v774 = vpop.permute.xlu0 %773
        %v776 = vsel %vm404, %v772, 0
        %v779 = vsel %vm404, %v774, 0
        %781 = vmatprep.subr.bf16.mxu0 0
        %782 = vmatpush1.bf16.xpose.msra.mxu0 %v779
        %783 = vmatprep.subr.bf16.mxu0 0
        %784 = vmatpush1.bf16.xpose.msra.mxu0 0
        %785 = vmatprep.subr.bf16.mxu0 0
        %786 = vmatpush1.bf16.xpose.msra.mxu0 0
        %787 = vmatprep.subr.bf16.mxu0 0
        %788 = vmatpush1.bf16.xpose.msra.mxu0 0
        %789 = vmatprep.subr.bf16.mxu0 0
        %790 = vmatpush1.bf16.xpose.msra.mxu0 0
        %791 = vmatprep.subr.bf16.mxu0 0
        %792 = vmatpush1.bf16.xpose.msra.mxu0 0
        %793 = vmatprep.subr.bf16.mxu0 0
        %794 = vmatpush1.bf16.xpose.msra.mxu0 0
        %795 = vmatprep.subr.bf16.mxu0 0
        %796 = vmatpush1.bf16.xpose.msra.mxu0 0
        %797 = vmatprep.subr.bf16.mxu0 0
        %798 = vmatpush1.bf16.xpose.msra.mxu0 0
        %799 = vmatprep.subr.bf16.mxu0 0
        %800 = vmatpush1.bf16.xpose.msra.mxu0 0
        %801 = vmatprep.subr.bf16.mxu0 0
        %802 = vmatpush1.bf16.xpose.msra.mxu0 0
        %803 = vmatprep.subr.bf16.mxu0 0
        %804 = vmatpush1.bf16.xpose.msra.mxu0 0
        %805 = vmatprep.subr.bf16.mxu0 0
        %806 = vmatpush1.bf16.xpose.msra.mxu0 0
        %807 = vmatprep.subr.bf16.mxu0 0
        %808 = vmatpush1.bf16.xpose.msra.mxu0 0
        %809 = vmatprep.subr.bf16.mxu0 0
        %810 = vmatpush1.bf16.xpose.msra.mxu0 0
        %811 = vmatprep.subr.bf16.mxu0 0
        %812 = vmatpush1.bf16.xpose.msra.mxu0 0
        %813 = vmatprep.mubr.bf16.mxu0 0
        %814 = vmatmul.mubr.bf16.gmra.mrb[0].mxu0 %v776
        %v815 = vpop.f32.mrb[0].mxu0
        %v816 = vadd.f32 %v385, %v815
        %v817 = vpop.f32.mrb[0].mxu0
        %v818 = vpop.f32.mrb[0].mxu0
        %v819 = vadd.f32 %v385, %v818
        %v820 = vpop.f32.mrb[0].mxu0
        %821 = vdwg.mxu0
        %v822 = vsel %vm452, %v816, -inf
        %823 = vmax.xlane.f32.xlu0 %v822
        %v824 = vpop.xlane.xlu0 %823
        %v825 = vsel %vm452, %v819, -inf
        %826 = vmax.xlane.f32.xlu0 %v825
        %v827 = vpop.xlane.xlu0 %826
        %v828 = vsub.f32 %v816, %v824
        %v829 = vsub.f32 %v819, %v827
        %v830 = vmul.f32 %v828, 1.442695
        %v831 = vpow.pop %v830
        %v832 = vmul.f32 %v829, 1.442695
        %v833 = vpow.pop %v832
        %v834 = vsel %vm452, %v831, 0.0
        %835 = vadd.xlane.f32.xlu0 %v834
        %v836 = vpop.xlane.xlu0 %835
        %v837 = vsel %vm452, %v833, 0.0
        %838 = vadd.xlane.f32.xlu0 %v837
        %v839 = vpop.xlane.xlu0 %838
        %v840 = vrcp.pop %v836
        %v841 = vmul.f32 %v831, %v840
        %v842 = vrcp.pop %v839
        %v843 = vmul.f32 %v833, %v842
        %v844 = vpack.c.bf16 %v843, %v841
        %845 = vrot.lane.b32.xlu0 %v480, 32
        %v846 = vpop.permute.xlu0 %845
        %v849 = vsel %vm452, %v844, 0
        %851 = vmatprep.subr.bf16.mxu0 0
        %852 = vmatpush1.bf16.msra.mxu0 %v846
        %853 = vmatprep.subr.bf16.mxu0 0
        %854 = vmatpush1.bf16.msra.mxu0 0
        %855 = vmatprep.subr.bf16.mxu0 0
        %856 = vmatpush1.bf16.msra.mxu0 0
        %857 = vmatprep.subr.bf16.mxu0 0
        %858 = vmatpush1.bf16.msra.mxu0 0
        %859 = vmatprep.subr.bf16.mxu0 0
        %860 = vmatpush1.bf16.msra.mxu0 0
        %861 = vmatprep.subr.bf16.mxu0 0
        %862 = vmatpush1.bf16.msra.mxu0 0
        %863 = vmatprep.subr.bf16.mxu0 0
        %864 = vmatpush1.bf16.msra.mxu0 0
        %865 = vmatprep.subr.bf16.mxu0 0
        %866 = vmatpush1.bf16.msra.mxu0 0
        %867 = vmatprep.subr.bf16.mxu0 0
        %868 = vmatpush1.bf16.msra.mxu0 0
        %869 = vmatprep.subr.bf16.mxu0 0
        %870 = vmatpush1.bf16.msra.mxu0 0
        %871 = vmatprep.subr.bf16.mxu0 0
        %872 = vmatpush1.bf16.msra.mxu0 0
        %873 = vmatprep.subr.bf16.mxu0 0
        %874 = vmatpush1.bf16.msra.mxu0 0
        %875 = vmatprep.subr.bf16.mxu0 0
        %876 = vmatpush1.bf16.msra.mxu0 0
        %877 = vmatprep.subr.bf16.mxu0 0
        %878 = vmatpush1.bf16.msra.mxu0 0
        %879 = vmatprep.subr.bf16.mxu0 0
        %880 = vmatpush1.bf16.msra.mxu0 0
        %881 = vmatprep.subr.bf16.mxu0 0
        %882 = vmatpush1.bf16.msra.mxu0 0
        %883 = vmatprep.mubr.bf16.mxu0 0
        %884 = vmatmul.mubr.bf16.gmra.mrb[0].mxu0 %v849
        %v885 = vpop.f32.mrb[0].mxu0
        %v886 = vadd.f32 0.0, %v885
        %v887 = vpop.f32.mrb[0].mxu0
        %v888 = vpop.f32.mrb[0].mxu0
        %v889 = vadd.f32 0.0, %v888
        %v890 = vpop.f32.mrb[0].mxu0
        %891 = vdwg.mxu0
        %v892 = vpack.c.bf16 %v889, %v886
        %894 = vrot.lane.b32.xlu0 %v648, 32
        %v895 = vpop.permute.xlu0 %894
        %897 = vrot.lane.b32.xlu0 %v770, 64
        %v898 = vpop.permute.xlu0 %897
        %900 = vrot.lane.b32.xlu0 %v892, 96
        %v901 = vpop.permute.xlu0 %900
        %v904 = vsel %vm404, %v526, %v895
        %vm905 = vcmask 523264
        %v907 = vsel %vm905, %v904, %v898
        %vm908 = vcmask 785408
        %v910 = vsel %vm908, %v907, %v901
        %v912 = vunpack.c.l.b16 %v910
        %v913 = vunpack.c.h.b16 %v910
        %v914 = vpack.c.b16 %v912, %v912
        %v915 = vpack.c.b16 %v913, %v913
        %918 = vst [vmem:[%s378] sm:$0xf] %v914
        %919 = vst [vmem:[%s378 + $0x4] sm:$0xf] %v915
        %s920 = smul.u32 2, %s19
        %p921 = scmp.lt.s32.totalorder %s18, 1
        %s922 = scalar_select %p921, %s18, 1
        %p923 = scmp.lt.s32.totalorder %s920, 1
        %s924 = scalar_select %p923, %s920, 1
        %s925 = smul.addr %s922, 2
        %s926 = sadd.s32 %s924, %s925
        %s927 = smul.addr %s926, 4
        %s928 = scalar_lea.vmem %s3, %s927
        // Predicated region
        $region156: #{vit_custom_forward.16} parent=142 // pred_check
          %p929 = pneg %p126
        $region157: #{vit_custom_forward.16} parent=142 // pred_check_branch
          %931 = sbr.rel (%p929) target = $region159
        $region158: #{vit_custom_forward.16} parent=142 // pred_region
          %s932 = smul.u32 2, %s19
        $region159: #{vit_custom_forward.16} parent=142 // pred_fallthru
          _
      $region143: #{vit_custom_forward.16} parent=5 // pred_fallthru
        _
      %p933 = scmp.le.s32.totalorder 2, %s9
      // Predicated region
      $region160: #{vit_custom_forward.16} parent=5 // pred_check
        %p934 = pneg %p933
      $region161: #{vit_custom_forward.16} parent=5 // pred_check_branch
        %936 = sbr.rel (%p934) target = $region163
      $region162: #{vit_custom_forward.16} parent=5 // pred_region
        %s937 = ssub.s32 %s9, 2
        // Predicated region
        $region164: #{vit_custom_forward.16} parent=162 // pred_check
          %p938 = pneg %p132
        $region165: #{vit_custom_forward.16} parent=162 // pred_check_branch
          %940 = sbr.rel (%p938) target = $region167
        $region166: #{vit_custom_forward.16} parent=162 // pred_region
          %s941 = smul.u32 2, %s21
          %p942 = scmp.lt.s32.totalorder %s20, 1
          %s943 = scalar_select %p942, %s20, 1
          %p944 = scmp.lt.s32.totalorder %s941, 1
          %s945 = scalar_select %p944, %s941, 1
          %s946 = smul.addr %s943, 2
          %s947 = sadd.s32 %s945, %s946
          %s948 = smul.addr %s947, 4
          %s949 = scalar_lea.vmem %s3, %s948
        $region167: #{vit_custom_forward.16} parent=162 // pred_fallthru
          _
      $region163: #{vit_custom_forward.16} parent=5 // pred_fallthru
        _
    $region6: #{vit_custom_forward.16} parent=1 // loop_footer
      %s13 = sadd.s32 1, %s9
    $region7: #{vit_custom_forward.16} parent=1 // loop_footer_branch
      %8 = sbr.rel target = $region3
    $region8: #{vit_custom_forward.16} parent=1 // loop_exit
      _

// kernel: vit_custom_forward.17
$region0: #{vit_custom_forward.17}
  #allocation0 [shape = 'u32[]', space=smem, size = 0x4, offset = 0x4, fixed_abs, tag = 'smem constant byte address 0x4 - core index']
  #allocation1 [shape = 'u32[144,128]{1,0:T(1,128)}', space=vmem, size = 0x12000, scoped, tag = 'internal scratch']
  %s0 = inlined_call_operand.vmem [shape: bf16[32,128], index: 0, kind: input, shape index: {}]
  %s1 = inlined_call_operand.vmem [shape: bf16[128,128], index: 1, kind: input, shape index: {}]
  %s2 = inlined_call_operand.vmem [shape: f32[1,128], index: 2, kind: input, shape index: {}]
  %s3 = inlined_call_operand.vmem [shape: bf16[32,128], index: 3, kind: input, shape index: {}, may-alias: {3,4}]
  %s4 = inlined_call_operand.vmem [shape: bf16[32,128], index: 4, kind: output, shape index: {}, may-alias: {3,4}]
  %s5 = sld [smem:[#allocation0]]
  $region26: #{vit_custom_forward.17} parent=0
    _
  %s7 = ssub.s32 1, %s5
  %s8 = scalar_select 0, %s7, %s5
  // Predicated region
  $region2: #{vit_custom_forward.17} parent=0 // pred_check
    _
  $region3: #{vit_custom_forward.17} parent=0 // pred_check_branch
    %10 = sbr.rel (0) target = $region5
  $region4: #{vit_custom_forward.17} parent=0 // pred_region
    _
  $region5: #{vit_custom_forward.17} parent=0 // pred_fallthru
    _
  // Predicated region
  $region6: #{vit_custom_forward.17} parent=0 // pred_check
    _
  $region7: #{vit_custom_forward.17} parent=0 // pred_check_branch
    %12 = sbr.rel (0) target = $region9
  $region8: #{vit_custom_forward.17} parent=0 // pred_region
    _
  $region9: #{vit_custom_forward.17} parent=0 // pred_fallthru
    _
  // Predicated region
  $region10: #{vit_custom_forward.17} parent=0 // pred_check
    _
  $region11: #{vit_custom_forward.17} parent=0 // pred_check_branch
    %14 = sbr.rel (0) target = $region13
  $region12: #{vit_custom_forward.17} parent=0 // pred_region
    _
  $region13: #{vit_custom_forward.17} parent=0 // pred_fallthru
    _
  // Predicated region
  $region14: #{vit_custom_forward.17} parent=0 // pred_check
    _
  $region15: #{vit_custom_forward.17} parent=0 // pred_check_branch
    %16 = sbr.rel (0) target = $region17
  $region16: #{vit_custom_forward.17} parent=0 // pred_region
    _
  $region17: #{vit_custom_forward.17} parent=0 // pred_fallthru
    _
  %v18 = vld [vmem:[%s0] sm:$0xf]
  %v19 = vld [vmem:[%s0 + $0x4] sm:$0xf]
  %v20 = vld [vmem:[%s0 + $0x8] sm:$0xf]
  %v21 = vld [vmem:[%s0 + $0xc] sm:$0xf]
  %v22 = vld [vmem:[%s1] sm:$0xf]
  %v23 = vld [vmem:[%s1 + $0x4] sm:$0xf]
  %v24 = vld [vmem:[%s1 + $0x8] sm:$0xf]
  %v25 = vld [vmem:[%s1 + $0xc] sm:$0xf]
  %v26 = vld [vmem:[%s1 + $0x10] sm:$0xf]
  %v27 = vld [vmem:[%s1 + $0x14] sm:$0xf]
  %v28 = vld [vmem:[%s1 + $0x18] sm:$0xf]
  %v29 = vld [vmem:[%s1 + $0x1c] sm:$0xf]
  %v30 = vld [vmem:[%s1 + $0x20] sm:$0xf]
  %v31 = vld [vmem:[%s1 + $0x24] sm:$0xf]
  %v32 = vld [vmem:[%s1 + $0x28] sm:$0xf]
  %v33 = vld [vmem:[%s1 + $0x2c] sm:$0xf]
  %v34 = vld [vmem:[%s1 + $0x30] sm:$0xf]
  %v35 = vld [vmem:[%s1 + $0x34] sm:$0xf]
  %v36 = vld [vmem:[%s1 + $0x38] sm:$0xf]
  %v37 = vld [vmem:[%s1 + $0x3c] sm:$0xf]
  %v38 = vld [vmem:[%s2] sm:$0x1]
  %v40 = vlaneseq
  %v41 = vshrl.u32 %v40, 7
  %v42 = vsub.s32 0, %v41
  %v43 = vrot.slane %v38, %v42
  %v49 = vunpack.c.l.b16 %v18
  %v50 = vunpack.c.l.b16 %v19
  %v51 = vunpack.c.l.b16 %v20
  %v52 = vunpack.c.l.b16 %v21
  %v53 = vpack.c.b16 %v50, %v49
  %v54 = vpack.c.b16 %v52, %v51
  %v73 = vunpack.c.l.b16 %v22
  %v74 = vunpack.c.l.b16 %v23
  %v75 = vunpack.c.l.b16 %v24
  %v76 = vunpack.c.l.b16 %v25
  %v77 = vunpack.c.l.b16 %v26
  %v78 = vunpack.c.l.b16 %v27
  %v79 = vunpack.c.l.b16 %v28
  %v80 = vunpack.c.l.b16 %v29
  %v81 = vunpack.c.l.b16 %v30
  %v82 = vunpack.c.l.b16 %v31
  %v83 = vunpack.c.l.b16 %v32
  %v84 = vunpack.c.l.b16 %v33
  %v85 = vunpack.c.l.b16 %v34
  %v86 = vunpack.c.l.b16 %v35
  %v87 = vunpack.c.l.b16 %v36
  %v88 = vunpack.c.l.b16 %v37
  %v89 = vpack.c.b16 %v74, %v73
  %v90 = vpack.c.b16 %v76, %v75
  %v91 = vpack.c.b16 %v78, %v77
  %v92 = vpack.c.b16 %v80, %v79
  %v93 = vpack.c.b16 %v82, %v81
  %v94 = vpack.c.b16 %v84, %v83
  %v95 = vpack.c.b16 %v86, %v85
  %v96 = vpack.c.b16 %v88, %v87
  %105 = vmatprep.subr.bf16.mxu0 0
  %106 = vmatpush1.bf16.msra.mxu0 %v89
  %107 = vmatprep.subr.bf16.mxu0 0
  %108 = vmatpush1.bf16.msra.mxu0 %v90
  %109 = vmatprep.subr.bf16.mxu0 0
  %110 = vmatpush1.bf16.msra.mxu0 %v91
  %111 = vmatprep.subr.bf16.mxu0 0
  %112 = vmatpush1.bf16.msra.mxu0 %v92
  %113 = vmatprep.subr.bf16.mxu0 0
  %114 = vmatpush1.bf16.msra.mxu0 %v93
  %115 = vmatprep.subr.bf16.mxu0 0
  %116 = vmatpush1.bf16.msra.mxu0 %v94
  %117 = vmatprep.subr.bf16.mxu0 0
  %118 = vmatpush1.bf16.msra.mxu0 %v95
  %119 = vmatprep.subr.bf16.mxu0 0
  %120 = vmatpush1.bf16.msra.mxu0 %v96
  %121 = vmatprep.subr.bf16.mxu0 0
  %122 = vmatpush1.bf16.msra.mxu0 0
  %123 = vmatprep.subr.bf16.mxu0 0
  %124 = vmatpush1.bf16.msra.mxu0 0
  %125 = vmatprep.subr.bf16.mxu0 0
  %126 = vmatpush1.bf16.msra.mxu0 0
  %127 = vmatprep.subr.bf16.mxu0 0
  %128 = vmatpush1.bf16.msra.mxu0 0
  %129 = vmatprep.subr.bf16.mxu0 0
  %130 = vmatpush1.bf16.msra.mxu0 0
  %131 = vmatprep.subr.bf16.mxu0 0
  %132 = vmatpush1.bf16.msra.mxu0 0
  %133 = vmatprep.subr.bf16.mxu0 0
  %134 = vmatpush1.bf16.msra.mxu0 0
  %135 = vmatprep.subr.bf16.mxu0 0
  %136 = vmatpush1.bf16.msra.mxu0 0
  %137 = vmatprep.mubr.bf16.mxu0 0
  %138 = vmatmul.mubr.bf16.gmra.mrb[0].mxu0 %v53
  %v139 = vpop.f32.mrb[0].mxu0
  %v140 = vadd.f32 %v43, %v139
  %v141 = vpop.f32.mrb[0].mxu0
  %v142 = vpop.f32.mrb[0].mxu0
  %v143 = vadd.f32 %v43, %v142
  %v144 = vpop.f32.mrb[0].mxu0
  %145 = vmatprep.mubr.bf16.mxu0 0
  %146 = vmatmul.mubr.bf16.gmra.mrb[0].mxu0 %v54
  %v147 = vpop.f32.mrb[0].mxu0
  %v148 = vadd.f32 %v43, %v147
  %v149 = vpop.f32.mrb[0].mxu0
  %v150 = vpop.f32.mrb[0].mxu0
  %v151 = vadd.f32 %v43, %v150
  %v152 = vpop.f32.mrb[0].mxu0
  %153 = vdwg.mxu0
  %v154 = vld [vmem:[%s3] sm:$0xf]
  %v155 = vld [vmem:[%s3 + $0x4] sm:$0xf]
  %v156 = vld [vmem:[%s3 + $0x8] sm:$0xf]
  %v157 = vld [vmem:[%s3 + $0xc] sm:$0xf]
  %v158 = vunpack.c.l.bf16 %v154
  %v159 = vunpack.c.l.bf16 %v155
  %v160 = vunpack.c.l.bf16 %v156
  %v161 = vunpack.c.l.bf16 %v157
  %v162 = vadd.f32 %v140, %v158
  %v163 = vadd.f32 %v143, %v159
  %v164 = vadd.f32 %v148, %v160
  %v165 = vadd.f32 %v151, %v161
  %v166 = vpack.c.bf16 %v163, %v162
  %v167 = vpack.c.bf16 %v165, %v164
  %v170 = vunpack.c.l.b16 %v166
  %v171 = vunpack.c.h.b16 %v166
  %v172 = vunpack.c.l.b16 %v167
  %v173 = vunpack.c.h.b16 %v167
  %v174 = vpack.c.b16 %v170, %v170
  %v175 = vpack.c.b16 %v171, %v171
  %v176 = vpack.c.b16 %v172, %v172
  %v177 = vpack.c.b16 %v173, %v173
  %182 = vst [vmem:[%s4] sm:$0xf] %v174
  %183 = vst [vmem:[%s4 + $0x4] sm:$0xf] %v175
  %184 = vst [vmem:[%s4 + $0x8] sm:$0xf] %v176
  %185 = vst [vmem:[%s4 + $0xc] sm:$0xf] %v177
  // Predicated region
  $region18: #{vit_custom_forward.17} parent=0 // pred_check
    _
  $region19: #{vit_custom_forward.17} parent=0 // pred_check_branch
    %187 = sbr.rel (0) target = $region21
  $region20: #{vit_custom_forward.17} parent=0 // pred_region
    _
  $region21: #{vit_custom_forward.17} parent=0 // pred_fallthru
    _
  // Predicated region
  $region22: #{vit_custom_forward.17} parent=0 // pred_check
    _
  $region23: #{vit_custom_forward.17} parent=0 // pred_check_branch
    %189 = sbr.rel (0) target = $region25
  $region24: #{vit_custom_forward.17} parent=0 // pred_region
    _
  $region25: #{vit_custom_forward.17} parent=0 // pred_fallthru
    _

// kernel: vit_custom_forward.19
$region0: #{vit_custom_forward.19}
  #allocation0 [shape = 'u32[]', space=smem, size = 0x4, offset = 0x4, fixed_abs, tag = 'smem constant byte address 0x4 - core index']
  #allocation1 [shape = 'u32[144,128]{1,0:T(1,128)}', space=vmem, size = 0x12000, scoped, tag = 'internal scratch']
  %s0 = inlined_call_operand.vmem [shape: bf16[32,256], index: 0, kind: input, shape index: {}]
  %s1 = inlined_call_operand.vmem [shape: bf16[256,128], index: 1, kind: input, shape index: {}]
  %s2 = inlined_call_operand.vmem [shape: f32[1,128], index: 2, kind: input, shape index: {}]
  %s3 = inlined_call_operand.vmem [shape: bf16[32,128], index: 3, kind: input, shape index: {}, may-alias: {3,4}]
  %s4 = inlined_call_operand.vmem [shape: bf16[32,128], index: 4, kind: output, shape index: {}, may-alias: {3,4}]
  %s5 = sld [smem:[#allocation0]]
  $region26: #{vit_custom_forward.19} parent=0
    _
  %s7 = ssub.s32 1, %s5
  %s8 = scalar_select 0, %s7, %s5
  // Predicated region
  $region2: #{vit_custom_forward.19} parent=0 // pred_check
    _
  $region3: #{vit_custom_forward.19} parent=0 // pred_check_branch
    %10 = sbr.rel (0) target = $region5
  $region4: #{vit_custom_forward.19} parent=0 // pred_region
    _
  $region5: #{vit_custom_forward.19} parent=0 // pred_fallthru
    _
  // Predicated region
  $region6: #{vit_custom_forward.19} parent=0 // pred_check
    _
  $region7: #{vit_custom_forward.19} parent=0 // pred_check_branch
    %12 = sbr.rel (0) target = $region9
  $region8: #{vit_custom_forward.19} parent=0 // pred_region
    _
  $region9: #{vit_custom_forward.19} parent=0 // pred_fallthru
    _
  // Predicated region
  $region10: #{vit_custom_forward.19} parent=0 // pred_check
    _
  $region11: #{vit_custom_forward.19} parent=0 // pred_check_branch
    %14 = sbr.rel (0) target = $region13
  $region12: #{vit_custom_forward.19} parent=0 // pred_region
    _
  $region13: #{vit_custom_forward.19} parent=0 // pred_fallthru
    _
  // Predicated region
  $region14: #{vit_custom_forward.19} parent=0 // pred_check
    _
  $region15: #{vit_custom_forward.19} parent=0 // pred_check_branch
    %16 = sbr.rel (0) target = $region17
  $region16: #{vit_custom_forward.19} parent=0 // pred_region
    _
  $region17: #{vit_custom_forward.19} parent=0 // pred_fallthru
    _
  %v18 = vld [vmem:[%s0] sm:$0xff]
  %v19 = vld [vmem:[%s0 + $0x8] sm:$0xff]
  %v20 = vld [vmem:[%s0 + $0x10] sm:$0xff]
  %v21 = vld [vmem:[%s0 + $0x18] sm:$0xff]
  %v22 = vld [vmem:[%s1] sm:$0xf]
  %v23 = vld [vmem:[%s1 + $0x4] sm:$0xf]
  %v24 = vld [vmem:[%s1 + $0x8] sm:$0xf]
  %v25 = vld [vmem:[%s1 + $0xc] sm:$0xf]
  %v26 = vld [vmem:[%s1 + $0x10] sm:$0xf]
  %v27 = vld [vmem:[%s1 + $0x14] sm:$0xf]
  %v28 = vld [vmem:[%s1 + $0x18] sm:$0xf]
  %v29 = vld [vmem:[%s1 + $0x1c] sm:$0xf]
  %v30 = vld [vmem:[%s1 + $0x20] sm:$0xf]
  %v31 = vld [vmem:[%s1 + $0x24] sm:$0xf]
  %v32 = vld [vmem:[%s1 + $0x28] sm:$0xf]
  %v33 = vld [vmem:[%s1 + $0x2c] sm:$0xf]
  %v34 = vld [vmem:[%s1 + $0x30] sm:$0xf]
  %v35 = vld [vmem:[%s1 + $0x34] sm:$0xf]
  %v36 = vld [vmem:[%s1 + $0x38] sm:$0xf]
  %v37 = vld [vmem:[%s1 + $0x3c] sm:$0xf]
  %v38 = vld [vmem:[%s1 + $0x40] sm:$0xf]
  %v39 = vld [vmem:[%s1 + $0x44] sm:$0xf]
  %v40 = vld [vmem:[%s1 + $0x48] sm:$0xf]
  %v41 = vld [vmem:[%s1 + $0x4c] sm:$0xf]
  %v42 = vld [vmem:[%s1 + $0x50] sm:$0xf]
  %v43 = vld [vmem:[%s1 + $0x54] sm:$0xf]
  %v44 = vld [vmem:[%s1 + $0x58] sm:$0xf]
  %v45 = vld [vmem:[%s1 + $0x5c] sm:$0xf]
  %v46 = vld [vmem:[%s1 + $0x60] sm:$0xf]
  %v47 = vld [vmem:[%s1 + $0x64] sm:$0xf]
  %v48 = vld [vmem:[%s1 + $0x68] sm:$0xf]
  %v49 = vld [vmem:[%s1 + $0x6c] sm:$0xf]
  %v50 = vld [vmem:[%s1 + $0x70] sm:$0xf]
  %v51 = vld [vmem:[%s1 + $0x74] sm:$0xf]
  %v52 = vld [vmem:[%s1 + $0x78] sm:$0xf]
  %v53 = vld [vmem:[%s1 + $0x7c] sm:$0xf]
  %v54 = vld [vmem:[%s2] sm:$0x1]
  %v56 = vlaneseq
  %v57 = vshrl.u32 %v56, 7
  %v58 = vsub.s32 0, %v57
  %v59 = vrot.slane %v54, %v58
  %v65 = vunpack.c.l.b16 %v18
  %v66 = vunpack.c.h.b16 %v18
  %v67 = vunpack.c.l.b16 %v19
  %v68 = vunpack.c.h.b16 %v19
  %v69 = vunpack.c.l.b16 %v20
  %v70 = vunpack.c.h.b16 %v20
  %v71 = vunpack.c.l.b16 %v21
  %v72 = vunpack.c.h.b16 %v21
  %v73 = vpack.c.b16 %v67, %v65
  %v74 = vpack.c.b16 %v68, %v66
  %v75 = vpack.c.b16 %v71, %v69
  %v76 = vpack.c.b16 %v72, %v70
  %v113 = vunpack.c.l.b16 %v22
  %v114 = vunpack.c.l.b16 %v23
  %v115 = vunpack.c.l.b16 %v24
  %v116 = vunpack.c.l.b16 %v25
  %v117 = vunpack.c.l.b16 %v26
  %v118 = vunpack.c.l.b16 %v27
  %v119 = vunpack.c.l.b16 %v28
  %v120 = vunpack.c.l.b16 %v29
  %v121 = vunpack.c.l.b16 %v30
  %v122 = vunpack.c.l.b16 %v31
  %v123 = vunpack.c.l.b16 %v32
  %v124 = vunpack.c.l.b16 %v33
  %v125 = vunpack.c.l.b16 %v34
  %v126 = vunpack.c.l.b16 %v35
  %v127 = vunpack.c.l.b16 %v36
  %v128 = vunpack.c.l.b16 %v37
  %v129 = vunpack.c.l.b16 %v38
  %v130 = vunpack.c.l.b16 %v39
  %v131 = vunpack.c.l.b16 %v40
  %v132 = vunpack.c.l.b16 %v41
  %v133 = vunpack.c.l.b16 %v42
  %v134 = vunpack.c.l.b16 %v43
  %v135 = vunpack.c.l.b16 %v44
  %v136 = vunpack.c.l.b16 %v45
  %v137 = vunpack.c.l.b16 %v46
  %v138 = vunpack.c.l.b16 %v47
  %v139 = vunpack.c.l.b16 %v48
  %v140 = vunpack.c.l.b16 %v49
  %v141 = vunpack.c.l.b16 %v50
  %v142 = vunpack.c.l.b16 %v51
  %v143 = vunpack.c.l.b16 %v52
  %v144 = vunpack.c.l.b16 %v53
  %v145 = vpack.c.b16 %v114, %v113
  %v146 = vpack.c.b16 %v116, %v115
  %v147 = vpack.c.b16 %v118, %v117
  %v148 = vpack.c.b16 %v120, %v119
  %v149 = vpack.c.b16 %v122, %v121
  %v150 = vpack.c.b16 %v124, %v123
  %v151 = vpack.c.b16 %v126, %v125
  %v152 = vpack.c.b16 %v128, %v127
  %v153 = vpack.c.b16 %v130, %v129
  %v154 = vpack.c.b16 %v132, %v131
  %v155 = vpack.c.b16 %v134, %v133
  %v156 = vpack.c.b16 %v136, %v135
  %v157 = vpack.c.b16 %v138, %v137
  %v158 = vpack.c.b16 %v140, %v139
  %v159 = vpack.c.b16 %v142, %v141
  %v160 = vpack.c.b16 %v144, %v143
  %177 = vmatprep.subr.bf16.mxu0 0
  %178 = vmatpush1.bf16.msra.mxu0 %v145
  %179 = vmatprep.subr.bf16.mxu0 0
  %180 = vmatpush1.bf16.msra.mxu0 %v146
  %181 = vmatprep.subr.bf16.mxu0 0
  %182 = vmatpush1.bf16.msra.mxu0 %v147
  %183 = vmatprep.subr.bf16.mxu0 0
  %184 = vmatpush1.bf16.msra.mxu0 %v148
  %185 = vmatprep.subr.bf16.mxu0 0
  %186 = vmatpush1.bf16.msra.mxu0 %v149
  %187 = vmatprep.subr.bf16.mxu0 0
  %188 = vmatpush1.bf16.msra.mxu0 %v150
  %189 = vmatprep.subr.bf16.mxu0 0
  %190 = vmatpush1.bf16.msra.mxu0 %v151
  %191 = vmatprep.subr.bf16.mxu0 0
  %192 = vmatpush1.bf16.msra.mxu0 %v152
  %193 = vmatprep.subr.bf16.mxu0 0
  %194 = vmatpush1.bf16.msra.mxu0 %v153
  %195 = vmatprep.subr.bf16.mxu0 0
  %196 = vmatpush1.bf16.msra.mxu0 %v154
  %197 = vmatprep.subr.bf16.mxu0 0
  %198 = vmatpush1.bf16.msra.mxu0 %v155
  %199 = vmatprep.subr.bf16.mxu0 0
  %200 = vmatpush1.bf16.msra.mxu0 %v156
  %201 = vmatprep.subr.bf16.mxu0 0
  %202 = vmatpush1.bf16.msra.mxu0 %v157
  %203 = vmatprep.subr.bf16.mxu0 0
  %204 = vmatpush1.bf16.msra.mxu0 %v158
  %205 = vmatprep.subr.bf16.mxu0 0
  %206 = vmatpush1.bf16.msra.mxu0 %v159
  %207 = vmatprep.subr.bf16.mxu0 0
  %208 = vmatpush1.bf16.msra.mxu0 %v160
  %209 = vmatprep.mubr.bf16.mxu0 %v74
  %210 = vmatmul.mubr.bf16.gmra.mrb[0].mxu0 %v73
  %v211 = vpop.f32.mrb[0].mxu0
  %v212 = vadd.f32 %v59, %v211
  %v213 = vpop.f32.mrb[0].mxu0
  %v214 = vpop.f32.mrb[0].mxu0
  %v215 = vadd.f32 %v59, %v214
  %v216 = vpop.f32.mrb[0].mxu0
  %217 = vmatprep.mubr.bf16.mxu0 %v76
  %218 = vmatmul.mubr.bf16.gmra.mrb[0].mxu0 %v75
  %v219 = vpop.f32.mrb[0].mxu0
  %v220 = vadd.f32 %v59, %v219
  %v221 = vpop.f32.mrb[0].mxu0
  %v222 = vpop.f32.mrb[0].mxu0
  %v223 = vadd.f32 %v59, %v222
  %v224 = vpop.f32.mrb[0].mxu0
  %225 = vdwg.mxu0
  %v226 = vld [vmem:[%s3] sm:$0xf]
  %v227 = vld [vmem:[%s3 + $0x4] sm:$0xf]
  %v228 = vld [vmem:[%s3 + $0x8] sm:$0xf]
  %v229 = vld [vmem:[%s3 + $0xc] sm:$0xf]
  %v230 = vunpack.c.l.bf16 %v226
  %v231 = vunpack.c.l.bf16 %v227
  %v232 = vunpack.c.l.bf16 %v228
  %v233 = vunpack.c.l.bf16 %v229
  %v234 = vadd.f32 %v212, %v230
  %v235 = vadd.f32 %v215, %v231
  %v236 = vadd.f32 %v220, %v232
  %v237 = vadd.f32 %v223, %v233
  %v238 = vpack.c.bf16 %v235, %v234
  %v239 = vpack.c.bf16 %v237, %v236
  %v242 = vunpack.c.l.b16 %v238
  %v243 = vunpack.c.h.b16 %v238
  %v244 = vunpack.c.l.b16 %v239
  %v245 = vunpack.c.h.b16 %v239
  %v246 = vpack.c.b16 %v242, %v242
  %v247 = vpack.c.b16 %v243, %v243
  %v248 = vpack.c.b16 %v244, %v244
  %v249 = vpack.c.b16 %v245, %v245
  %254 = vst [vmem:[%s4] sm:$0xf] %v246
  %255 = vst [vmem:[%s4 + $0x4] sm:$0xf] %v247
  %256 = vst [vmem:[%s4 + $0x8] sm:$0xf] %v248
  %257 = vst [vmem:[%s4 + $0xc] sm:$0xf] %v249
  // Predicated region
  $region18: #{vit_custom_forward.19} parent=0 // pred_check
    _
  $region19: #{vit_custom_forward.19} parent=0 // pred_check_branch
    %259 = sbr.rel (0) target = $region21
  $region20: #{vit_custom_forward.19} parent=0 // pred_region
    _
  $region21: #{vit_custom_forward.19} parent=0 // pred_fallthru
    _
  // Predicated region
  $region22: #{vit_custom_forward.19} parent=0 // pred_check
    _
  $region23: #{vit_custom_forward.19} parent=0 // pred_check_branch
    %261 = sbr.rel (0) target = $region25
  $region24: #{vit_custom_forward.19} parent=0 // pred_region
    _
  $region25: #{vit_custom_forward.19} parent=0 // pred_fallthru
    _

// kernel: vit_custom_forward.18
$region0: #{vit_custom_forward.18}
  #allocation0 [shape = 'u32[]', space=smem, size = 0x4, offset = 0x4, fixed_abs, tag = 'smem constant byte address 0x4 - core index']
  #allocation1 [shape = 'u32[144,128]{1,0:T(1,128)}', space=vmem, size = 0x12000, scoped, tag = 'internal scratch']
  %s0 = inlined_call_operand.vmem [shape: bf16[32,128], index: 0, kind: input, shape index: {}]
  %s1 = inlined_call_operand.vmem [shape: bf16[128,256], index: 1, kind: input, shape index: {}]
  %s2 = inlined_call_operand.vmem [shape: f32[1,128], index: 2, kind: input, shape index: {}]
  %s3 = inlined_call_operand.vmem [shape: f32[1,128], index: 3, kind: input, shape index: {}]
  %s4 = inlined_call_operand.vmem [shape: f32[1,256], index: 4, kind: input, shape index: {}]
  %s5 = inlined_call_operand.vmem [shape: bf16[32,256], index: 5, kind: output, shape index: {}]
  %s6 = sld [smem:[#allocation0]]
  $region30: #{vit_custom_forward.18} parent=0
    _
  %s8 = ssub.s32 1, %s6
  %s9 = scalar_select 0, %s8, %s6
  // Predicated region
  $region2: #{vit_custom_forward.18} parent=0 // pred_check
    _
  $region3: #{vit_custom_forward.18} parent=0 // pred_check_branch
    %11 = sbr.rel (0) target = $region5
  $region4: #{vit_custom_forward.18} parent=0 // pred_region
    _
  $region5: #{vit_custom_forward.18} parent=0 // pred_fallthru
    _
  // Predicated region
  $region6: #{vit_custom_forward.18} parent=0 // pred_check
    _
  $region7: #{vit_custom_forward.18} parent=0 // pred_check_branch
    %13 = sbr.rel (0) target = $region9
  $region8: #{vit_custom_forward.18} parent=0 // pred_region
    _
  $region9: #{vit_custom_forward.18} parent=0 // pred_fallthru
    _
  // Predicated region
  $region10: #{vit_custom_forward.18} parent=0 // pred_check
    _
  $region11: #{vit_custom_forward.18} parent=0 // pred_check_branch
    %15 = sbr.rel (0) target = $region13
  $region12: #{vit_custom_forward.18} parent=0 // pred_region
    _
  $region13: #{vit_custom_forward.18} parent=0 // pred_fallthru
    _
  // Predicated region
  $region14: #{vit_custom_forward.18} parent=0 // pred_check
    _
  $region15: #{vit_custom_forward.18} parent=0 // pred_check_branch
    %17 = sbr.rel (0) target = $region17
  $region16: #{vit_custom_forward.18} parent=0 // pred_region
    _
  $region17: #{vit_custom_forward.18} parent=0 // pred_fallthru
    _
  // Predicated region
  $region18: #{vit_custom_forward.18} parent=0 // pred_check
    _
  $region19: #{vit_custom_forward.18} parent=0 // pred_check_branch
    %19 = sbr.rel (0) target = $region21
  $region20: #{vit_custom_forward.18} parent=0 // pred_region
    _
  $region21: #{vit_custom_forward.18} parent=0 // pred_fallthru
    _
  %v21 = vld [vmem:[%s0] sm:$0xf]
  %v22 = vld [vmem:[%s0 + $0x4] sm:$0xf]
  %v23 = vld [vmem:[%s0 + $0x8] sm:$0xf]
  %v24 = vld [vmem:[%s0 + $0xc] sm:$0xf]
  %v25 = vunpack.c.l.bf16 %v21
  %v26 = vunpack.c.l.bf16 %v22
  %v27 = vunpack.c.l.bf16 %v23
  %v28 = vunpack.c.l.bf16 %v24
  %v29 = vld [vmem:[%s2] sm:$0x1]
  %v30 = vld [vmem:[%s3] sm:$0x1]
  %31 = vadd.xlane.f32.xlu0 %v25
  %v32 = vpop.xlane.xlu0 %31
  %33 = vadd.xlane.f32.xlu0 %v26
  %v34 = vpop.xlane.xlu0 %33
  %35 = vadd.xlane.f32.xlu0 %v27
  %v36 = vpop.xlane.xlu0 %35
  %37 = vadd.xlane.f32.xlu0 %v28
  %v38 = vpop.xlane.xlu0 %37
  %v39 = vrcp.pop 128.0
  %v40 = vmul.f32 %v32, %v39
  %v41 = vmul.f32 %v34, %v39
  %v42 = vmul.f32 %v36, %v39
  %v43 = vmul.f32 %v38, %v39
  %v44 = vsub.f32 %v25, %v40
  %v45 = vsub.f32 %v26, %v41
  %v46 = vsub.f32 %v27, %v42
  %v47 = vsub.f32 %v28, %v43
  %v48 = vmul.f32 %v44, %v44
  %v49 = vmul.f32 %v45, %v45
  %v50 = vmul.f32 %v46, %v46
  %v51 = vmul.f32 %v47, %v47
  %52 = vadd.xlane.f32.xlu0 %v48
  %v53 = vpop.xlane.xlu0 %52
  %54 = vadd.xlane.f32.xlu0 %v49
  %v55 = vpop.xlane.xlu0 %54
  %56 = vadd.xlane.f32.xlu0 %v50
  %v57 = vpop.xlane.xlu0 %56
  %58 = vadd.xlane.f32.xlu0 %v51
  %v59 = vpop.xlane.xlu0 %58
  %v60 = vmul.f32 %v53, %v39
  %v61 = vmul.f32 %v55, %v39
  %v62 = vmul.f32 %v57, %v39
  %v63 = vmul.f32 %v59, %v39
  %v64 = vadd.f32 %v60, 1e-05
  %v65 = vadd.f32 %v61, 1e-05
  %v66 = vadd.f32 %v62, 1e-05
  %v67 = vadd.f32 %v63, 1e-05
  %v68 = vrsqrt.pop %v64
  %v69 = vrsqrt.pop %v65
  %v70 = vrsqrt.pop %v66
  %v71 = vrsqrt.pop %v67
  %v72 = vmul.f32 %v44, %v68
  %v73 = vmul.f32 %v45, %v69
  %v74 = vmul.f32 %v46, %v70
  %v75 = vmul.f32 %v47, %v71
  %v77 = vlaneseq
  %v78 = vshrl.u32 %v77, 7
  %v79 = vsub.s32 0, %v78
  %v80 = vrot.slane %v29, %v79
  %v82 = vmul.f32 %v72, %v80
  %v83 = vmul.f32 %v73, %v80
  %v84 = vmul.f32 %v74, %v80
  %v85 = vmul.f32 %v75, %v80
  %v87 = vlaneseq
  %v88 = vshrl.u32 %v87, 7
  %v89 = vsub.s32 0, %v88
  %v90 = vrot.slane %v30, %v89
  %v92 = vadd.f32 %v82, %v90
  %v93 = vadd.f32 %v83, %v90
  %v94 = vadd.f32 %v84, %v90
  %v95 = vadd.f32 %v85, %v90
  %v96 = vpack.c.bf16 %v93, %v92
  %v97 = vpack.c.bf16 %v95, %v94
  %v98 = vld [vmem:[%s1] sm:$0xff]
  %v99 = vld [vmem:[%s1 + $0x8] sm:$0xff]
  %v100 = vld [vmem:[%s1 + $0x10] sm:$0xff]
  %v101 = vld [vmem:[%s1 + $0x18] sm:$0xff]
  %v102 = vld [vmem:[%s1 + $0x20] sm:$0xff]
  %v103 = vld [vmem:[%s1 + $0x28] sm:$0xff]
  %v104 = vld [vmem:[%s1 + $0x30] sm:$0xff]
  %v105 = vld [vmem:[%s1 + $0x38] sm:$0xff]
  %v106 = vld [vmem:[%s1 + $0x40] sm:$0xff]
  %v107 = vld [vmem:[%s1 + $0x48] sm:$0xff]
  %v108 = vld [vmem:[%s1 + $0x50] sm:$0xff]
  %v109 = vld [vmem:[%s1 + $0x58] sm:$0xff]
  %v110 = vld [vmem:[%s1 + $0x60] sm:$0xff]
  %v111 = vld [vmem:[%s1 + $0x68] sm:$0xff]
  %v112 = vld [vmem:[%s1 + $0x70] sm:$0xff]
  %v113 = vld [vmem:[%s1 + $0x78] sm:$0xff]
  %v114 = vld [vmem:[%s4] sm:$0x3]
  %v116 = vlaneseq
  %v117 = vshrl.u32 %v116, 7
  %v118 = vsub.s32 0, %v117
  %v119 = vrot.slane %v114, %v118
  %v120 = vlaneseq
  %v121 = vshrl.u32 %v120, 7
  %v122 = vsub.s32 1, %v121
  %v123 = vrot.slane %v114, %v122
  %v142 = vunpack.c.l.b16 %v98
  %v143 = vunpack.c.h.b16 %v98
  %v144 = vunpack.c.l.b16 %v99
  %v145 = vunpack.c.h.b16 %v99
  %v146 = vunpack.c.l.b16 %v100
  %v147 = vunpack.c.h.b16 %v100
  %v148 = vunpack.c.l.b16 %v101
  %v149 = vunpack.c.h.b16 %v101
  %v150 = vunpack.c.l.b16 %v102
  %v151 = vunpack.c.h.b16 %v102
  %v152 = vunpack.c.l.b16 %v103
  %v153 = vunpack.c.h.b16 %v103
  %v154 = vunpack.c.l.b16 %v104
  %v155 = vunpack.c.h.b16 %v104
  %v156 = vunpack.c.l.b16 %v105
  %v157 = vunpack.c.h.b16 %v105
  %v158 = vunpack.c.l.b16 %v106
  %v159 = vunpack.c.h.b16 %v106
  %v160 = vunpack.c.l.b16 %v107
  %v161 = vunpack.c.h.b16 %v107
  %v162 = vunpack.c.l.b16 %v108
  %v163 = vunpack.c.h.b16 %v108
  %v164 = vunpack.c.l.b16 %v109
  %v165 = vunpack.c.h.b16 %v109
  %v166 = vunpack.c.l.b16 %v110
  %v167 = vunpack.c.h.b16 %v110
  %v168 = vunpack.c.l.b16 %v111
  %v169 = vunpack.c.h.b16 %v111
  %v170 = vunpack.c.l.b16 %v112
  %v171 = vunpack.c.h.b16 %v112
  %v172 = vunpack.c.l.b16 %v113
  %v173 = vunpack.c.h.b16 %v113
  %v174 = vpack.c.b16 %v144, %v142
  %v175 = vpack.c.b16 %v145, %v143
  %v176 = vpack.c.b16 %v148, %v146
  %v177 = vpack.c.b16 %v149, %v147
  %v178 = vpack.c.b16 %v152, %v150
  %v179 = vpack.c.b16 %v153, %v151
  %v180 = vpack.c.b16 %v156, %v154
  %v181 = vpack.c.b16 %v157, %v155
  %v182 = vpack.c.b16 %v160, %v158
  %v183 = vpack.c.b16 %v161, %v159
  %v184 = vpack.c.b16 %v164, %v162
  %v185 = vpack.c.b16 %v165, %v163
  %v186 = vpack.c.b16 %v168, %v166
  %v187 = vpack.c.b16 %v169, %v167
  %v188 = vpack.c.b16 %v172, %v170
  %v189 = vpack.c.b16 %v173, %v171
  %206 = vmatprep.subr.bf16.mxu0 %v175
  %207 = vmatpush1.bf16.msra.mxu0 %v174
  %208 = vmatprep.subr.bf16.mxu0 %v177
  %209 = vmatpush1.bf16.msra.mxu0 %v176
  %210 = vmatprep.subr.bf16.mxu0 %v179
  %211 = vmatpush1.bf16.msra.mxu0 %v178
  %212 = vmatprep.subr.bf16.mxu0 %v181
  %213 = vmatpush1.bf16.msra.mxu0 %v180
  %214 = vmatprep.subr.bf16.mxu0 %v183
  %215 = vmatpush1.bf16.msra.mxu0 %v182
  %216 = vmatprep.subr.bf16.mxu0 %v185
  %217 = vmatpush1.bf16.msra.mxu0 %v184
  %218 = vmatprep.subr.bf16.mxu0 %v187
  %219 = vmatpush1.bf16.msra.mxu0 %v186
  %220 = vmatprep.subr.bf16.mxu0 %v189
  %221 = vmatpush1.bf16.msra.mxu0 %v188
  %222 = vmatprep.subr.bf16.mxu0 0
  %223 = vmatpush1.bf16.msra.mxu0 0
  %224 = vmatprep.subr.bf16.mxu0 0
  %225 = vmatpush1.bf16.msra.mxu0 0
  %226 = vmatprep.subr.bf16.mxu0 0
  %227 = vmatpush1.bf16.msra.mxu0 0
  %228 = vmatprep.subr.bf16.mxu0 0
  %229 = vmatpush1.bf16.msra.mxu0 0
  %230 = vmatprep.subr.bf16.mxu0 0
  %231 = vmatpush1.bf16.msra.mxu0 0
  %232 = vmatprep.subr.bf16.mxu0 0
  %233 = vmatpush1.bf16.msra.mxu0 0
  %234 = vmatprep.subr.bf16.mxu0 0
  %235 = vmatpush1.bf16.msra.mxu0 0
  %236 = vmatprep.subr.bf16.mxu0 0
  %237 = vmatpush1.bf16.msra.mxu0 0
  %238 = vmatprep.mubr.bf16.mxu0 0
  %239 = vmatmul.mubr.bf16.gmra.mrb[0].mxu0 %v96
  %v240 = vpop.f32.mrb[0].mxu0
  %v241 = vadd.f32 %v119, %v240
  %v242 = vpop.f32.mrb[0].mxu0
  %v243 = vadd.f32 %v123, %v242
  %v244 = vpop.f32.mrb[0].mxu0
  %v245 = vadd.f32 %v119, %v244
  %v246 = vpop.f32.mrb[0].mxu0
  %v247 = vadd.f32 %v123, %v246
  %248 = vmatprep.mubr.bf16.mxu0 0
  %249 = vmatmul.mubr.bf16.gmra.mrb[0].mxu0 %v97
  %v250 = vpop.f32.mrb[0].mxu0
  %v251 = vadd.f32 %v119, %v250
  %v252 = vpop.f32.mrb[0].mxu0
  %v253 = vadd.f32 %v123, %v252
  %v254 = vpop.f32.mrb[0].mxu0
  %v255 = vadd.f32 %v119, %v254
  %v256 = vpop.f32.mrb[0].mxu0
  %v257 = vadd.f32 %v123, %v256
  %258 = vdwg.mxu0
  %v259 = vmul.f32 %v241, 0.5
  %v260 = vmul.f32 %v243, 0.5
  %v261 = vmul.f32 %v245, 0.5
  %v262 = vmul.f32 %v247, 0.5
  %v263 = vmul.f32 %v251, 0.5
  %v264 = vmul.f32 %v253, 0.5
  %v265 = vmul.f32 %v255, 0.5
  %v266 = vmul.f32 %v257, 0.5
  %v267 = vmul.f32 %v241, 0.70710677
  %v268 = vmul.f32 %v243, 0.70710677
  %v269 = vmul.f32 %v245, 0.70710677
  %v270 = vmul.f32 %v247, 0.70710677
  %v271 = vmul.f32 %v251, 0.70710677
  %v272 = vmul.f32 %v253, 0.70710677
  %v273 = vmul.f32 %v255, 0.70710677
  %v274 = vmul.f32 %v257, 0.70710677
  %v275 = vand.u32 2147483647, %v267
  %v276 = vand.u32 2147483647, %v268
  %v277 = vand.u32 2147483647, %v269
  %v278 = vand.u32 2147483647, %v270
  %v279 = vand.u32 2147483647, %v271
  %v280 = vand.u32 2147483647, %v272
  %v281 = vand.u32 2147483647, %v273
  %v282 = vand.u32 2147483647, %v274
  %v283 = vmul.f32 %v275, 0.3275911
  %v284 = vmul.f32 %v276, 0.3275911
  %v285 = vmul.f32 %v277, 0.3275911
  %v286 = vmul.f32 %v278, 0.3275911
  %v287 = vmul.f32 %v279, 0.3275911
  %v288 = vmul.f32 %v280, 0.3275911
  %v289 = vmul.f32 %v281, 0.3275911
  %v290 = vmul.f32 %v282, 0.3275911
  %v291 = vadd.f32 %v283, 1.0
  %v292 = vadd.f32 %v284, 1.0
  %v293 = vadd.f32 %v285, 1.0
  %v294 = vadd.f32 %v286, 1.0
  %v295 = vadd.f32 %v287, 1.0
  %v296 = vadd.f32 %v288, 1.0
  %v297 = vadd.f32 %v289, 1.0
  %v298 = vadd.f32 %v290, 1.0
  %v299 = vrcp.pop %v291
  %v300 = vmul.f32 1.0, %v299
  %v301 = vrcp.pop %v292
  %v302 = vmul.f32 1.0, %v301
  %v303 = vrcp.pop %v293
  %v304 = vmul.f32 1.0, %v303
  %v305 = vrcp.pop %v294
  %v306 = vmul.f32 1.0, %v305
  %v307 = vrcp.pop %v295
  %v308 = vmul.f32 1.0, %v307
  %v309 = vrcp.pop %v296
  %v310 = vmul.f32 1.0, %v309
  %v311 = vrcp.pop %v297
  %v312 = vmul.f32 1.0, %v311
  %v313 = vrcp.pop %v298
  %v314 = vmul.f32 1.0, %v313
  %v315 = vmul.f32 %v300, 1.0614054
  %v316 = vmul.f32 %v302, 1.0614054
  %v317 = vmul.f32 %v304, 1.0614054
  %v318 = vmul.f32 %v306, 1.0614054
  %v319 = vmul.f32 %v308, 1.0614054
  %v320 = vmul.f32 %v310, 1.0614054
  %v321 = vmul.f32 %v312, 1.0614054
  %v322 = vmul.f32 %v314, 1.0614054
  %v323 = vadd.f32 %v315, -1.4531521
  %v324 = vadd.f32 %v316, -1.4531521
  %v325 = vadd.f32 %v317, -1.4531521
  %v326 = vadd.f32 %v318, -1.4531521
  %v327 = vadd.f32 %v319, -1.4531521
  %v328 = vadd.f32 %v320, -1.4531521
  %v329 = vadd.f32 %v321, -1.4531521
  %v330 = vadd.f32 %v322, -1.4531521
  %v331 = vmul.f32 %v323, %v300
  %v332 = vmul.f32 %v324, %v302
  %v333 = vmul.f32 %v325, %v304
  %v334 = vmul.f32 %v326, %v306
  %v335 = vmul.f32 %v327, %v308
  %v336 = vmul.f32 %v328, %v310
  %v337 = vmul.f32 %v329, %v312
  %v338 = vmul.f32 %v330, %v314
  %v339 = vadd.f32 %v331, 1.4214138
  %v340 = vadd.f32 %v332, 1.4214138
  %v341 = vadd.f32 %v333, 1.4214138
  %v342 = vadd.f32 %v334, 1.4214138
  %v343 = vadd.f32 %v335, 1.4214138
  %v344 = vadd.f32 %v336, 1.4214138
  %v345 = vadd.f32 %v337, 1.4214138
  %v346 = vadd.f32 %v338, 1.4214138
  %v347 = vmul.f32 %v339, %v300
  %v348 = vmul.f32 %v340, %v302
  %v349 = vmul.f32 %v341, %v304
  %v350 = vmul.f32 %v342, %v306
  %v351 = vmul.f32 %v343, %v308
  %v352 = vmul.f32 %v344, %v310
  %v353 = vmul.f32 %v345, %v312
  %v354 = vmul.f32 %v346, %v314
  %v355 = vadd.f32 %v347, -0.28449672
  %v356 = vadd.f32 %v348, -0.28449672
  %v357 = vadd.f32 %v349, -0.28449672
  %v358 = vadd.f32 %v350, -0.28449672
  %v359 = vadd.f32 %v351, -0.28449672
  %v360 = vadd.f32 %v352, -0.28449672
  %v361 = vadd.f32 %v353, -0.28449672
  %v362 = vadd.f32 %v354, -0.28449672
  %v363 = vmul.f32 %v355, %v300
  %v364 = vmul.f32 %v356, %v302
  %v365 = vmul.f32 %v357, %v304
  %v366 = vmul.f32 %v358, %v306
  %v367 = vmul.f32 %v359, %v308
  %v368 = vmul.f32 %v360, %v310
  %v369 = vmul.f32 %v361, %v312
  %v370 = vmul.f32 %v362, %v314
  %v371 = vadd.f32 %v363, 0.2548296
  %v372 = vadd.f32 %v364, 0.2548296
  %v373 = vadd.f32 %v365, 0.2548296
  %v374 = vadd.f32 %v366, 0.2548296
  %v375 = vadd.f32 %v367, 0.2548296
  %v376 = vadd.f32 %v368, 0.2548296
  %v377 = vadd.f32 %v369, 0.2548296
  %v378 = vadd.f32 %v370, 0.2548296
  %v379 = vmul.f32 %v371, %v300
  %v380 = vmul.f32 %v372, %v302
  %v381 = vmul.f32 %v373, %v304
  %v382 = vmul.f32 %v374, %v306
  %v383 = vmul.f32 %v375, %v308
  %v384 = vmul.f32 %v376, %v310
  %v385 = vmul.f32 %v377, %v312
  %v386 = vmul.f32 %v378, %v314
  %v387 = vsub.f32 0.0, %v275
  %v388 = vsub.f32 0.0, %v276
  %v389 = vsub.f32 0.0, %v277
  %v390 = vsub.f32 0.0, %v278
  %v391 = vsub.f32 0.0, %v279
  %v392 = vsub.f32 0.0, %v280
  %v393 = vsub.f32 0.0, %v281
  %v394 = vsub.f32 0.0, %v282
  %v395 = vmul.f32 %v387, %v275
  %v396 = vmul.f32 %v388, %v276
  %v397 = vmul.f32 %v389, %v277
  %v398 = vmul.f32 %v390, %v278
  %v399 = vmul.f32 %v391, %v279
  %v400 = vmul.f32 %v392, %v280
  %v401 = vmul.f32 %v393, %v281
  %v402 = vmul.f32 %v394, %v282
  %v403 = vmul.f32 %v395, 1.442695
  %v404 = vpow.pop %v403
  %v405 = vmul.f32 %v396, 1.442695
  %v406 = vpow.pop %v405
  %v407 = vmul.f32 %v397, 1.442695
  %v408 = vpow.pop %v407
  %v409 = vmul.f32 %v398, 1.442695
  %v410 = vpow.pop %v409
  %v411 = vmul.f32 %v399, 1.442695
  %v412 = vpow.pop %v411
  %v413 = vmul.f32 %v400, 1.442695
  %v414 = vpow.pop %v413
  %v415 = vmul.f32 %v401, 1.442695
  %v416 = vpow.pop %v415
  %v417 = vmul.f32 %v402, 1.442695
  %v418 = vpow.pop %v417
  %v419 = vmul.f32 %v379, %v404
  %v420 = vmul.f32 %v380, %v406
  %v421 = vmul.f32 %v381, %v408
  %v422 = vmul.f32 %v382, %v410
  %v423 = vmul.f32 %v383, %v412
  %v424 = vmul.f32 %v384, %v414
  %v425 = vmul.f32 %v385, %v416
  %v426 = vmul.f32 %v386, %v418
  %v427 = vsub.f32 1.0, %v419
  %v428 = vsub.f32 1.0, %v420
  %v429 = vsub.f32 1.0, %v421
  %v430 = vsub.f32 1.0, %v422
  %v431 = vsub.f32 1.0, %v423
  %v432 = vsub.f32 1.0, %v424
  %v433 = vsub.f32 1.0, %v425
  %v434 = vsub.f32 1.0, %v426
  %vm435 = vcmp.ge.f32.partialorder %v267, 0.0
  %vm436 = vcmp.ge.f32.partialorder %v268, 0.0
  %vm437 = vcmp.ge.f32.partialorder %v269, 0.0
  %vm438 = vcmp.ge.f32.partialorder %v270, 0.0
  %vm439 = vcmp.ge.f32.partialorder %v271, 0.0
  %vm440 = vcmp.ge.f32.partialorder %v272, 0.0
  %vm441 = vcmp.ge.f32.partialorder %v273, 0.0
  %vm442 = vcmp.ge.f32.partialorder %v274, 0.0
  %v443 = vsub.f32 0.0, %v427
  %v444 = vsub.f32 0.0, %v428
  %v445 = vsub.f32 0.0, %v429
  %v446 = vsub.f32 0.0, %v430
  %v447 = vsub.f32 0.0, %v431
  %v448 = vsub.f32 0.0, %v432
  %v449 = vsub.f32 0.0, %v433
  %v450 = vsub.f32 0.0, %v434
  %v451 = vsel %vm435, %v427, %v443
  %v452 = vsel %vm436, %v428, %v444
  %v453 = vsel %vm437, %v429, %v445
  %v454 = vsel %vm438, %v430, %v446
  %v455 = vsel %vm439, %v431, %v447
  %v456 = vsel %vm440, %v432, %v448
  %v457 = vsel %vm441, %v433, %v449
  %v458 = vsel %vm442, %v434, %v450
  %v459 = vadd.f32 %v451, 1.0
  %v460 = vadd.f32 %v452, 1.0
  %v461 = vadd.f32 %v453, 1.0
  %v462 = vadd.f32 %v454, 1.0
  %v463 = vadd.f32 %v455, 1.0
  %v464 = vadd.f32 %v456, 1.0
  %v465 = vadd.f32 %v457, 1.0
  %v466 = vadd.f32 %v458, 1.0
  %v467 = vmul.f32 %v259, %v459
  %v468 = vmul.f32 %v260, %v460
  %v469 = vmul.f32 %v261, %v461
  %v470 = vmul.f32 %v262, %v462
  %v471 = vmul.f32 %v263, %v463
  %v472 = vmul.f32 %v264, %v464
  %v473 = vmul.f32 %v265, %v465
  %v474 = vmul.f32 %v266, %v466
  %v475 = vpack.c.bf16 %v469, %v467
  %v476 = vpack.c.bf16 %v470, %v468
  %v477 = vpack.c.bf16 %v473, %v471
  %v478 = vpack.c.bf16 %v474, %v472
  %v483 = vunpack.c.l.b16 %v475
  %v484 = vunpack.c.l.b16 %v476
  %v485 = vunpack.c.h.b16 %v475
  %v486 = vunpack.c.h.b16 %v476
  %v487 = vunpack.c.l.b16 %v477
  %v488 = vunpack.c.l.b16 %v478
  %v489 = vunpack.c.h.b16 %v477
  %v490 = vunpack.c.h.b16 %v478
  %v491 = vpack.c.b16 %v484, %v483
  %v492 = vpack.c.b16 %v486, %v485
  %v493 = vpack.c.b16 %v488, %v487
  %v494 = vpack.c.b16 %v490, %v489
  %499 = vst [vmem:[%s5] sm:$0xff] %v491
  %500 = vst [vmem:[%s5 + $0x8] sm:$0xff] %v492
  %501 = vst [vmem:[%s5 + $0x10] sm:$0xff] %v493
  %502 = vst [vmem:[%s5 + $0x18] sm:$0xff] %v494
  // Predicated region
  $region22: #{vit_custom_forward.18} parent=0 // pred_check
    _
  $region23: #{vit_custom_forward.18} parent=0 // pred_check_branch
    %504 = sbr.rel (0) target = $region25
  $region24: #{vit_custom_forward.18} parent=0 // pred_region
    _
  $region25: #{vit_custom_forward.18} parent=0 // pred_fallthru
    _
  // Predicated region
  $region26: #{vit_custom_forward.18} parent=0 // pred_check
    _
  $region27: #{vit_custom_forward.18} parent=0 // pred_check_branch
    %506 = sbr.rel (0) target = $region29
  $region28: #{vit_custom_forward.18} parent=0 // pred_region
    _
  $region29: #{vit_custom_forward.18} parent=0 // pred_fallthru
    _

// kernel: vit_custom_forward.25
$region0: #{vit_custom_forward.25}
  #allocation0 [shape = 'u32[]', space=smem, size = 0x4, offset = 0x4, fixed_abs, tag = 'smem constant byte address 0x4 - core index']
  #allocation1 [shape = 'u32[144,128]{1,0:T(1,128)}', space=vmem, size = 0x12000, scoped, tag = 'internal scratch']
  %s0 = inlined_call_operand.vmem [shape: bf16[2,128], index: 0, kind: input, shape index: {}]
  %s1 = inlined_call_operand.vmem [shape: bf16[128,10], index: 1, kind: input, shape index: {}]
  %s2 = inlined_call_operand.vmem [shape: f32[1,128], index: 2, kind: input, shape index: {}]
  %s3 = inlined_call_operand.vmem [shape: f32[1,128], index: 3, kind: input, shape index: {}]
  %s4 = inlined_call_operand.vmem [shape: f32[1,10], index: 4, kind: input, shape index: {}]
  %s5 = inlined_call_operand.hbm [shape: f32[2,10], index: 5, kind: output, shape index: {}]
  %s6 = sld [smem:[#allocation0]]
  $region30: #{vit_custom_forward.25} parent=0
    _
  %s8 = ssub.s32 1, %s6
  %s9 = scalar_select 0, %s8, %s6
  $region1: #{vit_custom_forward.25} parent=0
    #allocation2 [shape = 'u8[1024]{0}', space=vmem, size = 0x400, scoped, tag = 'output window, operand 0, single buffered']
    #allocation3 [shape = 's32[1]{0}', space=sflag, size = 0x4, scoped, tag = 'scoped memory for vit_custom_forward.25']
    %10 = vsyncpa [#allocation3], 0
    // Predicated region
    $region2: #{vit_custom_forward.25} parent=1 // pred_check
      _
    $region3: #{vit_custom_forward.25} parent=1 // pred_check_branch
      %12 = sbr.rel (0) target = $region5
    $region4: #{vit_custom_forward.25} parent=1 // pred_region
      _
    $region5: #{vit_custom_forward.25} parent=1 // pred_fallthru
      _
    // Predicated region
    $region6: #{vit_custom_forward.25} parent=1 // pred_check
      _
    $region7: #{vit_custom_forward.25} parent=1 // pred_check_branch
      %14 = sbr.rel (0) target = $region9
    $region8: #{vit_custom_forward.25} parent=1 // pred_region
      _
    $region9: #{vit_custom_forward.25} parent=1 // pred_fallthru
      _
    // Predicated region
    $region10: #{vit_custom_forward.25} parent=1 // pred_check
      _
    $region11: #{vit_custom_forward.25} parent=1 // pred_check_branch
      %16 = sbr.rel (0) target = $region13
    $region12: #{vit_custom_forward.25} parent=1 // pred_region
      _
    $region13: #{vit_custom_forward.25} parent=1 // pred_fallthru
      _
    // Predicated region
    $region14: #{vit_custom_forward.25} parent=1 // pred_check
      _
    $region15: #{vit_custom_forward.25} parent=1 // pred_check_branch
      %18 = sbr.rel (0) target = $region17
    $region16: #{vit_custom_forward.25} parent=1 // pred_region
      _
    $region17: #{vit_custom_forward.25} parent=1 // pred_fallthru
      _
    // Predicated region
    $region18: #{vit_custom_forward.25} parent=1 // pred_check
      _
    $region19: #{vit_custom_forward.25} parent=1 // pred_check_branch
      %20 = sbr.rel (0) target = $region21
    $region20: #{vit_custom_forward.25} parent=1 // pred_region
      _
    $region21: #{vit_custom_forward.25} parent=1 // pred_fallthru
      _
    %v22 = vld [vmem:[%s0] sm:$0x1]
    %v23 = vunpack.c.l.bf16 %v22
    %v24 = vld [vmem:[%s2] sm:$0x1]
    %v25 = vld [vmem:[%s3] sm:$0x1]
    %vm26 = vcmask 1041408
    %v27 = vsel %vm26, %v23, 0.0
    %28 = vadd.xlane.f32.xlu0 %v27
    %v29 = vpop.xlane.xlu0 %28
    %v30 = vrcp.pop 128.0
    %v31 = vmul.f32 %v29, %v30
    %v32 = vsub.f32 %v23, %v31
    %v33 = vmul.f32 %v32, %v32
    %v34 = vsel %vm26, %v33, 0.0
    %35 = vadd.xlane.f32.xlu0 %v34
    %v36 = vpop.xlane.xlu0 %35
    %v37 = vmul.f32 %v36, %v30
    %v38 = vadd.f32 %v37, 1e-05
    %v39 = vrsqrt.pop %v38
    %v40 = vmul.f32 %v32, %v39
    %v42 = vlaneseq
    %v43 = vshrl.u32 %v42, 7
    %v44 = vsub.s32 0, %v43
    %v45 = vrot.slane %v24, %v44
    %v47 = vmul.f32 %v40, %v45
    %v49 = vlaneseq
    %v50 = vshrl.u32 %v49, 7
    %v51 = vsub.s32 0, %v50
    %v52 = vrot.slane %v25, %v51
    %v54 = vadd.f32 %v47, %v52
    %v55 = vpack.c.bf16 %v54, %v54
    %v56 = vld [vmem:[%s1] sm:$0xf]
    %v57 = vld [vmem:[%s1 + $0x4] sm:$0xf]
    %v58 = vld [vmem:[%s1 + $0x8] sm:$0xf]
    %v59 = vld [vmem:[%s1 + $0xc] sm:$0xf]
    %v60 = vld [vmem:[%s1 + $0x10] sm:$0xf]
    %v61 = vld [vmem:[%s1 + $0x14] sm:$0xf]
    %v62 = vld [vmem:[%s1 + $0x18] sm:$0xf]
    %v63 = vld [vmem:[%s1 + $0x1c] sm:$0xf]
    %v64 = vld [vmem:[%s1 + $0x20] sm:$0xf]
    %v65 = vld [vmem:[%s1 + $0x24] sm:$0xf]
    %v66 = vld [vmem:[%s1 + $0x28] sm:$0xf]
    %v67 = vld [vmem:[%s1 + $0x2c] sm:$0xf]
    %v68 = vld [vmem:[%s1 + $0x30] sm:$0xf]
    %v69 = vld [vmem:[%s1 + $0x34] sm:$0xf]
    %v70 = vld [vmem:[%s1 + $0x38] sm:$0xf]
    %v71 = vld [vmem:[%s1 + $0x3c] sm:$0xf]
    %v72 = vld [vmem:[%s4] sm:$0x1]
    %v74 = vlaneseq
    %v75 = vshrl.u32 %v74, 7
    %v76 = vsub.s32 0, %v75
    %v77 = vrot.slane %v72, %v76
    %v95 = vunpack.c.l.b16 %v56
    %v96 = vunpack.c.l.b16 %v57
    %v97 = vunpack.c.l.b16 %v58
    %v98 = vunpack.c.l.b16 %v59
    %v99 = vunpack.c.l.b16 %v60
    %v100 = vunpack.c.l.b16 %v61
    %v101 = vunpack.c.l.b16 %v62
    %v102 = vunpack.c.l.b16 %v63
    %v103 = vunpack.c.l.b16 %v64
    %v104 = vunpack.c.l.b16 %v65
    %v105 = vunpack.c.l.b16 %v66
    %v106 = vunpack.c.l.b16 %v67
    %v107 = vunpack.c.l.b16 %v68
    %v108 = vunpack.c.l.b16 %v69
    %v109 = vunpack.c.l.b16 %v70
    %v110 = vunpack.c.l.b16 %v71
    %v111 = vpack.c.b16 %v96, %v95
    %v112 = vpack.c.b16 %v98, %v97
    %v113 = vpack.c.b16 %v100, %v99
    %v114 = vpack.c.b16 %v102, %v101
    %v115 = vpack.c.b16 %v104, %v103
    %v116 = vpack.c.b16 %v106, %v105
    %v117 = vpack.c.b16 %v108, %v107
    %v118 = vpack.c.b16 %v110, %v109
    %127 = vmatprep.subr.bf16.mxu0 0
    %128 = vmatpush1.bf16.msra.mxu0 %v111
    %129 = vmatprep.subr.bf16.mxu0 0
    %130 = vmatpush1.bf16.msra.mxu0 %v112
    %131 = vmatprep.subr.bf16.mxu0 0
    %132 = vmatpush1.bf16.msra.mxu0 %v113
    %133 = vmatprep.subr.bf16.mxu0 0
    %134 = vmatpush1.bf16.msra.mxu0 %v114
    %135 = vmatprep.subr.bf16.mxu0 0
    %136 = vmatpush1.bf16.msra.mxu0 %v115
    %137 = vmatprep.subr.bf16.mxu0 0
    %138 = vmatpush1.bf16.msra.mxu0 %v116
    %139 = vmatprep.subr.bf16.mxu0 0
    %140 = vmatpush1.bf16.msra.mxu0 %v117
    %141 = vmatprep.subr.bf16.mxu0 0
    %142 = vmatpush1.bf16.msra.mxu0 %v118
    %143 = vmatprep.subr.bf16.mxu0 0
    %144 = vmatpush1.bf16.msra.mxu0 0
    %145 = vmatprep.subr.bf16.mxu0 0
    %146 = vmatpush1.bf16.msra.mxu0 0
    %147 = vmatprep.subr.bf16.mxu0 0
    %148 = vmatpush1.bf16.msra.mxu0 0
    %149 = vmatprep.subr.bf16.mxu0 0
    %150 = vmatpush1.bf16.msra.mxu0 0
    %151 = vmatprep.subr.bf16.mxu0 0
    %152 = vmatpush1.bf16.msra.mxu0 0
    %153 = vmatprep.subr.bf16.mxu0 0
    %154 = vmatpush1.bf16.msra.mxu0 0
    %155 = vmatprep.subr.bf16.mxu0 0
    %156 = vmatpush1.bf16.msra.mxu0 0
    %157 = vmatprep.subr.bf16.mxu0 0
    %158 = vmatpush1.bf16.msra.mxu0 0
    %159 = vmatprep.mubr.bf16.mxu0 0
    %160 = vmatmul.mubr.bf16.gmra.mrb[0].mxu0 %v55
    %v161 = vpop.f32.mrb[0].mxu0
    %v162 = vadd.f32 %v77, %v161
    %v163 = vpop.f32.mrb[0].mxu0
    %v164 = vpop.f32.mrb[0].mxu0
    %v165 = vpop.f32.mrb[0].mxu0
    %166 = vdwg.mxu0
    %vm167 = vcmask 74752
    %168 = vst.msk [vmem:[#allocation2] sm:$0x3] %vm167, %v162
    // Predicated region
    $region22: #{vit_custom_forward.25} parent=1 // pred_check
      _
    $region23: #{vit_custom_forward.25} parent=1 // pred_check_branch
      %170 = sbr.rel (0) target = $region25
    $region24: #{vit_custom_forward.25} parent=1 // pred_region
      %s172 = ssub.s32 32, 32
      %173 = vsyncadd [#allocation3], %s172
      %s175 = sshll.u32 [#allocation2], 4
      %s176 = int_to_ptr.vmem [resolvable:$true] %s175
      %178 = dma.vmem_to_hbm [thread:$0]  %s176, 32, %s5, [#allocation3]
    $region25: #{vit_custom_forward.25} parent=1 // pred_fallthru
      _
    // Predicated region
    $region26: #{vit_custom_forward.25} parent=1 // pred_check
      _
    $region27: #{vit_custom_forward.25} parent=1 // pred_check_branch
      %180 = sbr.rel (0) target = $region29
    $region28: #{vit_custom_forward.25} parent=1 // pred_region
      %181 = dma.done [#allocation3], 32
    $region29: #{vit_custom_forward.25} parent=1 // pred_fallthru
      _
    %182 = vsyncpa [#allocation3], 1

</llo_original>
